<compile_context>
chip_gen: v6e
topology: v6e:2x2x1
jax: 0.10.0
libtpu: 0.0.40
codegen_flags: <defaults>
</compile_context>

<pallas_src>
import math
from functools import partial

import jax
import jax.numpy as jnp
from jax.experimental import pallas as pl
from jax.experimental.pallas import tpu as pltpu


# -----------------------------------------------------------------------------
# Fused Pallas kernel: one (batch block, chunk) -> pass-1 attention, residual
# mix, pass-2 attention.  Grid = (batch blocks [parallel], n_R [arbitrary]).
# -----------------------------------------------------------------------------
def _fused_rattn_kernel(q_ref, k_ref, v_ref,
                        wq_ref, bq_ref, wk_ref, bk_ref,
                        wv_ref, bv_ref, wo_ref, bo_ref,
                        out_ref, attn_ref,
                        *, n_heads, d_keys, d_values, compute_dtype):
    Bb, Lc, D = q_ref.shape
    H = n_heads
    dk, dv = d_keys, d_values
    Dk, Dv = H * dk, H * dv
    cd = compute_dtype
    scale = 1.0 / math.sqrt(dk)
    is_last = pl.program_id(1) == pl.num_programs(1) - 1

    # Weights already in compute_dtype (cast once in the wrapper, not per step).
    wq = wq_ref[...]
    wk = wk_ref[...]
    wv = wv_ref[...]
    wo = wo_ref[...]
    bq = bq_ref[...]
    bk = bk_ref[...]
    bv = bv_ref[...]
    bo = bo_ref[...]

    def attention_layer(q, k, v, write_attn):
        """One AttentionLayer forward on a (Bb, Lc, D) sub-sequence."""
        # --- Q/K/V projections: one tall, full-depth matmul each (f32 acc). --
        qf = q.reshape(Bb * Lc, D).astype(cd)
        kf = k.reshape(Bb * Lc, D).astype(cd)
        vf = v.reshape(Bb * Lc, D).astype(cd)

        # Fold the 1/sqrt(dk) scale into Q (smaller tensor than the scores).
        Q = (jnp.dot(qf, wq, preferred_element_type=jnp.float32) + bq) * scale
        K = jnp.dot(kf, wk, preferred_element_type=jnp.float32) + bk
        V = jnp.dot(vf, wv, preferred_element_type=jnp.float32) + bv

        Q = Q.astype(cd).reshape(Bb, Lc, Dk)
        K = K.astype(cd).reshape(Bb, Lc, Dk)
        V = V.astype(cd).reshape(Bb, Lc, Dv)

        # --- Head-batched operands: (H*Bb, Lc, dk/dv), heads major. ----------
        Qb = jnp.concatenate([Q[:, :, h * dk:(h + 1) * dk] for h in range(H)],
                             axis=0)
        Kb = jnp.concatenate([K[:, :, h * dk:(h + 1) * dk] for h in range(H)],
                             axis=0)
        Vb = jnp.concatenate([V[:, :, h * dv:(h + 1) * dv] for h in range(H)],
                             axis=0)

        # --- One batched score matmul + one batched softmax. -----------------
        s = jnp.einsum('nle,nse->nls', Qb, Kb,
                       preferred_element_type=jnp.float32)      # (H*Bb,Lc,Lc) f32
        m = jnp.max(s, axis=-1, keepdims=True)
        e = jnp.exp(s - m)
        inv = pl.reciprocal(jnp.sum(e, axis=-1, keepdims=True), approx=True)
        a = e * inv                                              # softmax (f32)

        if write_attn:
            # Only the final chunk's attention weights survive; skip the store
            # (and any writeback pressure) on earlier chunks.
            @pl.when(is_last)
            def _():
                for h in range(H):
                    attn_ref[:, h, :, :] = (
                        a[h * Bb:(h + 1) * Bb].astype(attn_ref.dtype))

        # --- One batched context matmul. --------------------------------------
        ctx = jnp.einsum('nls,nsd->nld', a.astype(cd), Vb,
                         preferred_element_type=jnp.float32)    # (H*Bb, Lc, dv)

        # Lane-dense context assembly (no scratch, no masked dv-wide stores),
        # then a single full-depth output projection.
        ctx = jnp.concatenate([ctx[h * Bb:(h + 1) * Bb] for h in range(H)],
                              axis=-1)                           # (Bb, Lc, Dv)
        ctx = ctx.reshape(Bb * Lc, Dv).astype(cd)
        out = jnp.dot(ctx, wo, preferred_element_type=jnp.float32) + bo
        return out.reshape(Bb, Lc, D)                            # f32

    # ---- Pass 1 (attention on the raw chunk) --------------------------------
    h1 = attention_layer(q_ref[...], k_ref[...], v_ref[...], write_attn=False)

    # ---- Residual mix, entirely in VMEM; refs re-read -> short live ranges --
    qm = 0.5 * (q_ref[...].astype(jnp.float32) + h1)
    km = 0.5 * (k_ref[...].astype(jnp.float32) + h1)
    vm = 0.5 * (v_ref[...].astype(jnp.float32) + h1)

    # ---- Pass 2 (attention on the mixed chunk) ------------------------------
    h2 = attention_layer(qm, km, vm, write_attn=True)
    out_ref[...] = h2.astype(out_ref.dtype)


def rattention_layer(queries, keys, values, params, *, n_R, n_heads,
                     d_keys=None, d_values=None,
                     compute_dtype=jnp.bfloat16,
                     n_batch_blocks=1,
                     single_buffer_weights=False):
    """Full RAttentionLayer forward (both chunked passes fused in one kernel).

    compute_dtype: MXU-operand dtype (bf16 recommended on v6e/v7x; softmax,
      bias adds and the residual mix stay float32, accumulation is float32).
    n_batch_blocks: leading "parallel" grid axis over batch (v7x megacore).
    single_buffer_weights: pl.Buffered(1) on the constant-index weight blocks
      (VMEM headroom on v7x's 64 MiB); off by default.
    """
    B, L, D = queries.shape
    d_keys = d_keys or D // n_heads
    d_values = d_values or D // n_heads
    if L % n_R != 0:
        raise ValueError(f"sequence length {L} must be divisible by n_R={n_R}")
    if B % n_batch_blocks != 0:
        raise ValueError(f"batch {B} must be divisible by {n_batch_blocks}")
    Lc = L // n_R
    Bb = B // n_batch_blocks
    H = n_heads
    Dk = H * d_keys
    Dv = H * d_values
    cd = compute_dtype

    # Cast weights ONCE here (bf16 halves their HBM->VMEM DMA and residency);
    # biases stay f32 so the vector path stays f32 on all generations.
    wq = params['wq'].astype(cd)
    wk = params['wk'].astype(cd)
    wv = params['wv'].astype(cd)
    wo = params['wo'].astype(cd)
    bq = params['bq'].astype(jnp.float32)
    bk = params['bk'].astype(jnp.float32)
    bv = params['bv'].astype(jnp.float32)
    bo = params['bo'].astype(jnp.float32)

    kernel = partial(_fused_rattn_kernel, n_heads=H, d_keys=d_keys,
                     d_values=d_values, compute_dtype=cd)

    seq_spec = pl.BlockSpec((Bb, Lc, D), lambda p, i: (p, i, 0))
    wkw = {"pipeline_mode": pl.Buffered(1)} if single_buffer_weights else {}

    def wspec(shape):
        return pl.BlockSpec(shape, lambda p, i: (0, 0), **wkw)

    # Explicit VMEM budget (default scoped limits are far below physical).
    in_b = queries.dtype.itemsize
    cd_b = jnp.dtype(cd).itemsize
    blocks = 2 * 4 * Bb * Lc * D * in_b                       # q/k/v/out, 2x buf
    attn_blk = 2 * Bb * H * Lc * Lc * 4                       # resident attn
    wbuf = 1 if single_buffer_weights else 2
    wts = wbuf * ((3 * D * Dk + Dv * D) * cd_b + (3 * Dk + D) * 4)
    interm = 8 * H * Bb * Lc * Lc * 4 + 12 * Bb * Lc * max(D, Dk, Dv) * 4
    vmem_limit = int(min(max((blocks + attn_blk + wts + interm) * 1.5,
                             16 << 20), 64 << 20))

    out, attn = pl.pallas_call(
        kernel,
        out_shape=(jax.ShapeDtypeStruct((B, L, D), queries.dtype),
                   jax.ShapeDtypeStruct((B, H, Lc, Lc), jnp.float32)),
        grid_spec=pltpu.PrefetchScalarGridSpec(
            num_scalar_prefetch=0,
            grid=(n_batch_blocks, n_R),
            in_specs=[seq_spec, seq_spec, seq_spec,
                      wspec((D, Dk)), wspec((1, Dk)),
                      wspec((D, Dk)), wspec((1, Dk)),
                      wspec((D, Dv)), wspec((1, Dv)),
                      wspec((Dv, D)), wspec((1, D))],
            out_specs=[seq_spec,
                       pl.BlockSpec((Bb, H, Lc, Lc),
                                    lambda p, i: (p, 0, 0, 0))],
        ),
        # Batch-block axis is parallel (megacore); chunk axis is serial because
        # the attn output block index is constant along it.
        compiler_params=pltpu.CompilerParams(
            dimension_semantics=("parallel", "arbitrary"),
            vmem_limit_bytes=vmem_limit),
    )(queries, keys, values, wq, bq, wk, bk, wv, bv, wo, bo)
    return out, attn


# -----------------------------------------------------------------------------
# Pure-JAX reference (mirrors the PyTorch forward) for a correctness check.
# -----------------------------------------------------------------------------
def _ref_attention_layer(q, k, v, params, n_heads, d_keys, d_values):
    B, L, D = q.shape
    Q = (q @ params['wq'] + params['bq'][0]).reshape(B, L, n_heads, d_keys)
    K = (k @ params['wk'] + params['bk'][0]).reshape(B, L, n_heads, d_keys)
    V = (v @ params['wv'] + params['bv'][0]).reshape(B, L, n_heads, d_values)
    s = jnp.einsum('blhe,bshe->bhls', Q, K) / math.sqrt(d_keys)
    a = jax.nn.softmax(s, axis=-1)
    o = jnp.einsum('bhls,bshd->blhd', a, V).reshape(B, L, n_heads * d_values)
    return o @ params['wo'] + params['bo'][0], a


def _ref_rattention(q, k, v, params, n_R, n_heads, d_keys, d_values):
    B, L, D = q.shape
    Lc = L // n_R

    def one_pass(qq, kk, vv):
        outs, attn = [], None
        for i in range(n_R):
            sl = slice(Lc * i, Lc * (i + 1))
            h, attn = _ref_attention_layer(qq[:, sl], kk[:, sl], vv[:, sl],
                                           params, n_heads, d_keys, d_values)
            outs.append(h)
        return jnp.concatenate(outs, axis=1), attn

    c1, _ = one_pass(q, k, v)
    q2, k2, v2 = 0.5 * q + 0.5 * c1, 0.5 * k + 0.5 * c1, 0.5 * v + 0.5 * c1
    return one_pass(q2, k2, v2)


if __name__ == "__main__":
    # Small shapes: d_model=32, n_heads=4 -> d_keys=d_values=8, seq=16, n_R=2.
    B, L, D, H, n_R = 2, 16, 32, 4, 2
    d_keys = d_values = D // H

    key = jax.random.PRNGKey(0)
    ks = jax.random.split(key, 12)
    scale_w = 1.0 / math.sqrt(D)
    params = {
        'wq': jax.random.uniform(ks[0], (D, D), jnp.float32, -scale_w, scale_w),
        'bq': jax.random.uniform(ks[1], (1, D), jnp.float32, -scale_w, scale_w),
        'wk': jax.random.uniform(ks[2], (D, D), jnp.float32, -scale_w, scale_w),
        'bk': jax.random.uniform(ks[3], (1, D), jnp.float32, -scale_w, scale_w),
        'wv': jax.random.uniform(ks[4], (D, D), jnp.float32, -scale_w, scale_w),
        'bv': jax.random.uniform(ks[5], (1, D), jnp.float32, -scale_w, scale_w),
        'wo': jax.random.uniform(ks[6], (D, D), jnp.float32, -scale_w, scale_w),
        'bo': jax.random.uniform(ks[7], (1, D), jnp.float32, -scale_w, scale_w),
    }

    queries = jax.random.normal(ks[8], (B, L, D), jnp.float32)
    keys_in = jax.random.normal(ks[9], (B, L, D), jnp.float32)
    values = jax.random.normal(ks[10], (B, L, D), jnp.float32)

    ref_out, ref_attn = _ref_rattention(queries, keys_in, values, params,
                                        n_R, H, d_keys, d_values)

    # f32 compute path (tight check), exercising the parallel batch grid axis.
    out, attn = rattention_layer(queries, keys_in, values, params,
                                 n_R=n_R, n_heads=H,
                                 d_keys=d_keys, d_values=d_values,
                                 compute_dtype=jnp.float32, n_batch_blocks=2)
    out = jax.block_until_ready(out)
    attn = jax.block_until_ready(attn)
    assert out.shape == (B, L, D) and attn.shape == (B, H, L // n_R, L // n_R)
    assert jnp.allclose(out, ref_out, atol=5e-3, rtol=5e-3)
    assert jnp.allclose(attn, ref_attn, atol=5e-3, rtol=5e-3)

    # Default bf16 MXU-operand path (v6e/v7x recommended), looser tolerance.
    out_bf, attn_bf = rattention_layer(queries, keys_in, values, params,
                                       n_R=n_R, n_heads=H,
                                       d_keys=d_keys, d_values=d_values)
    out_bf = jax.block_until_ready(out_bf)
    attn_bf = jax.block_until_ready(attn_bf)
    assert jnp.all(jnp.isfinite(out_bf)) and jnp.all(jnp.isfinite(attn_bf))
    assert jnp.allclose(out_bf, ref_out, atol=1e-1, rtol=1e-1)
    assert jnp.allclose(attn_bf, ref_attn, atol=1e-1, rtol=1e-1)

    print("KERNEL_OK")
</pallas_src>

<mosaic_0001>
module attributes {stable_mosaic.version = 11 : i64} {
  func.func @_fused_rattn_kernel(%arg0: i32, %arg1: i32, %arg2: memref<1x8x32xf32, #tpu.memory_space<vmem>>, %arg3: memref<1x8x32xf32, #tpu.memory_space<vmem>>, %arg4: memref<1x8x32xf32, #tpu.memory_space<vmem>>, %arg5: memref<32x32xf32, #tpu.memory_space<vmem>>, %arg6: memref<1x32xf32, #tpu.memory_space<vmem>>, %arg7: memref<32x32xf32, #tpu.memory_space<vmem>>, %arg8: memref<1x32xf32, #tpu.memory_space<vmem>>, %arg9: memref<32x32xf32, #tpu.memory_space<vmem>>, %arg10: memref<1x32xf32, #tpu.memory_space<vmem>>, %arg11: memref<32x32xf32, #tpu.memory_space<vmem>>, %arg12: memref<1x32xf32, #tpu.memory_space<vmem>>, %arg13: memref<1x8x32xf32, #tpu.memory_space<vmem>>, %arg14: memref<1x4x8x8xf32, #tpu.memory_space<vmem>>) attributes {dimension_semantics = [#tpu.dimension_semantics<parallel>, #tpu.dimension_semantics<arbitrary>], iteration_bounds = array<i64: 2, 2>, scalar_prefetch = 0 : i64, scratch_operands = 0 : i64, tpu.core_type = #tpu.core_type<tc>, window_params = [{transform_indices = @transform_0, window_bounds = array<i64: 1, 8, 32>}, {transform_indices = @transform_1, window_bounds = array<i64: 1, 8, 32>}, {transform_indices = @transform_2, window_bounds = array<i64: 1, 8, 32>}, {pipeline_mode = #tpu.pipeline_mode<synchronous>, transform_indices = @transform_3, window_bounds = array<i64: 32, 32>}, {pipeline_mode = #tpu.pipeline_mode<synchronous>, transform_indices = @transform_4, window_bounds = array<i64: 1, 32>}, {pipeline_mode = #tpu.pipeline_mode<synchronous>, transform_indices = @transform_5, window_bounds = array<i64: 32, 32>}, {pipeline_mode = #tpu.pipeline_mode<synchronous>, transform_indices = @transform_6, window_bounds = array<i64: 1, 32>}, {pipeline_mode = #tpu.pipeline_mode<synchronous>, transform_indices = @transform_7, window_bounds = array<i64: 32, 32>}, {pipeline_mode = #tpu.pipeline_mode<synchronous>, transform_indices = @transform_8, window_bounds = array<i64: 1, 32>}, {pipeline_mode = #tpu.pipeline_mode<synchronous>, transform_indices = @transform_9, window_bounds = array<i64: 32, 32>}, {pipeline_mode = #tpu.pipeline_mode<synchronous>, transform_indices = @transform_10, window_bounds = array<i64: 1, 32>}, {transform_indices = @transform_11, window_bounds = array<i64: 1, 8, 32>}, {transform_indices = @transform_12, window_bounds = array<i64: 1, 4, 8, 8>}]} {
    %c1_i32 = arith.constant 1 : i32
    %0 = arith.cmpi eq, %arg1, %c1_i32 : i32
    %c0 = arith.constant 0 : index
    %c0_0 = arith.constant 0 : index
    %1 = vector.load %arg5[%c0, %c0_0] : memref<32x32xf32, #tpu.memory_space<vmem>>, vector<32x32xf32>
    %c0_1 = arith.constant 0 : index
    %c0_2 = arith.constant 0 : index
    %2 = vector.load %arg7[%c0_1, %c0_2] : memref<32x32xf32, #tpu.memory_space<vmem>>, vector<32x32xf32>
    %c0_3 = arith.constant 0 : index
    %c0_4 = arith.constant 0 : index
    %3 = vector.load %arg9[%c0_3, %c0_4] : memref<32x32xf32, #tpu.memory_space<vmem>>, vector<32x32xf32>
    %c0_5 = arith.constant 0 : index
    %c0_6 = arith.constant 0 : index
    %4 = vector.load %arg11[%c0_5, %c0_6] : memref<32x32xf32, #tpu.memory_space<vmem>>, vector<32x32xf32>
    %c0_7 = arith.constant 0 : index
    %c0_8 = arith.constant 0 : index
    %5 = vector.load %arg6[%c0_7, %c0_8] : memref<1x32xf32, #tpu.memory_space<vmem>>, vector<1x32xf32>
    %c0_9 = arith.constant 0 : index
    %c0_10 = arith.constant 0 : index
    %6 = vector.load %arg8[%c0_9, %c0_10] : memref<1x32xf32, #tpu.memory_space<vmem>>, vector<1x32xf32>
    %c0_11 = arith.constant 0 : index
    %c0_12 = arith.constant 0 : index
    %7 = vector.load %arg10[%c0_11, %c0_12] : memref<1x32xf32, #tpu.memory_space<vmem>>, vector<1x32xf32>
    %c0_13 = arith.constant 0 : index
    %c0_14 = arith.constant 0 : index
    %8 = vector.load %arg12[%c0_13, %c0_14] : memref<1x32xf32, #tpu.memory_space<vmem>>, vector<1x32xf32>
    %c0_15 = arith.constant 0 : index
    %c0_16 = arith.constant 0 : index
    %c0_17 = arith.constant 0 : index
    %9 = vector.load %arg2[%c0_15, %c0_16, %c0_17] : memref<1x8x32xf32, #tpu.memory_space<vmem>>, vector<1x8x32xf32>
    %c0_18 = arith.constant 0 : index
    %c0_19 = arith.constant 0 : index
    %c0_20 = arith.constant 0 : index
    %10 = vector.load %arg3[%c0_18, %c0_19, %c0_20] : memref<1x8x32xf32, #tpu.memory_space<vmem>>, vector<1x8x32xf32>
    %c0_21 = arith.constant 0 : index
    %c0_22 = arith.constant 0 : index
    %c0_23 = arith.constant 0 : index
    %11 = vector.load %arg4[%c0_21, %c0_22, %c0_23] : memref<1x8x32xf32, #tpu.memory_space<vmem>>, vector<1x8x32xf32>
    %12 = vector.shape_cast %9 : vector<1x8x32xf32> to vector<8x32xf32>
    %13 = vector.shape_cast %10 : vector<1x8x32xf32> to vector<8x32xf32>
    %14 = vector.shape_cast %11 : vector<1x8x32xf32> to vector<8x32xf32>
    %cst = arith.constant dense<0.000000e+00> : vector<8x32xf32>
    %15 = tpu.matmul %12, %1, %cst {dimension_numbers = #tpu.dot_dimension_numbers<[1], [0], [0], [1], [0, 0, 1, 1], [], []>} : vector<8x32xf32>, vector<32x32xf32>, vector<8x32xf32> -> vector<8x32xf32>
    %16 = vector.broadcast %5 : vector<1x32xf32> to vector<8x32xf32>
    %17 = arith.addf %15, %16 : vector<8x32xf32>
    %cst_24 = arith.constant 0.353553385 : f32
    %18 = vector.broadcast %cst_24 : f32 to vector<8x32xf32>
    %19 = arith.mulf %17, %18 : vector<8x32xf32>
    %cst_25 = arith.constant dense<0.000000e+00> : vector<8x32xf32>
    %20 = tpu.matmul %13, %2, %cst_25 {dimension_numbers = #tpu.dot_dimension_numbers<[1], [0], [0], [1], [0, 0, 1, 1], [], []>} : vector<8x32xf32>, vector<32x32xf32>, vector<8x32xf32> -> vector<8x32xf32>
    %21 = vector.broadcast %6 : vector<1x32xf32> to vector<8x32xf32>
    %22 = arith.addf %20, %21 : vector<8x32xf32>
    %cst_26 = arith.constant dense<0.000000e+00> : vector<8x32xf32>
    %23 = tpu.matmul %14, %3, %cst_26 {dimension_numbers = #tpu.dot_dimension_numbers<[1], [0], [0], [1], [0, 0, 1, 1], [], []>} : vector<8x32xf32>, vector<32x32xf32>, vector<8x32xf32> -> vector<8x32xf32>
    %24 = vector.broadcast %7 : vector<1x32xf32> to vector<8x32xf32>
    %25 = arith.addf %23, %24 : vector<8x32xf32>
    %26 = vector.shape_cast %19 : vector<8x32xf32> to vector<1x8x32xf32>
    %27 = vector.shape_cast %22 : vector<8x32xf32> to vector<1x8x32xf32>
    %28 = vector.shape_cast %25 : vector<8x32xf32> to vector<1x8x32xf32>
    %29 = vector.extract_strided_slice %26 {offsets = [0, 0, 0], sizes = [1, 8, 8], strides = [1, 1, 1]} : vector<1x8x32xf32> to vector<1x8x8xf32>
    %30 = vector.extract_strided_slice %26 {offsets = [0, 0, 8], sizes = [1, 8, 8], strides = [1, 1, 1]} : vector<1x8x32xf32> to vector<1x8x8xf32>
    %31 = vector.extract_strided_slice %26 {offsets = [0, 0, 16], sizes = [1, 8, 8], strides = [1, 1, 1]} : vector<1x8x32xf32> to vector<1x8x8xf32>
    %32 = vector.extract_strided_slice %26 {offsets = [0, 0, 24], sizes = [1, 8, 8], strides = [1, 1, 1]} : vector<1x8x32xf32> to vector<1x8x8xf32>
    %33 = tpu.concatenate %29, %30, %31, %32 in 0 : vector<1x8x8xf32>, vector<1x8x8xf32>, vector<1x8x8xf32>, vector<1x8x8xf32> -> vector<4x8x8xf32>
    %34 = vector.extract_strided_slice %27 {offsets = [0, 0, 0], sizes = [1, 8, 8], strides = [1, 1, 1]} : vector<1x8x32xf32> to vector<1x8x8xf32>
    %35 = vector.extract_strided_slice %27 {offsets = [0, 0, 8], sizes = [1, 8, 8], strides = [1, 1, 1]} : vector<1x8x32xf32> to vector<1x8x8xf32>
    %36 = vector.extract_strided_slice %27 {offsets = [0, 0, 16], sizes = [1, 8, 8], strides = [1, 1, 1]} : vector<1x8x32xf32> to vector<1x8x8xf32>
    %37 = vector.extract_strided_slice %27 {offsets = [0, 0, 24], sizes = [1, 8, 8], strides = [1, 1, 1]} : vector<1x8x32xf32> to vector<1x8x8xf32>
    %38 = tpu.concatenate %34, %35, %36, %37 in 0 : vector<1x8x8xf32>, vector<1x8x8xf32>, vector<1x8x8xf32>, vector<1x8x8xf32> -> vector<4x8x8xf32>
    %39 = vector.extract_strided_slice %28 {offsets = [0, 0, 0], sizes = [1, 8, 8], strides = [1, 1, 1]} : vector<1x8x32xf32> to vector<1x8x8xf32>
    %40 = vector.extract_strided_slice %28 {offsets = [0, 0, 8], sizes = [1, 8, 8], strides = [1, 1, 1]} : vector<1x8x32xf32> to vector<1x8x8xf32>
    %41 = vector.extract_strided_slice %28 {offsets = [0, 0, 16], sizes = [1, 8, 8], strides = [1, 1, 1]} : vector<1x8x32xf32> to vector<1x8x8xf32>
    %42 = vector.extract_strided_slice %28 {offsets = [0, 0, 24], sizes = [1, 8, 8], strides = [1, 1, 1]} : vector<1x8x32xf32> to vector<1x8x8xf32>
    %43 = tpu.concatenate %39, %40, %41, %42 in 0 : vector<1x8x8xf32>, vector<1x8x8xf32>, vector<1x8x8xf32>, vector<1x8x8xf32> -> vector<4x8x8xf32>
    "tpu.trace_start"() <{level = 10 : i32, message = "nle,nse->nls"}> : () -> ()
    %cst_27 = arith.constant dense<0.000000e+00> : vector<4x8x8xf32>
    %44 = tpu.matmul %33, %38, %cst_27 {dimension_numbers = #tpu.dot_dimension_numbers<[2], [2], [1], [1], [0, 0, 0, 1, 1, 1], [0], [0]>} : vector<4x8x8xf32>, vector<4x8x8xf32>, vector<4x8x8xf32> -> vector<4x8x8xf32>
    "tpu.trace_stop"() : () -> ()
    %cst_28 = arith.constant dense<0xFF800000> : vector<4x8xf32>
    %45 = vector.multi_reduction <maximumf>, %44, %cst_28 [2] : vector<4x8x8xf32> to vector<4x8xf32>
    %46 = vector.shape_cast %45 : vector<4x8xf32> to vector<4x8x1xf32>
    %47 = vector.broadcast %46 : vector<4x8x1xf32> to vector<4x8x8xf32>
    %48 = arith.subf %44, %47 : vector<4x8x8xf32>
    %49 = math.exp %48 : vector<4x8x8xf32>
    %cst_29 = arith.constant dense<0.000000e+00> : vector<4x8xf32>
    %50 = vector.multi_reduction <add>, %49, %cst_29 [2] : vector<4x8x8xf32> to vector<4x8xf32>
    %51 = vector.shape_cast %50 : vector<4x8xf32> to vector<4x8x1xf32>
    %52 = tpu.reciprocal %51 {approx = true} : vector<4x8x1xf32> -> vector<4x8x1xf32>
    %53 = vector.broadcast %52 : vector<4x8x1xf32> to vector<4x8x8xf32>
    %54 = arith.mulf %49, %53 : vector<4x8x8xf32>
    "tpu.trace_start"() <{level = 10 : i32, message = "nls,nsd->nld"}> : () -> ()
    %cst_30 = arith.constant dense<0.000000e+00> : vector<4x8x8xf32>
    %55 = tpu.matmul %54, %43, %cst_30 {dimension_numbers = #tpu.dot_dimension_numbers<[2], [1], [1], [2], [0, 0, 0, 1, 1, 2], [0], [0]>} : vector<4x8x8xf32>, vector<4x8x8xf32>, vector<4x8x8xf32> -> vector<4x8x8xf32>
    "tpu.trace_stop"() : () -> ()
    %56 = vector.extract_strided_slice %55 {offsets = [0, 0, 0], sizes = [1, 8, 8], strides = [1, 1, 1]} : vector<4x8x8xf32> to vector<1x8x8xf32>
    %57 = vector.extract_strided_slice %55 {offsets = [1, 0, 0], sizes = [1, 8, 8], strides = [1, 1, 1]} : vector<4x8x8xf32> to vector<1x8x8xf32>
    %58 = vector.extract_strided_slice %55 {offsets = [2, 0, 0], sizes = [1, 8, 8], strides = [1, 1, 1]} : vector<4x8x8xf32> to vector<1x8x8xf32>
    %59 = vector.extract_strided_slice %55 {offsets = [3, 0, 0], sizes = [1, 8, 8], strides = [1, 1, 1]} : vector<4x8x8xf32> to vector<1x8x8xf32>
    %60 = tpu.concatenate %56, %57, %58, %59 in 2 : vector<1x8x8xf32>, vector<1x8x8xf32>, vector<1x8x8xf32>, vector<1x8x8xf32> -> vector<1x8x32xf32>
    %61 = vector.shape_cast %60 : vector<1x8x32xf32> to vector<8x32xf32>
    %cst_31 = arith.constant dense<0.000000e+00> : vector<8x32xf32>
    %62 = tpu.matmul %61, %4, %cst_31 {dimension_numbers = #tpu.dot_dimension_numbers<[1], [0], [0], [1], [0, 0, 1, 1], [], []>} : vector<8x32xf32>, vector<32x32xf32>, vector<8x32xf32> -> vector<8x32xf32>
    %63 = vector.broadcast %8 : vector<1x32xf32> to vector<8x32xf32>
    %64 = arith.addf %62, %63 : vector<8x32xf32>
    %65 = vector.shape_cast %64 : vector<8x32xf32> to vector<1x8x32xf32>
    %c0_32 = arith.constant 0 : index
    %c0_33 = arith.constant 0 : index
    %c0_34 = arith.constant 0 : index
    %66 = vector.load %arg2[%c0_32, %c0_33, %c0_34] : memref<1x8x32xf32, #tpu.memory_space<vmem>>, vector<1x8x32xf32>
    %67 = arith.addf %66, %65 : vector<1x8x32xf32>
    %cst_35 = arith.constant 5.000000e-01 : f32
    %68 = vector.broadcast %cst_35 : f32 to vector<1x8x32xf32>
    %69 = arith.mulf %68, %67 : vector<1x8x32xf32>
    %c0_36 = arith.constant 0 : index
    %c0_37 = arith.constant 0 : index
    %c0_38 = arith.constant 0 : index
    %70 = vector.load %arg3[%c0_36, %c0_37, %c0_38] : memref<1x8x32xf32, #tpu.memory_space<vmem>>, vector<1x8x32xf32>
    %71 = arith.addf %70, %65 : vector<1x8x32xf32>
    %cst_39 = arith.constant 5.000000e-01 : f32
    %72 = vector.broadcast %cst_39 : f32 to vector<1x8x32xf32>
    %73 = arith.mulf %72, %71 : vector<1x8x32xf32>
    %c0_40 = arith.constant 0 : index
    %c0_41 = arith.constant 0 : index
    %c0_42 = arith.constant 0 : index
    %74 = vector.load %arg4[%c0_40, %c0_41, %c0_42] : memref<1x8x32xf32, #tpu.memory_space<vmem>>, vector<1x8x32xf32>
    %75 = arith.addf %74, %65 : vector<1x8x32xf32>
    %cst_43 = arith.constant 5.000000e-01 : f32
    %76 = vector.broadcast %cst_43 : f32 to vector<1x8x32xf32>
    %77 = arith.mulf %76, %75 : vector<1x8x32xf32>
    %78 = vector.shape_cast %69 : vector<1x8x32xf32> to vector<8x32xf32>
    %79 = vector.shape_cast %73 : vector<1x8x32xf32> to vector<8x32xf32>
    %80 = vector.shape_cast %77 : vector<1x8x32xf32> to vector<8x32xf32>
    %cst_44 = arith.constant dense<0.000000e+00> : vector<8x32xf32>
    %81 = tpu.matmul %78, %1, %cst_44 {dimension_numbers = #tpu.dot_dimension_numbers<[1], [0], [0], [1], [0, 0, 1, 1], [], []>} : vector<8x32xf32>, vector<32x32xf32>, vector<8x32xf32> -> vector<8x32xf32>
    %82 = vector.broadcast %5 : vector<1x32xf32> to vector<8x32xf32>
    %83 = arith.addf %81, %82 : vector<8x32xf32>
    %cst_45 = arith.constant 0.353553385 : f32
    %84 = vector.broadcast %cst_45 : f32 to vector<8x32xf32>
    %85 = arith.mulf %83, %84 : vector<8x32xf32>
    %cst_46 = arith.constant dense<0.000000e+00> : vector<8x32xf32>
    %86 = tpu.matmul %79, %2, %cst_46 {dimension_numbers = #tpu.dot_dimension_numbers<[1], [0], [0], [1], [0, 0, 1, 1], [], []>} : vector<8x32xf32>, vector<32x32xf32>, vector<8x32xf32> -> vector<8x32xf32>
    %87 = vector.broadcast %6 : vector<1x32xf32> to vector<8x32xf32>
    %88 = arith.addf %86, %87 : vector<8x32xf32>
    %cst_47 = arith.constant dense<0.000000e+00> : vector<8x32xf32>
    %89 = tpu.matmul %80, %3, %cst_47 {dimension_numbers = #tpu.dot_dimension_numbers<[1], [0], [0], [1], [0, 0, 1, 1], [], []>} : vector<8x32xf32>, vector<32x32xf32>, vector<8x32xf32> -> vector<8x32xf32>
    %90 = vector.broadcast %7 : vector<1x32xf32> to vector<8x32xf32>
    %91 = arith.addf %89, %90 : vector<8x32xf32>
    %92 = vector.shape_cast %85 : vector<8x32xf32> to vector<1x8x32xf32>
    %93 = vector.shape_cast %88 : vector<8x32xf32> to vector<1x8x32xf32>
    %94 = vector.shape_cast %91 : vector<8x32xf32> to vector<1x8x32xf32>
    %95 = vector.extract_strided_slice %92 {offsets = [0, 0, 0], sizes = [1, 8, 8], strides = [1, 1, 1]} : vector<1x8x32xf32> to vector<1x8x8xf32>
    %96 = vector.extract_strided_slice %92 {offsets = [0, 0, 8], sizes = [1, 8, 8], strides = [1, 1, 1]} : vector<1x8x32xf32> to vector<1x8x8xf32>
    %97 = vector.extract_strided_slice %92 {offsets = [0, 0, 16], sizes = [1, 8, 8], strides = [1, 1, 1]} : vector<1x8x32xf32> to vector<1x8x8xf32>
    %98 = vector.extract_strided_slice %92 {offsets = [0, 0, 24], sizes = [1, 8, 8], strides = [1, 1, 1]} : vector<1x8x32xf32> to vector<1x8x8xf32>
    %99 = tpu.concatenate %95, %96, %97, %98 in 0 : vector<1x8x8xf32>, vector<1x8x8xf32>, vector<1x8x8xf32>, vector<1x8x8xf32> -> vector<4x8x8xf32>
    %100 = vector.extract_strided_slice %93 {offsets = [0, 0, 0], sizes = [1, 8, 8], strides = [1, 1, 1]} : vector<1x8x32xf32> to vector<1x8x8xf32>
    %101 = vector.extract_strided_slice %93 {offsets = [0, 0, 8], sizes = [1, 8, 8], strides = [1, 1, 1]} : vector<1x8x32xf32> to vector<1x8x8xf32>
    %102 = vector.extract_strided_slice %93 {offsets = [0, 0, 16], sizes = [1, 8, 8], strides = [1, 1, 1]} : vector<1x8x32xf32> to vector<1x8x8xf32>
    %103 = vector.extract_strided_slice %93 {offsets = [0, 0, 24], sizes = [1, 8, 8], strides = [1, 1, 1]} : vector<1x8x32xf32> to vector<1x8x8xf32>
    %104 = tpu.concatenate %100, %101, %102, %103 in 0 : vector<1x8x8xf32>, vector<1x8x8xf32>, vector<1x8x8xf32>, vector<1x8x8xf32> -> vector<4x8x8xf32>
    %105 = vector.extract_strided_slice %94 {offsets = [0, 0, 0], sizes = [1, 8, 8], strides = [1, 1, 1]} : vector<1x8x32xf32> to vector<1x8x8xf32>
    %106 = vector.extract_strided_slice %94 {offsets = [0, 0, 8], sizes = [1, 8, 8], strides = [1, 1, 1]} : vector<1x8x32xf32> to vector<1x8x8xf32>
    %107 = vector.extract_strided_slice %94 {offsets = [0, 0, 16], sizes = [1, 8, 8], strides = [1, 1, 1]} : vector<1x8x32xf32> to vector<1x8x8xf32>
    %108 = vector.extract_strided_slice %94 {offsets = [0, 0, 24], sizes = [1, 8, 8], strides = [1, 1, 1]} : vector<1x8x32xf32> to vector<1x8x8xf32>
    %109 = tpu.concatenate %105, %106, %107, %108 in 0 : vector<1x8x8xf32>, vector<1x8x8xf32>, vector<1x8x8xf32>, vector<1x8x8xf32> -> vector<4x8x8xf32>
    "tpu.trace_start"() <{level = 10 : i32, message = "nle,nse->nls"}> : () -> ()
    %cst_48 = arith.constant dense<0.000000e+00> : vector<4x8x8xf32>
    %110 = tpu.matmul %99, %104, %cst_48 {dimension_numbers = #tpu.dot_dimension_numbers<[2], [2], [1], [1], [0, 0, 0, 1, 1, 1], [0], [0]>} : vector<4x8x8xf32>, vector<4x8x8xf32>, vector<4x8x8xf32> -> vector<4x8x8xf32>
    "tpu.trace_stop"() : () -> ()
    %cst_49 = arith.constant dense<0xFF800000> : vector<4x8xf32>
    %111 = vector.multi_reduction <maximumf>, %110, %cst_49 [2] : vector<4x8x8xf32> to vector<4x8xf32>
    %112 = vector.shape_cast %111 : vector<4x8xf32> to vector<4x8x1xf32>
    %113 = vector.broadcast %112 : vector<4x8x1xf32> to vector<4x8x8xf32>
    %114 = arith.subf %110, %113 : vector<4x8x8xf32>
    %115 = math.exp %114 : vector<4x8x8xf32>
    %cst_50 = arith.constant dense<0.000000e+00> : vector<4x8xf32>
    %116 = vector.multi_reduction <add>, %115, %cst_50 [2] : vector<4x8x8xf32> to vector<4x8xf32>
    %117 = vector.shape_cast %116 : vector<4x8xf32> to vector<4x8x1xf32>
    %118 = tpu.reciprocal %117 {approx = true} : vector<4x8x1xf32> -> vector<4x8x1xf32>
    %119 = vector.broadcast %118 : vector<4x8x1xf32> to vector<4x8x8xf32>
    %120 = arith.mulf %115, %119 : vector<4x8x8xf32>
    %121 = arith.extui %0 : i1 to i32
    %c0_i32 = arith.constant 0 : i32
    %122 = arith.cmpi ne, %121, %c0_i32 : i32
    scf.if %122 {
      %135 = vector.extract_strided_slice %120 {offsets = [0, 0, 0], sizes = [1, 8, 8], strides = [1, 1, 1]} : vector<4x8x8xf32> to vector<1x8x8xf32>
      %c0_56 = arith.constant 0 : index
      %c0_57 = arith.constant 0 : index
      %c0_58 = arith.constant 0 : index
      %c0_59 = arith.constant 0 : index
      %136 = vector.load %arg14[%c0_56, %c0_57, %c0_58, %c0_59] : memref<1x4x8x8xf32, #tpu.memory_space<vmem>>, vector<1x1x8x8xf32>
      %137 = vector.shape_cast %136 : vector<1x1x8x8xf32> to vector<1x8x8xf32>
      %138 = vector.shape_cast %135 : vector<1x8x8xf32> to vector<1x1x8x8xf32>
      tpu.vector_store %arg14[%c0_56, %c0_57, %c0_58, %c0_59], %138 {strides = array<i32>} : memref<1x4x8x8xf32, #tpu.memory_space<vmem>>, vector<1x1x8x8xf32>,
      %139 = vector.extract_strided_slice %120 {offsets = [1, 0, 0], sizes = [1, 8, 8], strides = [1, 1, 1]} : vector<4x8x8xf32> to vector<1x8x8xf32>
      %c0_60 = arith.constant 0 : index
      %c1 = arith.constant 1 : index
      %c0_61 = arith.constant 0 : index
      %c0_62 = arith.constant 0 : index
      %140 = vector.load %arg14[%c0_60, %c1, %c0_61, %c0_62] : memref<1x4x8x8xf32, #tpu.memory_space<vmem>>, vector<1x1x8x8xf32>
      %141 = vector.shape_cast %140 : vector<1x1x8x8xf32> to vector<1x8x8xf32>
      %142 = vector.shape_cast %139 : vector<1x8x8xf32> to vector<1x1x8x8xf32>
      tpu.vector_store %arg14[%c0_60, %c1, %c0_61, %c0_62], %142 {strides = array<i32>} : memref<1x4x8x8xf32, #tpu.memory_space<vmem>>, vector<1x1x8x8xf32>,
      %143 = vector.extract_strided_slice %120 {offsets = [2, 0, 0], sizes = [1, 8, 8], strides = [1, 1, 1]} : vector<4x8x8xf32> to vector<1x8x8xf32>
      %c0_63 = arith.constant 0 : index
      %c2 = arith.constant 2 : index
      %c0_64 = arith.constant 0 : index
      %c0_65 = arith.constant 0 : index
      %144 = vector.load %arg14[%c0_63, %c2, %c0_64, %c0_65] : memref<1x4x8x8xf32, #tpu.memory_space<vmem>>, vector<1x1x8x8xf32>
      %145 = vector.shape_cast %144 : vector<1x1x8x8xf32> to vector<1x8x8xf32>
      %146 = vector.shape_cast %143 : vector<1x8x8xf32> to vector<1x1x8x8xf32>
      tpu.vector_store %arg14[%c0_63, %c2, %c0_64, %c0_65], %146 {strides = array<i32>} : memref<1x4x8x8xf32, #tpu.memory_space<vmem>>, vector<1x1x8x8xf32>,
      %147 = vector.extract_strided_slice %120 {offsets = [3, 0, 0], sizes = [1, 8, 8], strides = [1, 1, 1]} : vector<4x8x8xf32> to vector<1x8x8xf32>
      %c0_66 = arith.constant 0 : index
      %c3 = arith.constant 3 : index
      %c0_67 = arith.constant 0 : index
      %c0_68 = arith.constant 0 : index
      %148 = vector.load %arg14[%c0_66, %c3, %c0_67, %c0_68] : memref<1x4x8x8xf32, #tpu.memory_space<vmem>>, vector<1x1x8x8xf32>
      %149 = vector.shape_cast %148 : vector<1x1x8x8xf32> to vector<1x8x8xf32>
      %150 = vector.shape_cast %147 : vector<1x8x8xf32> to vector<1x1x8x8xf32>
      tpu.vector_store %arg14[%c0_66, %c3, %c0_67, %c0_68], %150 {strides = array<i32>} : memref<1x4x8x8xf32, #tpu.memory_space<vmem>>, vector<1x1x8x8xf32>,
    } else {
    }
    "tpu.trace_start"() <{level = 10 : i32, message = "nls,nsd->nld"}> : () -> ()
    %cst_51 = arith.constant dense<0.000000e+00> : vector<4x8x8xf32>
    %123 = tpu.matmul %120, %109, %cst_51 {dimension_numbers = #tpu.dot_dimension_numbers<[2], [1], [1], [2], [0, 0, 0, 1, 1, 2], [0], [0]>} : vector<4x8x8xf32>, vector<4x8x8xf32>, vector<4x8x8xf32> -> vector<4x8x8xf32>
    "tpu.trace_stop"() : () -> ()
    %124 = vector.extract_strided_slice %123 {offsets = [0, 0, 0], sizes = [1, 8, 8], strides = [1, 1, 1]} : vector<4x8x8xf32> to vector<1x8x8xf32>
    %125 = vector.extract_strided_slice %123 {offsets = [1, 0, 0], sizes = [1, 8, 8], strides = [1, 1, 1]} : vector<4x8x8xf32> to vector<1x8x8xf32>
    %126 = vector.extract_strided_slice %123 {offsets = [2, 0, 0], sizes = [1, 8, 8], strides = [1, 1, 1]} : vector<4x8x8xf32> to vector<1x8x8xf32>
    %127 = vector.extract_strided_slice %123 {offsets = [3, 0, 0], sizes = [1, 8, 8], strides = [1, 1, 1]} : vector<4x8x8xf32> to vector<1x8x8xf32>
    %128 = tpu.concatenate %124, %125, %126, %127 in 2 : vector<1x8x8xf32>, vector<1x8x8xf32>, vector<1x8x8xf32>, vector<1x8x8xf32> -> vector<1x8x32xf32>
    %129 = vector.shape_cast %128 : vector<1x8x32xf32> to vector<8x32xf32>
    %cst_52 = arith.constant dense<0.000000e+00> : vector<8x32xf32>
    %130 = tpu.matmul %129, %4, %cst_52 {dimension_numbers = #tpu.dot_dimension_numbers<[1], [0], [0], [1], [0, 0, 1, 1], [], []>} : vector<8x32xf32>, vector<32x32xf32>, vector<8x32xf32> -> vector<8x32xf32>
    %131 = vector.broadcast %8 : vector<1x32xf32> to vector<8x32xf32>
    %132 = arith.addf %130, %131 : vector<8x32xf32>
    %133 = vector.shape_cast %132 : vector<8x32xf32> to vector<1x8x32xf32>
    %c0_53 = arith.constant 0 : index
    %c0_54 = arith.constant 0 : index
    %c0_55 = arith.constant 0 : index
    %134 = vector.load %arg13[%c0_53, %c0_54, %c0_55] : memref<1x8x32xf32, #tpu.memory_space<vmem>>, vector<1x8x32xf32>
    tpu.vector_store %arg13[%c0_53, %c0_54, %c0_55], %133 {strides = array<i32>} : memref<1x8x32xf32, #tpu.memory_space<vmem>>, vector<1x8x32xf32>,
    return
  }
  func.func @transform_0(%arg0: i32, %arg1: i32) -> (i32, i32, i32) {
    %c0_i32 = arith.constant 0 : i32
    %c0_i32_0 = arith.constant 0 : i32
    return %arg0, %arg1, %c0_i32 : i32, i32, i32
  }
  func.func @transform_1(%arg0: i32, %arg1: i32) -> (i32, i32, i32) {
    %c0_i32 = arith.constant 0 : i32
    %c0_i32_0 = arith.constant 0 : i32
    return %arg0, %arg1, %c0_i32 : i32, i32, i32
  }
  func.func @transform_2(%arg0: i32, %arg1: i32) -> (i32, i32, i32) {
    %c0_i32 = arith.constant 0 : i32
    %c0_i32_0 = arith.constant 0 : i32
    return %arg0, %arg1, %c0_i32 : i32, i32, i32
  }
  func.func @transform_3(%arg0: i32, %arg1: i32) -> (i32, i32) {
    %c0_i32 = arith.constant 0 : i32
    %c0_i32_0 = arith.constant 0 : i32
    %c0_i32_1 = arith.constant 0 : i32
    return %c0_i32, %c0_i32_0 : i32, i32
  }
  func.func @transform_4(%arg0: i32, %arg1: i32) -> (i32, i32) {
    %c0_i32 = arith.constant 0 : i32
    %c0_i32_0 = arith.constant 0 : i32
    %c0_i32_1 = arith.constant 0 : i32
    return %c0_i32, %c0_i32_0 : i32, i32
  }
  func.func @transform_5(%arg0: i32, %arg1: i32) -> (i32, i32) {
    %c0_i32 = arith.constant 0 : i32
    %c0_i32_0 = arith.constant 0 : i32
    %c0_i32_1 = arith.constant 0 : i32
    return %c0_i32, %c0_i32_0 : i32, i32
  }
  func.func @transform_6(%arg0: i32, %arg1: i32) -> (i32, i32) {
    %c0_i32 = arith.constant 0 : i32
    %c0_i32_0 = arith.constant 0 : i32
    %c0_i32_1 = arith.constant 0 : i32
    return %c0_i32, %c0_i32_0 : i32, i32
  }
  func.func @transform_7(%arg0: i32, %arg1: i32) -> (i32, i32) {
    %c0_i32 = arith.constant 0 : i32
    %c0_i32_0 = arith.constant 0 : i32
    %c0_i32_1 = arith.constant 0 : i32
    return %c0_i32, %c0_i32_0 : i32, i32
  }
  func.func @transform_8(%arg0: i32, %arg1: i32) -> (i32, i32) {
    %c0_i32 = arith.constant 0 : i32
    %c0_i32_0 = arith.constant 0 : i32
    %c0_i32_1 = arith.constant 0 : i32
    return %c0_i32, %c0_i32_0 : i32, i32
  }
  func.func @transform_9(%arg0: i32, %arg1: i32) -> (i32, i32) {
    %c0_i32 = arith.constant 0 : i32
    %c0_i32_0 = arith.constant 0 : i32
    %c0_i32_1 = arith.constant 0 : i32
    return %c0_i32, %c0_i32_0 : i32, i32
  }
  func.func @transform_10(%arg0: i32, %arg1: i32) -> (i32, i32) {
    %c0_i32 = arith.constant 0 : i32
    %c0_i32_0 = arith.constant 0 : i32
    %c0_i32_1 = arith.constant 0 : i32
    return %c0_i32, %c0_i32_0 : i32, i32
  }
  func.func @transform_11(%arg0: i32, %arg1: i32) -> (i32, i32, i32) {
    %c0_i32 = arith.constant 0 : i32
    %c0_i32_0 = arith.constant 0 : i32
    return %arg0, %arg1, %c0_i32 : i32, i32, i32
  }
  func.func @transform_12(%arg0: i32, %arg1: i32) -> (i32, i32, i32, i32) {
    %c0_i32 = arith.constant 0 : i32
    %c0_i32_0 = arith.constant 0 : i32
    %c0_i32_1 = arith.constant 0 : i32
    %c0_i32_2 = arith.constant 0 : i32
    return %arg0, %c0_i32, %c0_i32_0, %c0_i32_1 : i32, i32, i32, i32
  }
}

</mosaic_0001>

<llo_original>
// kernel: tpu_custom_call.1
$region0: #{tpu_custom_call.1}
  #allocation0 [shape = 'u32[]', space=smem, size = 0x4, offset = 0x4, fixed_abs, tag = 'smem constant byte address 0x4 - core index']
  #allocation1 [shape = 'u32[144,128]{1,0:T(1,128)}', space=vmem, size = 0x12000, scoped, tag = 'internal scratch']
  %s0 = inlined_call_operand.hbm [shape: f32[2,16,32], index: 0, kind: input, shape index: {}]
  %s1 = inlined_call_operand.hbm [shape: f32[2,16,32], index: 1, kind: input, shape index: {}]
  %s2 = inlined_call_operand.hbm [shape: f32[2,16,32], index: 2, kind: input, shape index: {}]
  %s3 = inlined_call_operand.hbm [shape: f32[32,32], index: 3, kind: input, shape index: {}]
  %s4 = inlined_call_operand.vmem [shape: f32[1,32], index: 4, kind: input, shape index: {}]
  %s5 = inlined_call_operand.hbm [shape: f32[32,32], index: 5, kind: input, shape index: {}]
  %s6 = inlined_call_operand.vmem [shape: f32[1,32], index: 6, kind: input, shape index: {}]
  %s7 = inlined_call_operand.hbm [shape: f32[32,32], index: 7, kind: input, shape index: {}]
  %s8 = inlined_call_operand.vmem [shape: f32[1,32], index: 8, kind: input, shape index: {}]
  %s9 = inlined_call_operand.hbm [shape: f32[32,32], index: 9, kind: input, shape index: {}]
  %s10 = inlined_call_operand.vmem [shape: f32[1,32], index: 10, kind: input, shape index: {}]
  %s11 = inlined_call_operand.hbm [shape: f32[2,16,32], index: 11, kind: output, shape index: {0}]
  %s12 = inlined_call_operand.hbm [shape: f32[2,4,8,8], index: 12, kind: output, shape index: {1}]
  %13 = xla_tuple %s11, %s12
  %s14 = sld [smem:[#allocation0]]
  $region117: #{tpu_custom_call.1} parent=0
    _
  %s16 = ssub.s32 1, %s14
  %s17 = scalar_select 0, %s16, %s14
  $region1: #{tpu_custom_call.1} parent=0
    #allocation2 [shape = 'u8[8192]{0}', space=vmem, size = 0x2000, scoped, tag = 'input window, operand 0']
    #allocation3 [shape = 's32[2]{0}', space=sflag, size = 0x8, scoped, tag = 'scoped memory for tpu_custom_call.1']
    #allocation4 [shape = 's32[2]{0}', space=sflag, size = 0x8, scoped, tag = 'scoped memory for tpu_custom_call.1']
    #allocation5 [shape = 'u8[8192]{0}', space=vmem, size = 0x2000, scoped, tag = 'input window, operand 1']
    #allocation6 [shape = 's32[2]{0}', space=sflag, size = 0x8, scoped, tag = 'scoped memory for tpu_custom_call.1']
    #allocation7 [shape = 'u8[8192]{0}', space=vmem, size = 0x2000, scoped, tag = 'input window, operand 2']
    #allocation8 [shape = 'u8[16384]{0}', space=vmem, size = 0x4000, scoped, tag = 'input window, operand 3, single buffered']
    #allocation9 [shape = 's32[1]{0}', space=sflag, size = 0x4, scoped, tag = 'scoped memory for tpu_custom_call.1']
    #allocation10 [shape = 'u8[16384]{0}', space=vmem, size = 0x4000, scoped, tag = 'input window, operand 5, single buffered']
    #allocation11 [shape = 'u8[16384]{0}', space=vmem, size = 0x4000, scoped, tag = 'input window, operand 7, single buffered']
    #allocation12 [shape = 's32[1]{0}', space=sflag, size = 0x4, scoped, tag = 'scoped memory for tpu_custom_call.1']
    #allocation13 [shape = 'u8[16384]{0}', space=vmem, size = 0x4000, scoped, tag = 'input window, operand 9, single buffered']
    #allocation14 [shape = 'u8[8192]{0}', space=vmem, size = 0x2000, scoped, tag = 'output window, operand 0']
    #allocation15 [shape = 'u8[32768]{0}', space=vmem, size = 0x8000, scoped, tag = 'output window, operand 1']
    #allocation16 [shape = 's32[2]{0}', space=sflag, size = 0x8, scoped, tag = 'scoped memory for tpu_custom_call.1']
    %18 = vsyncpa [#allocation3], 0
    %s19 = scalar_lea.sflag [#allocation3], 1
    %20 = vsyncpa %s19, 0
    %21 = vsyncpa [#allocation6], 0
    %s22 = scalar_lea.sflag [#allocation6], 1
    %23 = vsyncpa %s22, 0
    %24 = vsyncpa [#allocation9], 0
    %25 = vsyncpa [#allocation12], 0
    %26 = vsyncpa [#allocation4], 0
    %s27 = scalar_lea.sflag [#allocation4], 1
    %28 = vsyncpa %s27, 0
    %29 = vsyncpa [#allocation16], 0
    %s30 = scalar_lea.sflag [#allocation16], 1
    %31 = vsyncpa %s30, 0
    loop: start=0, step=1, limit=6
    $region2: #{tpu_custom_call.1} parent=1 // loop_pre_header
      _
    $region3: #{tpu_custom_call.1} parent=1 // loop_header
      %s33 = sphi 0, %s37
      %p34 = scmp.ge.s32.totalorder %s33, 6
      %s40 = sphi 0, %s52
      %s41 = sphi 0, %s48
      %s42 = sphi 0, %s40
      %s43 = sphi 0, %s41
      %s44 = sphi 0, %s42
      %s45 = sphi 0, %s43
      %s57 = sphi 0, %s59
      %s60 = sphi 0, %s57
      %s61 = sphi 0, %s60
      %s77 = sphi 0, %s61
      %s85 = sphi 0, %s87
      %s88 = sphi 0, %s85
      %s89 = sphi 0, %s88
      %s105 = sphi 0, %s89
      %s113 = sphi 0, %s115
      %s116 = sphi 0, %s113
      %s117 = sphi 0, %s116
      %s133 = sphi 0, %s117
      %s137 = sphi 0, %s137
      %s139 = sphi 0, %s137
      %s140 = sphi 0, %s139
      %s154 = sphi 0, %s140
      %s158 = sphi 0, %s158
      %s160 = sphi 0, %s158
      %s161 = sphi 0, %s160
      %s175 = sphi 0, %s161
      %s179 = sphi 0, %s179
      %s181 = sphi 0, %s179
      %s182 = sphi 0, %s181
      %s196 = sphi 0, %s182
      %s200 = sphi 0, %s200
      %s202 = sphi 0, %s200
      %s203 = sphi 0, %s202
      %s217 = sphi 0, %s203
      %s221 = sphi 0, %s221
      %s223 = sphi 0, %s221
      %s224 = sphi 0, %s223
      %s238 = sphi 0, %s224
      %s242 = sphi 0, %s242
      %s244 = sphi 0, %s242
      %s245 = sphi 0, %s244
      %s259 = sphi 0, %s245
      %s263 = sphi 0, %s263
      %s265 = sphi 0, %s263
      %s266 = sphi 0, %s265
      %s280 = sphi 0, %s266
      %s284 = sphi 0, %s284
      %s286 = sphi 0, %s284
      %s287 = sphi 0, %s286
      %s301 = sphi 0, %s287
      %s309 = sphi 0, %s311
      %s312 = sphi 0, %s309
      %s313 = sphi 0, %s312
      %s329 = sphi 0, %s313
      %s335 = sphi 0, %s337
      %s338 = sphi 0, %s335
      %s339 = sphi 0, %s338
      %s355 = sphi 0, %s339
    $region4: #{tpu_custom_call.1} parent=1 // loop_header_branch
      %36 = sbr.rel (%p34) target = $region8
    $region5: #{tpu_custom_call.1} parent=1 // loop_body
      %s38 = ssub.s32 %s33, 1
      %s39 = ssub.s32 %s33, 2
      %s46 = sadd.s32 1, %s41
      %p47 = scmp.ge.s32.totalorder %s46, 2
      %s48 = scalar_select %p47, 0, %s46
      %s49 = sadd.s32 1, %s40
      %s50 = scalar_select %p47, %s49, %s40
      %p51 = scmp.ge.s32.totalorder %s50, 2
      %s52 = scalar_select %p51, 0, %s50
      %s53 = ssub.s32 %s40, %s52
      %s54 = ssub.s32 %s41, %s48
      %s55 = sor.u32 %s53, %s54
      %p56 = scmp.eq.s32.totalorder %s55, 0
      %s58 = sadd.s32 %s57, 1
      %s59 = scalar_select %p56, %s57, %s58
      %p62 = pneg %p56
      %p63 = scmp.eq.s32.totalorder %s33, 3
      %p64 = por %p62, %p63
      %p65 = scmp.ne.s32.totalorder %s57, %s60
      %p66 = scmp.eq.s32.totalorder %s33, 0
      %p67 = por %p65, %p66
      %p68 = scmp.ne.s32.totalorder %s57, %s60
      %p69 = scmp.eq.s32.totalorder %s38, 3
      %p70 = por %p68, %p69
      %p71 = scmp.ne.s32.totalorder %s60, %s61
      %p72 = scmp.eq.s32.totalorder %s38, 0
      %p73 = por %p71, %p72
      %p74 = scmp.ne.s32.totalorder %s60, %s61
      %p75 = scmp.eq.s32.totalorder %s39, 3
      %p76 = por %p74, %p75
      %p78 = scmp.ne.s32.totalorder %s61, %s77
      %p79 = scmp.eq.s32.totalorder %s39, 0
      %p80 = por %p78, %p79
      %s81 = ssub.s32 %s40, %s52
      %s82 = ssub.s32 %s41, %s48
      %s83 = sor.u32 %s81, %s82
      %p84 = scmp.eq.s32.totalorder %s83, 0
      %s86 = sadd.s32 %s85, 1
      %s87 = scalar_select %p84, %s85, %s86
      %p90 = pneg %p84
      %p91 = scmp.eq.s32.totalorder %s33, 3
      %p92 = por %p90, %p91
      %p93 = scmp.ne.s32.totalorder %s85, %s88
      %p94 = scmp.eq.s32.totalorder %s33, 0
      %p95 = por %p93, %p94
      %p96 = scmp.ne.s32.totalorder %s85, %s88
      %p97 = scmp.eq.s32.totalorder %s38, 3
      %p98 = por %p96, %p97
      %p99 = scmp.ne.s32.totalorder %s88, %s89
      %p100 = scmp.eq.s32.totalorder %s38, 0
      %p101 = por %p99, %p100
      %p102 = scmp.ne.s32.totalorder %s88, %s89
      %p103 = scmp.eq.s32.totalorder %s39, 3
      %p104 = por %p102, %p103
      %p106 = scmp.ne.s32.totalorder %s89, %s105
      %p107 = scmp.eq.s32.totalorder %s39, 0
      %p108 = por %p106, %p107
      %s109 = ssub.s32 %s40, %s52
      %s110 = ssub.s32 %s41, %s48
      %s111 = sor.u32 %s109, %s110
      %p112 = scmp.eq.s32.totalorder %s111, 0
      %s114 = sadd.s32 %s113, 1
      %s115 = scalar_select %p112, %s113, %s114
      %p118 = pneg %p112
      %p119 = scmp.eq.s32.totalorder %s33, 3
      %p120 = por %p118, %p119
      %p121 = scmp.ne.s32.totalorder %s113, %s116
      %p122 = scmp.eq.s32.totalorder %s33, 0
      %p123 = por %p121, %p122
      %p124 = scmp.ne.s32.totalorder %s113, %s116
      %p125 = scmp.eq.s32.totalorder %s38, 3
      %p126 = por %p124, %p125
      %p127 = scmp.ne.s32.totalorder %s116, %s117
      %p128 = scmp.eq.s32.totalorder %s38, 0
      %p129 = por %p127, %p128
      %p130 = scmp.ne.s32.totalorder %s116, %s117
      %p131 = scmp.eq.s32.totalorder %s39, 3
      %p132 = por %p130, %p131
      %p134 = scmp.ne.s32.totalorder %s117, %s133
      %p135 = scmp.eq.s32.totalorder %s39, 0
      %p136 = por %p134, %p135
      %s138 = sadd.s32 %s137, 1
      %p141 = scmp.eq.s32.totalorder %s33, 3
      %p142 = scmp.ne.s32.totalorder %s137, %s139
      %p143 = scmp.eq.s32.totalorder %s33, 0
      %p144 = por %p142, %p143
      %p145 = scmp.ne.s32.totalorder %s137, %s139
      %p146 = scmp.eq.s32.totalorder %s38, 3
      %p147 = por %p145, %p146
      %p148 = scmp.ne.s32.totalorder %s139, %s140
      %p149 = scmp.eq.s32.totalorder %s38, 0
      %p150 = por %p148, %p149
      %p151 = scmp.ne.s32.totalorder %s139, %s140
      %p152 = scmp.eq.s32.totalorder %s39, 3
      %p153 = por %p151, %p152
      %p155 = scmp.ne.s32.totalorder %s140, %s154
      %p156 = scmp.eq.s32.totalorder %s39, 0
      %p157 = por %p155, %p156
      %s159 = sadd.s32 %s158, 1
      %p162 = scmp.eq.s32.totalorder %s33, 3
      %p163 = scmp.ne.s32.totalorder %s158, %s160
      %p164 = scmp.eq.s32.totalorder %s33, 0
      %p165 = por %p163, %p164
      %p166 = scmp.ne.s32.totalorder %s158, %s160
      %p167 = scmp.eq.s32.totalorder %s38, 3
      %p168 = por %p166, %p167
      %p169 = scmp.ne.s32.totalorder %s160, %s161
      %p170 = scmp.eq.s32.totalorder %s38, 0
      %p171 = por %p169, %p170
      %p172 = scmp.ne.s32.totalorder %s160, %s161
      %p173 = scmp.eq.s32.totalorder %s39, 3
      %p174 = por %p172, %p173
      %p176 = scmp.ne.s32.totalorder %s161, %s175
      %p177 = scmp.eq.s32.totalorder %s39, 0
      %p178 = por %p176, %p177
      %s180 = sadd.s32 %s179, 1
      %p183 = scmp.eq.s32.totalorder %s33, 3
      %p184 = scmp.ne.s32.totalorder %s179, %s181
      %p185 = scmp.eq.s32.totalorder %s33, 0
      %p186 = por %p184, %p185
      %p187 = scmp.ne.s32.totalorder %s179, %s181
      %p188 = scmp.eq.s32.totalorder %s38, 3
      %p189 = por %p187, %p188
      %p190 = scmp.ne.s32.totalorder %s181, %s182
      %p191 = scmp.eq.s32.totalorder %s38, 0
      %p192 = por %p190, %p191
      %p193 = scmp.ne.s32.totalorder %s181, %s182
      %p194 = scmp.eq.s32.totalorder %s39, 3
      %p195 = por %p193, %p194
      %p197 = scmp.ne.s32.totalorder %s182, %s196
      %p198 = scmp.eq.s32.totalorder %s39, 0
      %p199 = por %p197, %p198
      %s201 = sadd.s32 %s200, 1
      %p204 = scmp.eq.s32.totalorder %s33, 3
      %p205 = scmp.ne.s32.totalorder %s200, %s202
      %p206 = scmp.eq.s32.totalorder %s33, 0
      %p207 = por %p205, %p206
      %p208 = scmp.ne.s32.totalorder %s200, %s202
      %p209 = scmp.eq.s32.totalorder %s38, 3
      %p210 = por %p208, %p209
      %p211 = scmp.ne.s32.totalorder %s202, %s203
      %p212 = scmp.eq.s32.totalorder %s38, 0
      %p213 = por %p211, %p212
      %p214 = scmp.ne.s32.totalorder %s202, %s203
      %p215 = scmp.eq.s32.totalorder %s39, 3
      %p216 = por %p214, %p215
      %p218 = scmp.ne.s32.totalorder %s203, %s217
      %p219 = scmp.eq.s32.totalorder %s39, 0
      %p220 = por %p218, %p219
      %s222 = sadd.s32 %s221, 1
      %p225 = scmp.eq.s32.totalorder %s33, 3
      %p226 = scmp.ne.s32.totalorder %s221, %s223
      %p227 = scmp.eq.s32.totalorder %s33, 0
      %p228 = por %p226, %p227
      %p229 = scmp.ne.s32.totalorder %s221, %s223
      %p230 = scmp.eq.s32.totalorder %s38, 3
      %p231 = por %p229, %p230
      %p232 = scmp.ne.s32.totalorder %s223, %s224
      %p233 = scmp.eq.s32.totalorder %s38, 0
      %p234 = por %p232, %p233
      %p235 = scmp.ne.s32.totalorder %s223, %s224
      %p236 = scmp.eq.s32.totalorder %s39, 3
      %p237 = por %p235, %p236
      %p239 = scmp.ne.s32.totalorder %s224, %s238
      %p240 = scmp.eq.s32.totalorder %s39, 0
      %p241 = por %p239, %p240
      %s243 = sadd.s32 %s242, 1
      %p246 = scmp.eq.s32.totalorder %s33, 3
      %p247 = scmp.ne.s32.totalorder %s242, %s244
      %p248 = scmp.eq.s32.totalorder %s33, 0
      %p249 = por %p247, %p248
      %p250 = scmp.ne.s32.totalorder %s242, %s244
      %p251 = scmp.eq.s32.totalorder %s38, 3
      %p252 = por %p250, %p251
      %p253 = scmp.ne.s32.totalorder %s244, %s245
      %p254 = scmp.eq.s32.totalorder %s38, 0
      %p255 = por %p253, %p254
      %p256 = scmp.ne.s32.totalorder %s244, %s245
      %p257 = scmp.eq.s32.totalorder %s39, 3
      %p258 = por %p256, %p257
      %p260 = scmp.ne.s32.totalorder %s245, %s259
      %p261 = scmp.eq.s32.totalorder %s39, 0
      %p262 = por %p260, %p261
      %s264 = sadd.s32 %s263, 1
      %p267 = scmp.eq.s32.totalorder %s33, 3
      %p268 = scmp.ne.s32.totalorder %s263, %s265
      %p269 = scmp.eq.s32.totalorder %s33, 0
      %p270 = por %p268, %p269
      %p271 = scmp.ne.s32.totalorder %s263, %s265
      %p272 = scmp.eq.s32.totalorder %s38, 3
      %p273 = por %p271, %p272
      %p274 = scmp.ne.s32.totalorder %s265, %s266
      %p275 = scmp.eq.s32.totalorder %s38, 0
      %p276 = por %p274, %p275
      %p277 = scmp.ne.s32.totalorder %s265, %s266
      %p278 = scmp.eq.s32.totalorder %s39, 3
      %p279 = por %p277, %p278
      %p281 = scmp.ne.s32.totalorder %s266, %s280
      %p282 = scmp.eq.s32.totalorder %s39, 0
      %p283 = por %p281, %p282
      %s285 = sadd.s32 %s284, 1
      %p288 = scmp.eq.s32.totalorder %s33, 3
      %p289 = scmp.ne.s32.totalorder %s284, %s286
      %p290 = scmp.eq.s32.totalorder %s33, 0
      %p291 = por %p289, %p290
      %p292 = scmp.ne.s32.totalorder %s284, %s286
      %p293 = scmp.eq.s32.totalorder %s38, 3
      %p294 = por %p292, %p293
      %p295 = scmp.ne.s32.totalorder %s286, %s287
      %p296 = scmp.eq.s32.totalorder %s38, 0
      %p297 = por %p295, %p296
      %p298 = scmp.ne.s32.totalorder %s286, %s287
      %p299 = scmp.eq.s32.totalorder %s39, 3
      %p300 = por %p298, %p299
      %p302 = scmp.ne.s32.totalorder %s287, %s301
      %p303 = scmp.eq.s32.totalorder %s39, 0
      %p304 = por %p302, %p303
      %s305 = ssub.s32 %s40, %s52
      %s306 = ssub.s32 %s41, %s48
      %s307 = sor.u32 %s305, %s306
      %p308 = scmp.eq.s32.totalorder %s307, 0
      %s310 = sadd.s32 %s309, 1
      %s311 = scalar_select %p308, %s309, %s310
      %p314 = pneg %p308
      %p315 = scmp.eq.s32.totalorder %s33, 3
      %p316 = por %p314, %p315
      %p317 = scmp.ne.s32.totalorder %s309, %s312
      %p318 = scmp.eq.s32.totalorder %s33, 0
      %p319 = por %p317, %p318
      %p320 = scmp.ne.s32.totalorder %s309, %s312
      %p321 = scmp.eq.s32.totalorder %s38, 3
      %p322 = por %p320, %p321
      %p323 = scmp.ne.s32.totalorder %s312, %s313
      %p324 = scmp.eq.s32.totalorder %s38, 0
      %p325 = por %p323, %p324
      %p326 = scmp.ne.s32.totalorder %s312, %s313
      %p327 = scmp.eq.s32.totalorder %s39, 3
      %p328 = por %p326, %p327
      %p330 = scmp.ne.s32.totalorder %s313, %s329
      %p331 = scmp.eq.s32.totalorder %s39, 0
      %p332 = por %p330, %p331
      %s333 = ssub.s32 %s40, %s52
      %p334 = scmp.eq.s32.totalorder %s333, 0
      %s336 = sadd.s32 %s335, 1
      %s337 = scalar_select %p334, %s335, %s336
      %p340 = pneg %p334
      %p341 = scmp.eq.s32.totalorder %s33, 3
      %p342 = por %p340, %p341
      %p343 = scmp.ne.s32.totalorder %s335, %s338
      %p344 = scmp.eq.s32.totalorder %s33, 0
      %p345 = por %p343, %p344
      %p346 = scmp.ne.s32.totalorder %s335, %s338
      %p347 = scmp.eq.s32.totalorder %s38, 3
      %p348 = por %p346, %p347
      %p349 = scmp.ne.s32.totalorder %s338, %s339
      %p350 = scmp.eq.s32.totalorder %s38, 0
      %p351 = por %p349, %p350
      %p352 = scmp.ne.s32.totalorder %s338, %s339
      %p353 = scmp.eq.s32.totalorder %s39, 3
      %p354 = por %p352, %p353
      %p356 = scmp.ne.s32.totalorder %s339, %s355
      %p357 = scmp.eq.s32.totalorder %s39, 0
      %p358 = por %p356, %p357
      %p359 = scmp.le.s32.totalorder 1, %s33
      %p360 = scmp.lt.s32.totalorder %s33, 5
      %p361 = pnand %p359, %p360
      %p362 = pneg %p361
      // Predicated region
      $region9: #{tpu_custom_call.1} parent=5 // pred_check
        _
      $region10: #{tpu_custom_call.1} parent=5 // pred_check_branch
        %364 = sbr.rel (%p361) target = $region12
      $region11: #{tpu_custom_call.1} parent=5 // pred_region
        %s365 = ssub.s32 %s33, 1
        // Predicated region
        $region13: #{tpu_custom_call.1} parent=11 // pred_check
          %p366 = pneg %p150
        $region14: #{tpu_custom_call.1} parent=11 // pred_check_branch
          %368 = sbr.rel (%p366) target = $region16
        $region15: #{tpu_custom_call.1} parent=11 // pred_region
          %s370 = ssub.s32 512, 512
          %371 = vsyncadd [#allocation9], %s370
          %s372 = sshll.u32 [#allocation8], 4
          %s373 = int_to_ptr.vmem [resolvable:$true] %s372
          %378 = dma.hbm_to_vmem [thread:$0]  %s3, 512, %s373, [#allocation9], 128, 128, 8
        $region16: #{tpu_custom_call.1} parent=11 // pred_fallthru
          _
        // Predicated region
        $region17: #{tpu_custom_call.1} parent=11 // pred_check
          %p379 = pneg %p171
        $region18: #{tpu_custom_call.1} parent=11 // pred_check_branch
          %381 = sbr.rel (%p379) target = $region20
        $region19: #{tpu_custom_call.1} parent=11 // pred_region
          _
        $region20: #{tpu_custom_call.1} parent=11 // pred_fallthru
          _
        // Predicated region
        $region21: #{tpu_custom_call.1} parent=11 // pred_check
          %p382 = pneg %p192
        $region22: #{tpu_custom_call.1} parent=11 // pred_check_branch
          %384 = sbr.rel (%p382) target = $region24
        $region23: #{tpu_custom_call.1} parent=11 // pred_region
          %s386 = ssub.s32 512, 512
          %387 = vsyncadd [#allocation9], %s386
          %s388 = sshll.u32 [#allocation10], 4
          %s389 = int_to_ptr.vmem [resolvable:$true] %s388
          %394 = dma.hbm_to_vmem [thread:$0]  %s5, 512, %s389, [#allocation9], 128, 128, 8
        $region24: #{tpu_custom_call.1} parent=11 // pred_fallthru
          _
        // Predicated region
        $region25: #{tpu_custom_call.1} parent=11 // pred_check
          %p395 = pneg %p213
        $region26: #{tpu_custom_call.1} parent=11 // pred_check_branch
          %397 = sbr.rel (%p395) target = $region28
        $region27: #{tpu_custom_call.1} parent=11 // pred_region
          _
        $region28: #{tpu_custom_call.1} parent=11 // pred_fallthru
          _
        // Predicated region
        $region29: #{tpu_custom_call.1} parent=11 // pred_check
          %p398 = pneg %p234
        $region30: #{tpu_custom_call.1} parent=11 // pred_check_branch
          %400 = sbr.rel (%p398) target = $region32
        $region31: #{tpu_custom_call.1} parent=11 // pred_region
          %s402 = ssub.s32 512, 512
          %403 = vsyncadd [#allocation12], %s402
          %s404 = sshll.u32 [#allocation11], 4
          %s405 = int_to_ptr.vmem [resolvable:$true] %s404
          %410 = dma.hbm_to_vmem [thread:$0]  %s7, 512, %s405, [#allocation12], 128, 128, 8
        $region32: #{tpu_custom_call.1} parent=11 // pred_fallthru
          _
        // Predicated region
        $region33: #{tpu_custom_call.1} parent=11 // pred_check
          %p411 = pneg %p255
        $region34: #{tpu_custom_call.1} parent=11 // pred_check_branch
          %413 = sbr.rel (%p411) target = $region36
        $region35: #{tpu_custom_call.1} parent=11 // pred_region
          _
        $region36: #{tpu_custom_call.1} parent=11 // pred_fallthru
          _
        // Predicated region
        $region37: #{tpu_custom_call.1} parent=11 // pred_check
          %p414 = pneg %p276
        $region38: #{tpu_custom_call.1} parent=11 // pred_check_branch
          %416 = sbr.rel (%p414) target = $region40
        $region39: #{tpu_custom_call.1} parent=11 // pred_region
          %s418 = ssub.s32 512, 512
          %419 = vsyncadd [#allocation12], %s418
          %s420 = sshll.u32 [#allocation13], 4
          %s421 = int_to_ptr.vmem [resolvable:$true] %s420
          %426 = dma.hbm_to_vmem [thread:$0]  %s9, 512, %s421, [#allocation12], 128, 128, 8
        $region40: #{tpu_custom_call.1} parent=11 // pred_fallthru
          _
        // Predicated region
        $region41: #{tpu_custom_call.1} parent=11 // pred_check
          %p427 = pneg %p297
        $region42: #{tpu_custom_call.1} parent=11 // pred_check_branch
          %429 = sbr.rel (%p427) target = $region44
        $region43: #{tpu_custom_call.1} parent=11 // pred_region
          _
        $region44: #{tpu_custom_call.1} parent=11 // pred_fallthru
          _
      $region12: #{tpu_custom_call.1} parent=5 // pred_fallthru
        _
      %p430 = scmp.lt.s32.totalorder %s33, 4
      // Predicated region
      $region45: #{tpu_custom_call.1} parent=5 // pred_check
        %p431 = pneg %p430
      $region46: #{tpu_custom_call.1} parent=5 // pred_check_branch
        %433 = sbr.rel (%p431) target = $region48
      $region47: #{tpu_custom_call.1} parent=5 // pred_region
        // Predicated region
        $region49: #{tpu_custom_call.1} parent=47 // pred_check
          %p434 = pneg %p67
        $region50: #{tpu_custom_call.1} parent=47 // pred_check_branch
          %436 = sbr.rel (%p434) target = $region52
        $region51: #{tpu_custom_call.1} parent=47 // pred_region
          %s437 = sand.u32 %s57, 1
          %s438 = scalar_lea.sflag [#allocation3], %s437
          %s439 = sand.u32 %s57, 1
          %s440 = smul.addr %s439, 8
          %s441 = scalar_lea.vmem [#allocation2], %s440
          %s443 = ssub.s32 128, 128
          %444 = vsyncadd %s438, %s443
          %s445 = smul.addr %s40, 2
          %s446 = sadd.s32 %s41, %s445
          %s447 = smul.addr %s446, 128
          %s448 = scalar_lea.hbm %s0, %s447
          %s450 = sshll.u32 %s441, 4
          %s451 = int_to_ptr.vmem [resolvable:$true] %s450
          %453 = dma.hbm_to_vmem [thread:$0]  %s448, 128, %s451, %s438
        $region52: #{tpu_custom_call.1} parent=47 // pred_fallthru
          _
        // Predicated region
        $region53: #{tpu_custom_call.1} parent=47 // pred_check
          %p454 = pneg %p95
        $region54: #{tpu_custom_call.1} parent=47 // pred_check_branch
          %456 = sbr.rel (%p454) target = $region56
        $region55: #{tpu_custom_call.1} parent=47 // pred_region
          %s457 = sand.u32 %s33, 1
          %s458 = scalar_lea.sflag [#allocation6], %s457
          %s459 = sand.u32 %s85, 1
          %s460 = smul.addr %s459, 8
          %s461 = scalar_lea.vmem [#allocation5], %s460
          %s463 = ssub.s32 128, 128
          %464 = vsyncadd %s458, %s463
          %s465 = smul.addr %s40, 2
          %s466 = sadd.s32 %s41, %s465
          %s467 = smul.addr %s466, 128
          %s468 = scalar_lea.hbm %s1, %s467
          %s470 = sshll.u32 %s461, 4
          %s471 = int_to_ptr.vmem [resolvable:$true] %s470
          %473 = dma.hbm_to_vmem [thread:$0]  %s468, 128, %s471, %s458
        $region56: #{tpu_custom_call.1} parent=47 // pred_fallthru
          _
        // Predicated region
        $region57: #{tpu_custom_call.1} parent=47 // pred_check
          %p474 = pneg %p123
        $region58: #{tpu_custom_call.1} parent=47 // pred_check_branch
          %476 = sbr.rel (%p474) target = $region60
        $region59: #{tpu_custom_call.1} parent=47 // pred_region
          %s477 = sand.u32 %s33, 1
          %s478 = scalar_lea.sflag [#allocation6], %s477
          %s479 = sand.u32 %s113, 1
          %s480 = smul.addr %s479, 8
          %s481 = scalar_lea.vmem [#allocation7], %s480
          %s483 = ssub.s32 128, 128
          %484 = vsyncadd %s478, %s483
          %s485 = smul.addr %s40, 2
          %s486 = sadd.s32 %s41, %s485
          %s487 = smul.addr %s486, 128
          %s488 = scalar_lea.hbm %s2, %s487
          %s490 = sshll.u32 %s481, 4
          %s491 = int_to_ptr.vmem [resolvable:$true] %s490
          %493 = dma.hbm_to_vmem [thread:$0]  %s488, 128, %s491, %s478
        $region60: #{tpu_custom_call.1} parent=47 // pred_fallthru
          _
      $region48: #{tpu_custom_call.1} parent=5 // pred_fallthru
        _
      %p494 = scmp.le.s32.totalorder 1, %s33
      %p495 = scmp.lt.s32.totalorder %s33, 5
      %p496 = pnand %p494, %p495
      %p497 = pneg %p496
      // Predicated region
      $region61: #{tpu_custom_call.1} parent=5 // pred_check
        _
      $region62: #{tpu_custom_call.1} parent=5 // pred_check_branch
        %499 = sbr.rel (%p496) target = $region64
      $region63: #{tpu_custom_call.1} parent=5 // pred_region
        %s500 = ssub.s32 %s33, 1
        %s501 = sand.u32 %s60, 1
        %s502 = scalar_lea.sflag [#allocation3], %s501
        %s503 = sand.u32 %s60, 1
        %s504 = smul.addr %s503, 8
        %s505 = scalar_lea.vmem [#allocation2], %s504
        // Predicated region
        $region65: #{tpu_custom_call.1} parent=63 // pred_check
          %p506 = pneg %p73
        $region66: #{tpu_custom_call.1} parent=63 // pred_check_branch
          %508 = sbr.rel (%p506) target = $region68
        $region67: #{tpu_custom_call.1} parent=63 // pred_region
          %509 = dma.done %s502, 128
        $region68: #{tpu_custom_call.1} parent=63 // pred_fallthru
          _
        %s510 = sand.u32 %s38, 1
        %s511 = scalar_lea.sflag [#allocation6], %s510
        %s512 = sand.u32 %s88, 1
        %s513 = smul.addr %s512, 8
        %s514 = scalar_lea.vmem [#allocation5], %s513
        // Predicated region
        $region69: #{tpu_custom_call.1} parent=63 // pred_check
          %p515 = pneg %p101
        $region70: #{tpu_custom_call.1} parent=63 // pred_check_branch
          %517 = sbr.rel (%p515) target = $region72
        $region71: #{tpu_custom_call.1} parent=63 // pred_region
          %518 = dma.done %s511, 128
        $region72: #{tpu_custom_call.1} parent=63 // pred_fallthru
          _
        %s519 = sand.u32 %s38, 1
        %s520 = scalar_lea.sflag [#allocation6], %s519
        %s521 = sand.u32 %s116, 1
        %s522 = smul.addr %s521, 8
        %s523 = scalar_lea.vmem [#allocation7], %s522
        // Predicated region
        $region73: #{tpu_custom_call.1} parent=63 // pred_check
          %p524 = pneg %p129
        $region74: #{tpu_custom_call.1} parent=63 // pred_check_branch
          %526 = sbr.rel (%p524) target = $region76
        $region75: #{tpu_custom_call.1} parent=63 // pred_region
          %527 = dma.done %s520, 128
        $region76: #{tpu_custom_call.1} parent=63 // pred_fallthru
          _
        // Predicated region
        $region77: #{tpu_custom_call.1} parent=63 // pred_check
          %p528 = pneg %p150
        $region78: #{tpu_custom_call.1} parent=63 // pred_check_branch
          %530 = sbr.rel (%p528) target = $region80
        $region79: #{tpu_custom_call.1} parent=63 // pred_region
          %531 = dma.done [#allocation9], 512
        $region80: #{tpu_custom_call.1} parent=63 // pred_fallthru
          _
        // Predicated region
        $region81: #{tpu_custom_call.1} parent=63 // pred_check
          %p532 = pneg %p192
        $region82: #{tpu_custom_call.1} parent=63 // pred_check_branch
          %534 = sbr.rel (%p532) target = $region84
        $region83: #{tpu_custom_call.1} parent=63 // pred_region
          %535 = dma.done [#allocation9], 512
        $region84: #{tpu_custom_call.1} parent=63 // pred_fallthru
          _
        // Predicated region
        $region85: #{tpu_custom_call.1} parent=63 // pred_check
          %p536 = pneg %p234
        $region86: #{tpu_custom_call.1} parent=63 // pred_check_branch
          %538 = sbr.rel (%p536) target = $region88
        $region87: #{tpu_custom_call.1} parent=63 // pred_region
          %539 = dma.done [#allocation12], 512
        $region88: #{tpu_custom_call.1} parent=63 // pred_fallthru
          _
        // Predicated region
        $region89: #{tpu_custom_call.1} parent=63 // pred_check
          %p540 = pneg %p276
        $region90: #{tpu_custom_call.1} parent=63 // pred_check_branch
          %542 = sbr.rel (%p540) target = $region92
        $region91: #{tpu_custom_call.1} parent=63 // pred_region
          %543 = dma.done [#allocation12], 512
        $region92: #{tpu_custom_call.1} parent=63 // pred_fallthru
          _
        %s544 = sand.u32 %s60, 1
        %s545 = scalar_lea.sflag [#allocation3], %s544
        %s546 = sand.u32 %s60, 1
        %s547 = smul.addr %s546, 8
        %s548 = scalar_lea.vmem [#allocation2], %s547
        %p549 = pneg %p73
        %p550 = pneg %p70
        %s551 = sand.u32 %s38, 1
        %s552 = scalar_lea.sflag [#allocation6], %s551
        %s553 = sand.u32 %s88, 1
        %s554 = smul.addr %s553, 8
        %s555 = scalar_lea.vmem [#allocation5], %s554
        %p556 = pneg %p101
        %p557 = pneg %p98
        %s558 = sand.u32 %s38, 1
        %s559 = scalar_lea.sflag [#allocation6], %s558
        %s560 = sand.u32 %s116, 1
        %s561 = smul.addr %s560, 8
        %s562 = scalar_lea.vmem [#allocation7], %s561
        %p563 = pneg %p129
        %p564 = pneg %p126
        %p565 = pneg %p150
        %p566 = pneg %p147
        %p567 = pneg %p171
        %p568 = pneg %p168
        %p569 = pneg %p192
        %p570 = pneg %p189
        %p571 = pneg %p213
        %p572 = pneg %p210
        %p573 = pneg %p234
        %p574 = pneg %p231
        %p575 = pneg %p255
        %p576 = pneg %p252
        %p577 = pneg %p276
        %p578 = pneg %p273
        %p579 = pneg %p297
        %p580 = pneg %p294
        %p581 = pneg %p325
        %p582 = pneg %p322
        %s583 = sand.u32 %s312, 1
        %s584 = scalar_lea.sflag [#allocation4], %s583
        %s585 = sand.u32 %s312, 1
        %s586 = smul.addr %s585, 8
        %s587 = scalar_lea.vmem [#allocation14], %s586
        %p588 = pneg %p351
        %p589 = pneg %p348
        %s590 = sand.u32 %s338, 1
        %s591 = scalar_lea.sflag [#allocation16], %s590
        %s592 = sand.u32 %s338, 1
        %s593 = smul.addr %s592, 32
        %s594 = scalar_lea.vmem [#allocation15], %s593
        %p595 = scmp.eq.s32.totalorder %s43, 1
        %v596 = vld [vmem:[#allocation8] sm:$0xff]
        %v597 = vld [vmem:[#allocation8 + $0x8] sm:$0xff]
        %v598 = vld [vmem:[#allocation8 + $0x10] sm:$0xff]
        %v599 = vld [vmem:[#allocation8 + $0x18] sm:$0xff]
        %v600 = vld [vmem:[#allocation10] sm:$0xff]
        %v601 = vld [vmem:[#allocation10 + $0x8] sm:$0xff]
        %v602 = vld [vmem:[#allocation10 + $0x10] sm:$0xff]
        %v603 = vld [vmem:[#allocation10 + $0x18] sm:$0xff]
        %v604 = vld [vmem:[#allocation11] sm:$0xff]
        %v605 = vld [vmem:[#allocation11 + $0x8] sm:$0xff]
        %v606 = vld [vmem:[#allocation11 + $0x10] sm:$0xff]
        %v607 = vld [vmem:[#allocation11 + $0x18] sm:$0xff]
        %v608 = vld [vmem:[#allocation13] sm:$0xff]
        %v609 = vld [vmem:[#allocation13 + $0x8] sm:$0xff]
        %v610 = vld [vmem:[#allocation13 + $0x10] sm:$0xff]
        %v611 = vld [vmem:[#allocation13 + $0x18] sm:$0xff]
        %v612 = vld [vmem:[%s4] sm:$0x1]
        %v613 = vld [vmem:[%s6] sm:$0x1]
        %v614 = vld [vmem:[%s8] sm:$0x1]
        %v615 = vld [vmem:[%s10] sm:$0x1]
        %v616 = vld [vmem:[%s505] sm:$0xff]
        %v617 = vld [vmem:[%s514] sm:$0xff]
        %v618 = vld [vmem:[%s523] sm:$0xff]
        %v620 = vlaneseq
        %v621 = vshrl.u32 %v620, 7
        %v622 = vsub.s32 0, %v621
        %v623 = vrot.slane %v612, %v622
        %vm625 = vcmask 261120
        %v627 = vsel %vm625, %v616, 0
        %629 = vmatprep.subr.mxu0 0.0
        %630 = vmatpush1.msra.mxu0 0.0
        %631 = vmatprep.subr.mxu0 0.0
        %632 = vmatpush1.msra.mxu0 0.0
        %633 = vmatprep.subr.mxu0 0.0
        %634 = vmatpush1.msra.mxu0 0.0
        %635 = vmatprep.subr.mxu0 0.0
        %636 = vmatpush1.msra.mxu0 0.0
        %637 = vmatprep.subr.mxu0 0.0
        %638 = vmatpush1.msra.mxu0 0.0
        %639 = vmatprep.subr.mxu0 0.0
        %640 = vmatpush1.msra.mxu0 0.0
        %641 = vmatprep.subr.mxu0 0.0
        %642 = vmatpush1.msra.mxu0 0.0
        %643 = vmatprep.subr.mxu0 0.0
        %644 = vmatpush1.msra.mxu0 0.0
        %645 = vmatprep.subr.mxu0 0.0
        %646 = vmatpush1.msra.mxu0 0.0
        %647 = vmatprep.subr.mxu0 0.0
        %648 = vmatpush1.msra.mxu0 0.0
        %649 = vmatprep.subr.mxu0 0.0
        %650 = vmatpush1.msra.mxu0 0.0
        %651 = vmatprep.subr.mxu0 0.0
        %652 = vmatpush1.msra.mxu0 0.0
        %653 = vmatprep.subr.mxu0 0.0
        %654 = vmatpush1.msra.mxu0 %v599
        %655 = vmatprep.subr.mxu0 0.0
        %656 = vmatpush1.msra.mxu0 %v598
        %657 = vmatprep.subr.mxu0 0.0
        %658 = vmatpush1.msra.mxu0 %v597
        %659 = vmatprep.subr.mxu0 0.0
        %660 = vmatpush1.msra.mxu0 %v596
        %661 = vmatprep.subr.mxu0 0.0
        %662 = vmatpush2.msra.mxu0 0.0
        %663 = vmatprep.subr.mxu0 0.0
        %664 = vmatpush2.msra.mxu0 0.0
        %665 = vmatprep.subr.mxu0 0.0
        %666 = vmatpush2.msra.mxu0 0.0
        %667 = vmatprep.subr.mxu0 0.0
        %668 = vmatpush2.msra.mxu0 0.0
        %669 = vmatprep.subr.mxu0 0.0
        %670 = vmatpush2.msra.mxu0 0.0
        %671 = vmatprep.subr.mxu0 0.0
        %672 = vmatpush2.msra.mxu0 0.0
        %673 = vmatprep.subr.mxu0 0.0
        %674 = vmatpush2.msra.mxu0 0.0
        %675 = vmatprep.subr.mxu0 0.0
        %676 = vmatpush2.msra.mxu0 0.0
        %677 = vmatprep.subr.mxu0 0.0
        %678 = vmatpush2.msra.mxu0 0.0
        %679 = vmatprep.subr.mxu0 0.0
        %680 = vmatpush2.msra.mxu0 0.0
        %681 = vmatprep.subr.mxu0 0.0
        %682 = vmatpush2.msra.mxu0 0.0
        %683 = vmatprep.subr.mxu0 0.0
        %684 = vmatpush2.msra.mxu0 0.0
        %685 = vmatprep.subr.mxu0 0.0
        %686 = vmatpush2.msra.mxu0 0.0
        %687 = vmatprep.subr.mxu0 0.0
        %688 = vmatpush2.msra.mxu0 0.0
        %689 = vmatprep.subr.mxu0 0.0
        %690 = vmatpush2.msra.mxu0 0.0
        %691 = vmatprep.subr.mxu0 0.0
        %692 = vmatpush2.msra.mxu0 0.0
        %693 = vmatprep.mubr.f32.mxu0 0.0
        %694 = vmatmul.mubr.f32.gmra.mxu0 %v627
        %v695 = vpop.f32.mrf.mxu0
        %v696 = vadd.f32 %v623, %v695
        %v697 = vpop.f32.mrf.mxu0
        %698 = vdwg.mxu0
        %v699 = vmul.f32 %v696, 0.35355338
        %v701 = vlaneseq
        %v702 = vshrl.u32 %v701, 7
        %v703 = vsub.s32 0, %v702
        %v704 = vrot.slane %v613, %v703
        %v707 = vsel %vm625, %v617, 0
        %709 = vmatprep.subr.mxu0 0.0
        %710 = vmatpush1.msra.mxu0 0.0
        %711 = vmatprep.subr.mxu0 0.0
        %712 = vmatpush1.msra.mxu0 0.0
        %713 = vmatprep.subr.mxu0 0.0
        %714 = vmatpush1.msra.mxu0 0.0
        %715 = vmatprep.subr.mxu0 0.0
        %716 = vmatpush1.msra.mxu0 0.0
        %717 = vmatprep.subr.mxu0 0.0
        %718 = vmatpush1.msra.mxu0 0.0
        %719 = vmatprep.subr.mxu0 0.0
        %720 = vmatpush1.msra.mxu0 0.0
        %721 = vmatprep.subr.mxu0 0.0
        %722 = vmatpush1.msra.mxu0 0.0
        %723 = vmatprep.subr.mxu0 0.0
        %724 = vmatpush1.msra.mxu0 0.0
        %725 = vmatprep.subr.mxu0 0.0
        %726 = vmatpush1.msra.mxu0 0.0
        %727 = vmatprep.subr.mxu0 0.0
        %728 = vmatpush1.msra.mxu0 0.0
        %729 = vmatprep.subr.mxu0 0.0
        %730 = vmatpush1.msra.mxu0 0.0
        %731 = vmatprep.subr.mxu0 0.0
        %732 = vmatpush1.msra.mxu0 0.0
        %733 = vmatprep.subr.mxu0 0.0
        %734 = vmatpush1.msra.mxu0 %v603
        %735 = vmatprep.subr.mxu0 0.0
        %736 = vmatpush1.msra.mxu0 %v602
        %737 = vmatprep.subr.mxu0 0.0
        %738 = vmatpush1.msra.mxu0 %v601
        %739 = vmatprep.subr.mxu0 0.0
        %740 = vmatpush1.msra.mxu0 %v600
        %741 = vmatprep.subr.mxu0 0.0
        %742 = vmatpush2.msra.mxu0 0.0
        %743 = vmatprep.subr.mxu0 0.0
        %744 = vmatpush2.msra.mxu0 0.0
        %745 = vmatprep.subr.mxu0 0.0
        %746 = vmatpush2.msra.mxu0 0.0
        %747 = vmatprep.subr.mxu0 0.0
        %748 = vmatpush2.msra.mxu0 0.0
        %749 = vmatprep.subr.mxu0 0.0
        %750 = vmatpush2.msra.mxu0 0.0
        %751 = vmatprep.subr.mxu0 0.0
        %752 = vmatpush2.msra.mxu0 0.0
        %753 = vmatprep.subr.mxu0 0.0
        %754 = vmatpush2.msra.mxu0 0.0
        %755 = vmatprep.subr.mxu0 0.0
        %756 = vmatpush2.msra.mxu0 0.0
        %757 = vmatprep.subr.mxu0 0.0
        %758 = vmatpush2.msra.mxu0 0.0
        %759 = vmatprep.subr.mxu0 0.0
        %760 = vmatpush2.msra.mxu0 0.0
        %761 = vmatprep.subr.mxu0 0.0
        %762 = vmatpush2.msra.mxu0 0.0
        %763 = vmatprep.subr.mxu0 0.0
        %764 = vmatpush2.msra.mxu0 0.0
        %765 = vmatprep.subr.mxu0 0.0
        %766 = vmatpush2.msra.mxu0 0.0
        %767 = vmatprep.subr.mxu0 0.0
        %768 = vmatpush2.msra.mxu0 0.0
        %769 = vmatprep.subr.mxu0 0.0
        %770 = vmatpush2.msra.mxu0 0.0
        %771 = vmatprep.subr.mxu0 0.0
        %772 = vmatpush2.msra.mxu0 0.0
        %773 = vmatprep.mubr.f32.mxu0 0.0
        %774 = vmatmul.mubr.f32.gmra.mxu0 %v707
        %v775 = vpop.f32.mrf.mxu0
        %v776 = vadd.f32 %v704, %v775
        %v777 = vpop.f32.mrf.mxu0
        %778 = vdwg.mxu0
        %v780 = vlaneseq
        %v781 = vshrl.u32 %v780, 7
        %v782 = vsub.s32 0, %v781
        %v783 = vrot.slane %v614, %v782
        %v786 = vsel %vm625, %v618, 0
        %788 = vmatprep.subr.mxu0 0.0
        %789 = vmatpush1.msra.mxu0 0.0
        %790 = vmatprep.subr.mxu0 0.0
        %791 = vmatpush1.msra.mxu0 0.0
        %792 = vmatprep.subr.mxu0 0.0
        %793 = vmatpush1.msra.mxu0 0.0
        %794 = vmatprep.subr.mxu0 0.0
        %795 = vmatpush1.msra.mxu0 0.0
        %796 = vmatprep.subr.mxu0 0.0
        %797 = vmatpush1.msra.mxu0 0.0
        %798 = vmatprep.subr.mxu0 0.0
        %799 = vmatpush1.msra.mxu0 0.0
        %800 = vmatprep.subr.mxu0 0.0
        %801 = vmatpush1.msra.mxu0 0.0
        %802 = vmatprep.subr.mxu0 0.0
        %803 = vmatpush1.msra.mxu0 0.0
        %804 = vmatprep.subr.mxu0 0.0
        %805 = vmatpush1.msra.mxu0 0.0
        %806 = vmatprep.subr.mxu0 0.0
        %807 = vmatpush1.msra.mxu0 0.0
        %808 = vmatprep.subr.mxu0 0.0
        %809 = vmatpush1.msra.mxu0 0.0
        %810 = vmatprep.subr.mxu0 0.0
        %811 = vmatpush1.msra.mxu0 0.0
        %812 = vmatprep.subr.mxu0 0.0
        %813 = vmatpush1.msra.mxu0 %v607
        %814 = vmatprep.subr.mxu0 0.0
        %815 = vmatpush1.msra.mxu0 %v606
        %816 = vmatprep.subr.mxu0 0.0
        %817 = vmatpush1.msra.mxu0 %v605
        %818 = vmatprep.subr.mxu0 0.0
        %819 = vmatpush1.msra.mxu0 %v604
        %820 = vmatprep.subr.mxu0 0.0
        %821 = vmatpush2.msra.mxu0 0.0
        %822 = vmatprep.subr.mxu0 0.0
        %823 = vmatpush2.msra.mxu0 0.0
        %824 = vmatprep.subr.mxu0 0.0
        %825 = vmatpush2.msra.mxu0 0.0
        %826 = vmatprep.subr.mxu0 0.0
        %827 = vmatpush2.msra.mxu0 0.0
        %828 = vmatprep.subr.mxu0 0.0
        %829 = vmatpush2.msra.mxu0 0.0
        %830 = vmatprep.subr.mxu0 0.0
        %831 = vmatpush2.msra.mxu0 0.0
        %832 = vmatprep.subr.mxu0 0.0
        %833 = vmatpush2.msra.mxu0 0.0
        %834 = vmatprep.subr.mxu0 0.0
        %835 = vmatpush2.msra.mxu0 0.0
        %836 = vmatprep.subr.mxu0 0.0
        %837 = vmatpush2.msra.mxu0 0.0
        %838 = vmatprep.subr.mxu0 0.0
        %839 = vmatpush2.msra.mxu0 0.0
        %840 = vmatprep.subr.mxu0 0.0
        %841 = vmatpush2.msra.mxu0 0.0
        %842 = vmatprep.subr.mxu0 0.0
        %843 = vmatpush2.msra.mxu0 0.0
        %844 = vmatprep.subr.mxu0 0.0
        %845 = vmatpush2.msra.mxu0 0.0
        %846 = vmatprep.subr.mxu0 0.0
        %847 = vmatpush2.msra.mxu0 0.0
        %848 = vmatprep.subr.mxu0 0.0
        %849 = vmatpush2.msra.mxu0 0.0
        %850 = vmatprep.subr.mxu0 0.0
        %851 = vmatpush2.msra.mxu0 0.0
        %852 = vmatprep.mubr.f32.mxu0 0.0
        %853 = vmatmul.mubr.f32.gmra.mxu0 %v786
        %v854 = vpop.f32.mrf.mxu0
        %v855 = vadd.f32 %v783, %v854
        %v856 = vpop.f32.mrf.mxu0
        %857 = vdwg.mxu0
        %859 = vrot.lane.b32.xlu0 %v699, 120
        %v860 = vpop.permute.xlu0 %859
        %861 = vrot.lane.b32.xlu0 %v699, 112
        %v862 = vpop.permute.xlu0 %861
        %863 = vrot.lane.b32.xlu0 %v699, 104
        %v864 = vpop.permute.xlu0 %863
        %866 = vrot.lane.b32.xlu0 %v776, 120
        %v867 = vpop.permute.xlu0 %866
        %868 = vrot.lane.b32.xlu0 %v776, 112
        %v869 = vpop.permute.xlu0 %868
        %870 = vrot.lane.b32.xlu0 %v776, 104
        %v871 = vpop.permute.xlu0 %870
        %873 = vrot.lane.b32.xlu0 %v855, 120
        %v874 = vpop.permute.xlu0 %873
        %876 = vrot.lane.b32.xlu0 %v855, 112
        %v877 = vpop.permute.xlu0 %876
        %879 = vrot.lane.b32.xlu0 %v855, 104
        %v880 = vpop.permute.xlu0 %879
        %vm882 = vcmask 64512
        %v883 = vsel %vm882, %v699, 0
        %v885 = vsel %vm882, %v776, 0
        %887 = vmatprep.subr.mxu0 0.0
        %888 = vmatpush1.xpose.msra.mxu0 0.0
        %889 = vmatprep.subr.mxu0 0.0
        %890 = vmatpush1.xpose.msra.mxu0 0.0
        %891 = vmatprep.subr.mxu0 0.0
        %892 = vmatpush1.xpose.msra.mxu0 0.0
        %893 = vmatprep.subr.mxu0 0.0
        %894 = vmatpush1.xpose.msra.mxu0 0.0
        %895 = vmatprep.subr.mxu0 0.0
        %896 = vmatpush1.xpose.msra.mxu0 0.0
        %897 = vmatprep.subr.mxu0 0.0
        %898 = vmatpush1.xpose.msra.mxu0 0.0
        %899 = vmatprep.subr.mxu0 0.0
        %900 = vmatpush1.xpose.msra.mxu0 0.0
        %901 = vmatprep.subr.mxu0 0.0
        %902 = vmatpush1.xpose.msra.mxu0 0.0
        %903 = vmatprep.subr.mxu0 0.0
        %904 = vmatpush1.xpose.msra.mxu0 0.0
        %905 = vmatprep.subr.mxu0 0.0
        %906 = vmatpush1.xpose.msra.mxu0 0.0
        %907 = vmatprep.subr.mxu0 0.0
        %908 = vmatpush1.xpose.msra.mxu0 0.0
        %909 = vmatprep.subr.mxu0 0.0
        %910 = vmatpush1.xpose.msra.mxu0 0.0
        %911 = vmatprep.subr.mxu0 0.0
        %912 = vmatpush1.xpose.msra.mxu0 0.0
        %913 = vmatprep.subr.mxu0 0.0
        %914 = vmatpush1.xpose.msra.mxu0 0.0
        %915 = vmatprep.subr.mxu0 0.0
        %916 = vmatpush1.xpose.msra.mxu0 0.0
        %917 = vmatprep.subr.mxu0 0.0
        %918 = vmatpush1.xpose.msra.mxu0 %v885
        %919 = vmatprep.subr.mxu0 0.0
        %920 = vmatpush2.xpose.msra.mxu0 0.0
        %921 = vmatprep.subr.mxu0 0.0
        %922 = vmatpush2.xpose.msra.mxu0 0.0
        %923 = vmatprep.subr.mxu0 0.0
        %924 = vmatpush2.xpose.msra.mxu0 0.0
        %925 = vmatprep.subr.mxu0 0.0
        %926 = vmatpush2.xpose.msra.mxu0 0.0
        %927 = vmatprep.subr.mxu0 0.0
        %928 = vmatpush2.xpose.msra.mxu0 0.0
        %929 = vmatprep.subr.mxu0 0.0
        %930 = vmatpush2.xpose.msra.mxu0 0.0
        %931 = vmatprep.subr.mxu0 0.0
        %932 = vmatpush2.xpose.msra.mxu0 0.0
        %933 = vmatprep.subr.mxu0 0.0
        %934 = vmatpush2.xpose.msra.mxu0 0.0
        %935 = vmatprep.subr.mxu0 0.0
        %936 = vmatpush2.xpose.msra.mxu0 0.0
        %937 = vmatprep.subr.mxu0 0.0
        %938 = vmatpush2.xpose.msra.mxu0 0.0
        %939 = vmatprep.subr.mxu0 0.0
        %940 = vmatpush2.xpose.msra.mxu0 0.0
        %941 = vmatprep.subr.mxu0 0.0
        %942 = vmatpush2.xpose.msra.mxu0 0.0
        %943 = vmatprep.subr.mxu0 0.0
        %944 = vmatpush2.xpose.msra.mxu0 0.0
        %945 = vmatprep.subr.mxu0 0.0
        %946 = vmatpush2.xpose.msra.mxu0 0.0
        %947 = vmatprep.subr.mxu0 0.0
        %948 = vmatpush2.xpose.msra.mxu0 0.0
        %949 = vmatprep.subr.mxu0 0.0
        %950 = vmatpush2.xpose.msra.mxu0 0.0
        %951 = vmatprep.mubr.f32.mxu0 0.0
        %952 = vmatmul.mubr.f32.gmra.mxu0 %v883
        %v953 = vpop.f32.mrf.mxu0
        %v954 = vadd.f32 0.0, %v953
        %v955 = vpop.f32.mrf.mxu0
        %956 = vdwg.mxu0
        %v957 = vsel %vm882, %v860, 0
        %v959 = vsel %vm882, %v867, 0
        %961 = vmatprep.subr.mxu0 0.0
        %962 = vmatpush1.xpose.msra.mxu0 0.0
        %963 = vmatprep.subr.mxu0 0.0
        %964 = vmatpush1.xpose.msra.mxu0 0.0
        %965 = vmatprep.subr.mxu0 0.0
        %966 = vmatpush1.xpose.msra.mxu0 0.0
        %967 = vmatprep.subr.mxu0 0.0
        %968 = vmatpush1.xpose.msra.mxu0 0.0
        %969 = vmatprep.subr.mxu0 0.0
        %970 = vmatpush1.xpose.msra.mxu0 0.0
        %971 = vmatprep.subr.mxu0 0.0
        %972 = vmatpush1.xpose.msra.mxu0 0.0
        %973 = vmatprep.subr.mxu0 0.0
        %974 = vmatpush1.xpose.msra.mxu0 0.0
        %975 = vmatprep.subr.mxu0 0.0
        %976 = vmatpush1.xpose.msra.mxu0 0.0
        %977 = vmatprep.subr.mxu0 0.0
        %978 = vmatpush1.xpose.msra.mxu0 0.0
        %979 = vmatprep.subr.mxu0 0.0
        %980 = vmatpush1.xpose.msra.mxu0 0.0
        %981 = vmatprep.subr.mxu0 0.0
        %982 = vmatpush1.xpose.msra.mxu0 0.0
        %983 = vmatprep.subr.mxu0 0.0
        %984 = vmatpush1.xpose.msra.mxu0 0.0
        %985 = vmatprep.subr.mxu0 0.0
        %986 = vmatpush1.xpose.msra.mxu0 0.0
        %987 = vmatprep.subr.mxu0 0.0
        %988 = vmatpush1.xpose.msra.mxu0 0.0
        %989 = vmatprep.subr.mxu0 0.0
        %990 = vmatpush1.xpose.msra.mxu0 0.0
        %991 = vmatprep.subr.mxu0 0.0
        %992 = vmatpush1.xpose.msra.mxu0 %v959
        %993 = vmatprep.subr.mxu0 0.0
        %994 = vmatpush2.xpose.msra.mxu0 0.0
        %995 = vmatprep.subr.mxu0 0.0
        %996 = vmatpush2.xpose.msra.mxu0 0.0
        %997 = vmatprep.subr.mxu0 0.0
        %998 = vmatpush2.xpose.msra.mxu0 0.0
        %999 = vmatprep.subr.mxu0 0.0
        %1000 = vmatpush2.xpose.msra.mxu0 0.0
        %1001 = vmatprep.subr.mxu0 0.0
        %1002 = vmatpush2.xpose.msra.mxu0 0.0
        %1003 = vmatprep.subr.mxu0 0.0
        %1004 = vmatpush2.xpose.msra.mxu0 0.0
        %1005 = vmatprep.subr.mxu0 0.0
        %1006 = vmatpush2.xpose.msra.mxu0 0.0
        %1007 = vmatprep.subr.mxu0 0.0
        %1008 = vmatpush2.xpose.msra.mxu0 0.0
        %1009 = vmatprep.subr.mxu0 0.0
        %1010 = vmatpush2.xpose.msra.mxu0 0.0
        %1011 = vmatprep.subr.mxu0 0.0
        %1012 = vmatpush2.xpose.msra.mxu0 0.0
        %1013 = vmatprep.subr.mxu0 0.0
        %1014 = vmatpush2.xpose.msra.mxu0 0.0
        %1015 = vmatprep.subr.mxu0 0.0
        %1016 = vmatpush2.xpose.msra.mxu0 0.0
        %1017 = vmatprep.subr.mxu0 0.0
        %1018 = vmatpush2.xpose.msra.mxu0 0.0
        %1019 = vmatprep.subr.mxu0 0.0
        %1020 = vmatpush2.xpose.msra.mxu0 0.0
        %1021 = vmatprep.subr.mxu0 0.0
        %1022 = vmatpush2.xpose.msra.mxu0 0.0
        %1023 = vmatprep.subr.mxu0 0.0
        %1024 = vmatpush2.xpose.msra.mxu0 0.0
        %1025 = vmatprep.mubr.f32.mxu0 0.0
        %1026 = vmatmul.mubr.f32.gmra.mxu0 %v957
        %v1027 = vpop.f32.mrf.mxu0
        %v1028 = vadd.f32 0.0, %v1027
        %v1029 = vpop.f32.mrf.mxu0
        %1030 = vdwg.mxu0
        %v1031 = vsel %vm882, %v862, 0
        %v1033 = vsel %vm882, %v869, 0
        %1035 = vmatprep.subr.mxu0 0.0
        %1036 = vmatpush1.xpose.msra.mxu0 0.0
        %1037 = vmatprep.subr.mxu0 0.0
        %1038 = vmatpush1.xpose.msra.mxu0 0.0
        %1039 = vmatprep.subr.mxu0 0.0
        %1040 = vmatpush1.xpose.msra.mxu0 0.0
        %1041 = vmatprep.subr.mxu0 0.0
        %1042 = vmatpush1.xpose.msra.mxu0 0.0
        %1043 = vmatprep.subr.mxu0 0.0
        %1044 = vmatpush1.xpose.msra.mxu0 0.0
        %1045 = vmatprep.subr.mxu0 0.0
        %1046 = vmatpush1.xpose.msra.mxu0 0.0
        %1047 = vmatprep.subr.mxu0 0.0
        %1048 = vmatpush1.xpose.msra.mxu0 0.0
        %1049 = vmatprep.subr.mxu0 0.0
        %1050 = vmatpush1.xpose.msra.mxu0 0.0
        %1051 = vmatprep.subr.mxu0 0.0
        %1052 = vmatpush1.xpose.msra.mxu0 0.0
        %1053 = vmatprep.subr.mxu0 0.0
        %1054 = vmatpush1.xpose.msra.mxu0 0.0
        %1055 = vmatprep.subr.mxu0 0.0
        %1056 = vmatpush1.xpose.msra.mxu0 0.0
        %1057 = vmatprep.subr.mxu0 0.0
        %1058 = vmatpush1.xpose.msra.mxu0 0.0
        %1059 = vmatprep.subr.mxu0 0.0
        %1060 = vmatpush1.xpose.msra.mxu0 0.0
        %1061 = vmatprep.subr.mxu0 0.0
        %1062 = vmatpush1.xpose.msra.mxu0 0.0
        %1063 = vmatprep.subr.mxu0 0.0
        %1064 = vmatpush1.xpose.msra.mxu0 0.0
        %1065 = vmatprep.subr.mxu0 0.0
        %1066 = vmatpush1.xpose.msra.mxu0 %v1033
        %1067 = vmatprep.subr.mxu0 0.0
        %1068 = vmatpush2.xpose.msra.mxu0 0.0
        %1069 = vmatprep.subr.mxu0 0.0
        %1070 = vmatpush2.xpose.msra.mxu0 0.0
        %1071 = vmatprep.subr.mxu0 0.0
        %1072 = vmatpush2.xpose.msra.mxu0 0.0
        %1073 = vmatprep.subr.mxu0 0.0
        %1074 = vmatpush2.xpose.msra.mxu0 0.0
        %1075 = vmatprep.subr.mxu0 0.0
        %1076 = vmatpush2.xpose.msra.mxu0 0.0
        %1077 = vmatprep.subr.mxu0 0.0
        %1078 = vmatpush2.xpose.msra.mxu0 0.0
        %1079 = vmatprep.subr.mxu0 0.0
        %1080 = vmatpush2.xpose.msra.mxu0 0.0
        %1081 = vmatprep.subr.mxu0 0.0
        %1082 = vmatpush2.xpose.msra.mxu0 0.0
        %1083 = vmatprep.subr.mxu0 0.0
        %1084 = vmatpush2.xpose.msra.mxu0 0.0
        %1085 = vmatprep.subr.mxu0 0.0
        %1086 = vmatpush2.xpose.msra.mxu0 0.0
        %1087 = vmatprep.subr.mxu0 0.0
        %1088 = vmatpush2.xpose.msra.mxu0 0.0
        %1089 = vmatprep.subr.mxu0 0.0
        %1090 = vmatpush2.xpose.msra.mxu0 0.0
        %1091 = vmatprep.subr.mxu0 0.0
        %1092 = vmatpush2.xpose.msra.mxu0 0.0
        %1093 = vmatprep.subr.mxu0 0.0
        %1094 = vmatpush2.xpose.msra.mxu0 0.0
        %1095 = vmatprep.subr.mxu0 0.0
        %1096 = vmatpush2.xpose.msra.mxu0 0.0
        %1097 = vmatprep.subr.mxu0 0.0
        %1098 = vmatpush2.xpose.msra.mxu0 0.0
        %1099 = vmatprep.mubr.f32.mxu0 0.0
        %1100 = vmatmul.mubr.f32.gmra.mxu0 %v1031
        %v1101 = vpop.f32.mrf.mxu0
        %v1102 = vadd.f32 0.0, %v1101
        %v1103 = vpop.f32.mrf.mxu0
        %1104 = vdwg.mxu0
        %v1105 = vsel %vm882, %v864, 0
        %v1107 = vsel %vm882, %v871, 0
        %1109 = vmatprep.subr.mxu0 0.0
        %1110 = vmatpush1.xpose.msra.mxu0 0.0
        %1111 = vmatprep.subr.mxu0 0.0
        %1112 = vmatpush1.xpose.msra.mxu0 0.0
        %1113 = vmatprep.subr.mxu0 0.0
        %1114 = vmatpush1.xpose.msra.mxu0 0.0
        %1115 = vmatprep.subr.mxu0 0.0
        %1116 = vmatpush1.xpose.msra.mxu0 0.0
        %1117 = vmatprep.subr.mxu0 0.0
        %1118 = vmatpush1.xpose.msra.mxu0 0.0
        %1119 = vmatprep.subr.mxu0 0.0
        %1120 = vmatpush1.xpose.msra.mxu0 0.0
        %1121 = vmatprep.subr.mxu0 0.0
        %1122 = vmatpush1.xpose.msra.mxu0 0.0
        %1123 = vmatprep.subr.mxu0 0.0
        %1124 = vmatpush1.xpose.msra.mxu0 0.0
        %1125 = vmatprep.subr.mxu0 0.0
        %1126 = vmatpush1.xpose.msra.mxu0 0.0
        %1127 = vmatprep.subr.mxu0 0.0
        %1128 = vmatpush1.xpose.msra.mxu0 0.0
        %1129 = vmatprep.subr.mxu0 0.0
        %1130 = vmatpush1.xpose.msra.mxu0 0.0
        %1131 = vmatprep.subr.mxu0 0.0
        %1132 = vmatpush1.xpose.msra.mxu0 0.0
        %1133 = vmatprep.subr.mxu0 0.0
        %1134 = vmatpush1.xpose.msra.mxu0 0.0
        %1135 = vmatprep.subr.mxu0 0.0
        %1136 = vmatpush1.xpose.msra.mxu0 0.0
        %1137 = vmatprep.subr.mxu0 0.0
        %1138 = vmatpush1.xpose.msra.mxu0 0.0
        %1139 = vmatprep.subr.mxu0 0.0
        %1140 = vmatpush1.xpose.msra.mxu0 %v1107
        %1141 = vmatprep.subr.mxu0 0.0
        %1142 = vmatpush2.xpose.msra.mxu0 0.0
        %1143 = vmatprep.subr.mxu0 0.0
        %1144 = vmatpush2.xpose.msra.mxu0 0.0
        %1145 = vmatprep.subr.mxu0 0.0
        %1146 = vmatpush2.xpose.msra.mxu0 0.0
        %1147 = vmatprep.subr.mxu0 0.0
        %1148 = vmatpush2.xpose.msra.mxu0 0.0
        %1149 = vmatprep.subr.mxu0 0.0
        %1150 = vmatpush2.xpose.msra.mxu0 0.0
        %1151 = vmatprep.subr.mxu0 0.0
        %1152 = vmatpush2.xpose.msra.mxu0 0.0
        %1153 = vmatprep.subr.mxu0 0.0
        %1154 = vmatpush2.xpose.msra.mxu0 0.0
        %1155 = vmatprep.subr.mxu0 0.0
        %1156 = vmatpush2.xpose.msra.mxu0 0.0
        %1157 = vmatprep.subr.mxu0 0.0
        %1158 = vmatpush2.xpose.msra.mxu0 0.0
        %1159 = vmatprep.subr.mxu0 0.0
        %1160 = vmatpush2.xpose.msra.mxu0 0.0
        %1161 = vmatprep.subr.mxu0 0.0
        %1162 = vmatpush2.xpose.msra.mxu0 0.0
        %1163 = vmatprep.subr.mxu0 0.0
        %1164 = vmatpush2.xpose.msra.mxu0 0.0
        %1165 = vmatprep.subr.mxu0 0.0
        %1166 = vmatpush2.xpose.msra.mxu0 0.0
        %1167 = vmatprep.subr.mxu0 0.0
        %1168 = vmatpush2.xpose.msra.mxu0 0.0
        %1169 = vmatprep.subr.mxu0 0.0
        %1170 = vmatpush2.xpose.msra.mxu0 0.0
        %1171 = vmatprep.subr.mxu0 0.0
        %1172 = vmatpush2.xpose.msra.mxu0 0.0
        %1173 = vmatprep.mubr.f32.mxu0 0.0
        %1174 = vmatmul.mubr.f32.gmra.mxu0 %v1105
        %v1175 = vpop.f32.mrf.mxu0
        %v1176 = vadd.f32 0.0, %v1175
        %v1177 = vpop.f32.mrf.mxu0
        %1178 = vdwg.mxu0
        %v1179 = vsel %vm882, %v954, -inf
        %1180 = vmax.xlane.f32.xlu0 %v1179
        %v1181 = vpop.xlane.xlu0 %1180
        %v1182 = vsel %vm882, %v1028, -inf
        %1183 = vmax.xlane.f32.xlu0 %v1182
        %v1184 = vpop.xlane.xlu0 %1183
        %v1185 = vsel %vm882, %v1102, -inf
        %1186 = vmax.xlane.f32.xlu0 %v1185
        %v1187 = vpop.xlane.xlu0 %1186
        %v1188 = vsel %vm882, %v1176, -inf
        %1189 = vmax.xlane.f32.xlu0 %v1188
        %v1190 = vpop.xlane.xlu0 %1189
        %v1191 = vsub.f32 %v954, %v1181
        %v1192 = vsub.f32 %v1028, %v1184
        %v1193 = vsub.f32 %v1102, %v1187
        %v1194 = vsub.f32 %v1176, %v1190
        %v1195 = vmul.f32 %v1191, 1.442695
        %v1196 = vpow.pop %v1195
        %v1197 = vmul.f32 %v1192, 1.442695
        %v1198 = vpow.pop %v1197
        %v1199 = vmul.f32 %v1193, 1.442695
        %v1200 = vpow.pop %v1199
        %v1201 = vmul.f32 %v1194, 1.442695
        %v1202 = vpow.pop %v1201
        %v1203 = vsel %vm882, %v1196, 0.0
        %1204 = vadd.xlane.f32.xlu0 %v1203
        %v1205 = vpop.xlane.xlu0 %1204
        %v1206 = vsel %vm882, %v1198, 0.0
        %1207 = vadd.xlane.f32.xlu0 %v1206
        %v1208 = vpop.xlane.xlu0 %1207
        %v1209 = vsel %vm882, %v1200, 0.0
        %1210 = vadd.xlane.f32.xlu0 %v1209
        %v1211 = vpop.xlane.xlu0 %1210
        %v1212 = vsel %vm882, %v1202, 0.0
        %1213 = vadd.xlane.f32.xlu0 %v1212
        %v1214 = vpop.xlane.xlu0 %1213
        %v1215 = vrcp.pop %v1205
        %v1216 = vrcp.pop %v1208
        %v1217 = vrcp.pop %v1211
        %v1218 = vrcp.pop %v1214
        %v1219 = vmul.f32 %v1196, %v1215
        %v1220 = vmul.f32 %v1198, %v1216
        %v1221 = vmul.f32 %v1200, %v1217
        %v1222 = vmul.f32 %v1202, %v1218
        %v1224 = vsel %vm882, %v1219, 0
        %1226 = vmatprep.subr.mxu0 0.0
        %1227 = vmatpush1.msra.mxu0 0.0
        %1228 = vmatprep.subr.mxu0 0.0
        %1229 = vmatpush1.msra.mxu0 0.0
        %1230 = vmatprep.subr.mxu0 0.0
        %1231 = vmatpush1.msra.mxu0 0.0
        %1232 = vmatprep.subr.mxu0 0.0
        %1233 = vmatpush1.msra.mxu0 0.0
        %1234 = vmatprep.subr.mxu0 0.0
        %1235 = vmatpush1.msra.mxu0 0.0
        %1236 = vmatprep.subr.mxu0 0.0
        %1237 = vmatpush1.msra.mxu0 0.0
        %1238 = vmatprep.subr.mxu0 0.0
        %1239 = vmatpush1.msra.mxu0 0.0
        %1240 = vmatprep.subr.mxu0 0.0
        %1241 = vmatpush1.msra.mxu0 0.0
        %1242 = vmatprep.subr.mxu0 0.0
        %1243 = vmatpush1.msra.mxu0 0.0
        %1244 = vmatprep.subr.mxu0 0.0
        %1245 = vmatpush1.msra.mxu0 0.0
        %1246 = vmatprep.subr.mxu0 0.0
        %1247 = vmatpush1.msra.mxu0 0.0
        %1248 = vmatprep.subr.mxu0 0.0
        %1249 = vmatpush1.msra.mxu0 0.0
        %1250 = vmatprep.subr.mxu0 0.0
        %1251 = vmatpush1.msra.mxu0 0.0
        %1252 = vmatprep.subr.mxu0 0.0
        %1253 = vmatpush1.msra.mxu0 0.0
        %1254 = vmatprep.subr.mxu0 0.0
        %1255 = vmatpush1.msra.mxu0 0.0
        %1256 = vmatprep.subr.mxu0 0.0
        %1257 = vmatpush1.msra.mxu0 %v855
        %1258 = vmatprep.subr.mxu0 0.0
        %1259 = vmatpush2.msra.mxu0 0.0
        %1260 = vmatprep.subr.mxu0 0.0
        %1261 = vmatpush2.msra.mxu0 0.0
        %1262 = vmatprep.subr.mxu0 0.0
        %1263 = vmatpush2.msra.mxu0 0.0
        %1264 = vmatprep.subr.mxu0 0.0
        %1265 = vmatpush2.msra.mxu0 0.0
        %1266 = vmatprep.subr.mxu0 0.0
        %1267 = vmatpush2.msra.mxu0 0.0
        %1268 = vmatprep.subr.mxu0 0.0
        %1269 = vmatpush2.msra.mxu0 0.0
        %1270 = vmatprep.subr.mxu0 0.0
        %1271 = vmatpush2.msra.mxu0 0.0
        %1272 = vmatprep.subr.mxu0 0.0
        %1273 = vmatpush2.msra.mxu0 0.0
        %1274 = vmatprep.subr.mxu0 0.0
        %1275 = vmatpush2.msra.mxu0 0.0
        %1276 = vmatprep.subr.mxu0 0.0
        %1277 = vmatpush2.msra.mxu0 0.0
        %1278 = vmatprep.subr.mxu0 0.0
        %1279 = vmatpush2.msra.mxu0 0.0
        %1280 = vmatprep.subr.mxu0 0.0
        %1281 = vmatpush2.msra.mxu0 0.0
        %1282 = vmatprep.subr.mxu0 0.0
        %1283 = vmatpush2.msra.mxu0 0.0
        %1284 = vmatprep.subr.mxu0 0.0
        %1285 = vmatpush2.msra.mxu0 0.0
        %1286 = vmatprep.subr.mxu0 0.0
        %1287 = vmatpush2.msra.mxu0 0.0
        %1288 = vmatprep.subr.mxu0 0.0
        %1289 = vmatpush2.msra.mxu0 0.0
        %1290 = vmatprep.mubr.f32.mxu0 0.0
        %1291 = vmatmul.mubr.f32.gmra.mxu0 %v1224
        %v1292 = vpop.f32.mrf.mxu0
        %v1293 = vadd.f32 0.0, %v1292
        %v1294 = vpop.f32.mrf.mxu0
        %1295 = vdwg.mxu0
        %v1297 = vsel %vm882, %v1220, 0
        %1299 = vmatprep.subr.mxu0 0.0
        %1300 = vmatpush1.msra.mxu0 0.0
        %1301 = vmatprep.subr.mxu0 0.0
        %1302 = vmatpush1.msra.mxu0 0.0
        %1303 = vmatprep.subr.mxu0 0.0
        %1304 = vmatpush1.msra.mxu0 0.0
        %1305 = vmatprep.subr.mxu0 0.0
        %1306 = vmatpush1.msra.mxu0 0.0
        %1307 = vmatprep.subr.mxu0 0.0
        %1308 = vmatpush1.msra.mxu0 0.0
        %1309 = vmatprep.subr.mxu0 0.0
        %1310 = vmatpush1.msra.mxu0 0.0
        %1311 = vmatprep.subr.mxu0 0.0
        %1312 = vmatpush1.msra.mxu0 0.0
        %1313 = vmatprep.subr.mxu0 0.0
        %1314 = vmatpush1.msra.mxu0 0.0
        %1315 = vmatprep.subr.mxu0 0.0
        %1316 = vmatpush1.msra.mxu0 0.0
        %1317 = vmatprep.subr.mxu0 0.0
        %1318 = vmatpush1.msra.mxu0 0.0
        %1319 = vmatprep.subr.mxu0 0.0
        %1320 = vmatpush1.msra.mxu0 0.0
        %1321 = vmatprep.subr.mxu0 0.0
        %1322 = vmatpush1.msra.mxu0 0.0
        %1323 = vmatprep.subr.mxu0 0.0
        %1324 = vmatpush1.msra.mxu0 0.0
        %1325 = vmatprep.subr.mxu0 0.0
        %1326 = vmatpush1.msra.mxu0 0.0
        %1327 = vmatprep.subr.mxu0 0.0
        %1328 = vmatpush1.msra.mxu0 0.0
        %1329 = vmatprep.subr.mxu0 0.0
        %1330 = vmatpush1.msra.mxu0 %v874
        %1331 = vmatprep.subr.mxu0 0.0
        %1332 = vmatpush2.msra.mxu0 0.0
        %1333 = vmatprep.subr.mxu0 0.0
        %1334 = vmatpush2.msra.mxu0 0.0
        %1335 = vmatprep.subr.mxu0 0.0
        %1336 = vmatpush2.msra.mxu0 0.0
        %1337 = vmatprep.subr.mxu0 0.0
        %1338 = vmatpush2.msra.mxu0 0.0
        %1339 = vmatprep.subr.mxu0 0.0
        %1340 = vmatpush2.msra.mxu0 0.0
        %1341 = vmatprep.subr.mxu0 0.0
        %1342 = vmatpush2.msra.mxu0 0.0
        %1343 = vmatprep.subr.mxu0 0.0
        %1344 = vmatpush2.msra.mxu0 0.0
        %1345 = vmatprep.subr.mxu0 0.0
        %1346 = vmatpush2.msra.mxu0 0.0
        %1347 = vmatprep.subr.mxu0 0.0
        %1348 = vmatpush2.msra.mxu0 0.0
        %1349 = vmatprep.subr.mxu0 0.0
        %1350 = vmatpush2.msra.mxu0 0.0
        %1351 = vmatprep.subr.mxu0 0.0
        %1352 = vmatpush2.msra.mxu0 0.0
        %1353 = vmatprep.subr.mxu0 0.0
        %1354 = vmatpush2.msra.mxu0 0.0
        %1355 = vmatprep.subr.mxu0 0.0
        %1356 = vmatpush2.msra.mxu0 0.0
        %1357 = vmatprep.subr.mxu0 0.0
        %1358 = vmatpush2.msra.mxu0 0.0
        %1359 = vmatprep.subr.mxu0 0.0
        %1360 = vmatpush2.msra.mxu0 0.0
        %1361 = vmatprep.subr.mxu0 0.0
        %1362 = vmatpush2.msra.mxu0 0.0
        %1363 = vmatprep.mubr.f32.mxu0 0.0
        %1364 = vmatmul.mubr.f32.gmra.mxu0 %v1297
        %v1365 = vpop.f32.mrf.mxu0
        %v1366 = vadd.f32 0.0, %v1365
        %v1367 = vpop.f32.mrf.mxu0
        %1368 = vdwg.mxu0
        %v1370 = vsel %vm882, %v1221, 0
        %1372 = vmatprep.subr.mxu0 0.0
        %1373 = vmatpush1.msra.mxu0 0.0
        %1374 = vmatprep.subr.mxu0 0.0
        %1375 = vmatpush1.msra.mxu0 0.0
        %1376 = vmatprep.subr.mxu0 0.0
        %1377 = vmatpush1.msra.mxu0 0.0
        %1378 = vmatprep.subr.mxu0 0.0
        %1379 = vmatpush1.msra.mxu0 0.0
        %1380 = vmatprep.subr.mxu0 0.0
        %1381 = vmatpush1.msra.mxu0 0.0
        %1382 = vmatprep.subr.mxu0 0.0
        %1383 = vmatpush1.msra.mxu0 0.0
        %1384 = vmatprep.subr.mxu0 0.0
        %1385 = vmatpush1.msra.mxu0 0.0
        %1386 = vmatprep.subr.mxu0 0.0
        %1387 = vmatpush1.msra.mxu0 0.0
        %1388 = vmatprep.subr.mxu0 0.0
        %1389 = vmatpush1.msra.mxu0 0.0
        %1390 = vmatprep.subr.mxu0 0.0
        %1391 = vmatpush1.msra.mxu0 0.0
        %1392 = vmatprep.subr.mxu0 0.0
        %1393 = vmatpush1.msra.mxu0 0.0
        %1394 = vmatprep.subr.mxu0 0.0
        %1395 = vmatpush1.msra.mxu0 0.0
        %1396 = vmatprep.subr.mxu0 0.0
        %1397 = vmatpush1.msra.mxu0 0.0
        %1398 = vmatprep.subr.mxu0 0.0
        %1399 = vmatpush1.msra.mxu0 0.0
        %1400 = vmatprep.subr.mxu0 0.0
        %1401 = vmatpush1.msra.mxu0 0.0
        %1402 = vmatprep.subr.mxu0 0.0
        %1403 = vmatpush1.msra.mxu0 %v877
        %1404 = vmatprep.subr.mxu0 0.0
        %1405 = vmatpush2.msra.mxu0 0.0
        %1406 = vmatprep.subr.mxu0 0.0
        %1407 = vmatpush2.msra.mxu0 0.0
        %1408 = vmatprep.subr.mxu0 0.0
        %1409 = vmatpush2.msra.mxu0 0.0
        %1410 = vmatprep.subr.mxu0 0.0
        %1411 = vmatpush2.msra.mxu0 0.0
        %1412 = vmatprep.subr.mxu0 0.0
        %1413 = vmatpush2.msra.mxu0 0.0
        %1414 = vmatprep.subr.mxu0 0.0
        %1415 = vmatpush2.msra.mxu0 0.0
        %1416 = vmatprep.subr.mxu0 0.0
        %1417 = vmatpush2.msra.mxu0 0.0
        %1418 = vmatprep.subr.mxu0 0.0
        %1419 = vmatpush2.msra.mxu0 0.0
        %1420 = vmatprep.subr.mxu0 0.0
        %1421 = vmatpush2.msra.mxu0 0.0
        %1422 = vmatprep.subr.mxu0 0.0
        %1423 = vmatpush2.msra.mxu0 0.0
        %1424 = vmatprep.subr.mxu0 0.0
        %1425 = vmatpush2.msra.mxu0 0.0
        %1426 = vmatprep.subr.mxu0 0.0
        %1427 = vmatpush2.msra.mxu0 0.0
        %1428 = vmatprep.subr.mxu0 0.0
        %1429 = vmatpush2.msra.mxu0 0.0
        %1430 = vmatprep.subr.mxu0 0.0
        %1431 = vmatpush2.msra.mxu0 0.0
        %1432 = vmatprep.subr.mxu0 0.0
        %1433 = vmatpush2.msra.mxu0 0.0
        %1434 = vmatprep.subr.mxu0 0.0
        %1435 = vmatpush2.msra.mxu0 0.0
        %1436 = vmatprep.mubr.f32.mxu0 0.0
        %1437 = vmatmul.mubr.f32.gmra.mxu0 %v1370
        %v1438 = vpop.f32.mrf.mxu0
        %v1439 = vadd.f32 0.0, %v1438
        %v1440 = vpop.f32.mrf.mxu0
        %1441 = vdwg.mxu0
        %v1443 = vsel %vm882, %v1222, 0
        %1445 = vmatprep.subr.mxu0 0.0
        %1446 = vmatpush1.msra.mxu0 0.0
        %1447 = vmatprep.subr.mxu0 0.0
        %1448 = vmatpush1.msra.mxu0 0.0
        %1449 = vmatprep.subr.mxu0 0.0
        %1450 = vmatpush1.msra.mxu0 0.0
        %1451 = vmatprep.subr.mxu0 0.0
        %1452 = vmatpush1.msra.mxu0 0.0
        %1453 = vmatprep.subr.mxu0 0.0
        %1454 = vmatpush1.msra.mxu0 0.0
        %1455 = vmatprep.subr.mxu0 0.0
        %1456 = vmatpush1.msra.mxu0 0.0
        %1457 = vmatprep.subr.mxu0 0.0
        %1458 = vmatpush1.msra.mxu0 0.0
        %1459 = vmatprep.subr.mxu0 0.0
        %1460 = vmatpush1.msra.mxu0 0.0
        %1461 = vmatprep.subr.mxu0 0.0
        %1462 = vmatpush1.msra.mxu0 0.0
        %1463 = vmatprep.subr.mxu0 0.0
        %1464 = vmatpush1.msra.mxu0 0.0
        %1465 = vmatprep.subr.mxu0 0.0
        %1466 = vmatpush1.msra.mxu0 0.0
        %1467 = vmatprep.subr.mxu0 0.0
        %1468 = vmatpush1.msra.mxu0 0.0
        %1469 = vmatprep.subr.mxu0 0.0
        %1470 = vmatpush1.msra.mxu0 0.0
        %1471 = vmatprep.subr.mxu0 0.0
        %1472 = vmatpush1.msra.mxu0 0.0
        %1473 = vmatprep.subr.mxu0 0.0
        %1474 = vmatpush1.msra.mxu0 0.0
        %1475 = vmatprep.subr.mxu0 0.0
        %1476 = vmatpush1.msra.mxu0 %v880
        %1477 = vmatprep.subr.mxu0 0.0
        %1478 = vmatpush2.msra.mxu0 0.0
        %1479 = vmatprep.subr.mxu0 0.0
        %1480 = vmatpush2.msra.mxu0 0.0
        %1481 = vmatprep.subr.mxu0 0.0
        %1482 = vmatpush2.msra.mxu0 0.0
        %1483 = vmatprep.subr.mxu0 0.0
        %1484 = vmatpush2.msra.mxu0 0.0
        %1485 = vmatprep.subr.mxu0 0.0
        %1486 = vmatpush2.msra.mxu0 0.0
        %1487 = vmatprep.subr.mxu0 0.0
        %1488 = vmatpush2.msra.mxu0 0.0
        %1489 = vmatprep.subr.mxu0 0.0
        %1490 = vmatpush2.msra.mxu0 0.0
        %1491 = vmatprep.subr.mxu0 0.0
        %1492 = vmatpush2.msra.mxu0 0.0
        %1493 = vmatprep.subr.mxu0 0.0
        %1494 = vmatpush2.msra.mxu0 0.0
        %1495 = vmatprep.subr.mxu0 0.0
        %1496 = vmatpush2.msra.mxu0 0.0
        %1497 = vmatprep.subr.mxu0 0.0
        %1498 = vmatpush2.msra.mxu0 0.0
        %1499 = vmatprep.subr.mxu0 0.0
        %1500 = vmatpush2.msra.mxu0 0.0
        %1501 = vmatprep.subr.mxu0 0.0
        %1502 = vmatpush2.msra.mxu0 0.0
        %1503 = vmatprep.subr.mxu0 0.0
        %1504 = vmatpush2.msra.mxu0 0.0
        %1505 = vmatprep.subr.mxu0 0.0
        %1506 = vmatpush2.msra.mxu0 0.0
        %1507 = vmatprep.subr.mxu0 0.0
        %1508 = vmatpush2.msra.mxu0 0.0
        %1509 = vmatprep.mubr.f32.mxu0 0.0
        %1510 = vmatmul.mubr.f32.gmra.mxu0 %v1443
        %v1511 = vpop.f32.mrf.mxu0
        %v1512 = vadd.f32 0.0, %v1511
        %v1513 = vpop.f32.mrf.mxu0
        %1514 = vdwg.mxu0
        %1516 = vrot.lane.b32.xlu0 %v1366, 8
        %v1517 = vpop.permute.xlu0 %1516
        %1520 = vrot.lane.b32.xlu0 %v1439, 16
        %v1521 = vpop.permute.xlu0 %1520
        %1524 = vrot.lane.b32.xlu0 %v1512, 24
        %v1525 = vpop.permute.xlu0 %1524
        %v1527 = vsel %vm882, %v1293, %v1517
        %vm1528 = vcmask 130048
        %v1529 = vsel %vm1528, %v1527, %v1521
        %vm1530 = vcmask 195584
        %v1531 = vsel %vm1530, %v1529, %v1525
        %v1533 = vlaneseq
        %v1534 = vshrl.u32 %v1533, 7
        %v1535 = vsub.s32 0, %v1534
        %v1536 = vrot.slane %v615, %v1535
        %v1539 = vsel %vm625, %v1531, 0
        %1541 = vmatprep.subr.mxu0 0.0
        %1542 = vmatpush1.msra.mxu0 0.0
        %1543 = vmatprep.subr.mxu0 0.0
        %1544 = vmatpush1.msra.mxu0 0.0
        %1545 = vmatprep.subr.mxu0 0.0
        %1546 = vmatpush1.msra.mxu0 0.0
        %1547 = vmatprep.subr.mxu0 0.0
        %1548 = vmatpush1.msra.mxu0 0.0
        %1549 = vmatprep.subr.mxu0 0.0
        %1550 = vmatpush1.msra.mxu0 0.0
        %1551 = vmatprep.subr.mxu0 0.0
        %1552 = vmatpush1.msra.mxu0 0.0
        %1553 = vmatprep.subr.mxu0 0.0
        %1554 = vmatpush1.msra.mxu0 0.0
        %1555 = vmatprep.subr.mxu0 0.0
        %1556 = vmatpush1.msra.mxu0 0.0
        %1557 = vmatprep.subr.mxu0 0.0
        %1558 = vmatpush1.msra.mxu0 0.0
        %1559 = vmatprep.subr.mxu0 0.0
        %1560 = vmatpush1.msra.mxu0 0.0
        %1561 = vmatprep.subr.mxu0 0.0
        %1562 = vmatpush1.msra.mxu0 0.0
        %1563 = vmatprep.subr.mxu0 0.0
        %1564 = vmatpush1.msra.mxu0 0.0
        %1565 = vmatprep.subr.mxu0 0.0
        %1566 = vmatpush1.msra.mxu0 %v611
        %1567 = vmatprep.subr.mxu0 0.0
        %1568 = vmatpush1.msra.mxu0 %v610
        %1569 = vmatprep.subr.mxu0 0.0
        %1570 = vmatpush1.msra.mxu0 %v609
        %1571 = vmatprep.subr.mxu0 0.0
        %1572 = vmatpush1.msra.mxu0 %v608
        %1573 = vmatprep.subr.mxu0 0.0
        %1574 = vmatpush2.msra.mxu0 0.0
        %1575 = vmatprep.subr.mxu0 0.0
        %1576 = vmatpush2.msra.mxu0 0.0
        %1577 = vmatprep.subr.mxu0 0.0
        %1578 = vmatpush2.msra.mxu0 0.0
        %1579 = vmatprep.subr.mxu0 0.0
        %1580 = vmatpush2.msra.mxu0 0.0
        %1581 = vmatprep.subr.mxu0 0.0
        %1582 = vmatpush2.msra.mxu0 0.0
        %1583 = vmatprep.subr.mxu0 0.0
        %1584 = vmatpush2.msra.mxu0 0.0
        %1585 = vmatprep.subr.mxu0 0.0
        %1586 = vmatpush2.msra.mxu0 0.0
        %1587 = vmatprep.subr.mxu0 0.0
        %1588 = vmatpush2.msra.mxu0 0.0
        %1589 = vmatprep.subr.mxu0 0.0
        %1590 = vmatpush2.msra.mxu0 0.0
        %1591 = vmatprep.subr.mxu0 0.0
        %1592 = vmatpush2.msra.mxu0 0.0
        %1593 = vmatprep.subr.mxu0 0.0
        %1594 = vmatpush2.msra.mxu0 0.0
        %1595 = vmatprep.subr.mxu0 0.0
        %1596 = vmatpush2.msra.mxu0 0.0
        %1597 = vmatprep.subr.mxu0 0.0
        %1598 = vmatpush2.msra.mxu0 0.0
        %1599 = vmatprep.subr.mxu0 0.0
        %1600 = vmatpush2.msra.mxu0 0.0
        %1601 = vmatprep.subr.mxu0 0.0
        %1602 = vmatpush2.msra.mxu0 0.0
        %1603 = vmatprep.subr.mxu0 0.0
        %1604 = vmatpush2.msra.mxu0 0.0
        %1605 = vmatprep.mubr.f32.mxu0 0.0
        %1606 = vmatmul.mubr.f32.gmra.mxu0 %v1539
        %v1607 = vpop.f32.mrf.mxu0
        %v1608 = vadd.f32 %v1536, %v1607
        %v1609 = vpop.f32.mrf.mxu0
        %1610 = vdwg.mxu0
        %v1611 = vld [vmem:[%s505] sm:$0xff]
        %v1612 = vadd.f32 %v1611, %v1608
        %v1613 = vmul.f32 %v1612, 0.5
        %v1614 = vld [vmem:[%s514] sm:$0xff]
        %v1615 = vadd.f32 %v1614, %v1608
        %v1616 = vmul.f32 %v1615, 0.5
        %v1617 = vld [vmem:[%s523] sm:$0xff]
        %v1618 = vadd.f32 %v1617, %v1608
        %v1619 = vmul.f32 %v1618, 0.5
        %v1621 = vsel %vm625, %v1613, 0
        %1623 = vmatprep.subr.mxu0 0.0
        %1624 = vmatpush1.msra.mxu0 0.0
        %1625 = vmatprep.subr.mxu0 0.0
        %1626 = vmatpush1.msra.mxu0 0.0
        %1627 = vmatprep.subr.mxu0 0.0
        %1628 = vmatpush1.msra.mxu0 0.0
        %1629 = vmatprep.subr.mxu0 0.0
        %1630 = vmatpush1.msra.mxu0 0.0
        %1631 = vmatprep.subr.mxu0 0.0
        %1632 = vmatpush1.msra.mxu0 0.0
        %1633 = vmatprep.subr.mxu0 0.0
        %1634 = vmatpush1.msra.mxu0 0.0
        %1635 = vmatprep.subr.mxu0 0.0
        %1636 = vmatpush1.msra.mxu0 0.0
        %1637 = vmatprep.subr.mxu0 0.0
        %1638 = vmatpush1.msra.mxu0 0.0
        %1639 = vmatprep.subr.mxu0 0.0
        %1640 = vmatpush1.msra.mxu0 0.0
        %1641 = vmatprep.subr.mxu0 0.0
        %1642 = vmatpush1.msra.mxu0 0.0
        %1643 = vmatprep.subr.mxu0 0.0
        %1644 = vmatpush1.msra.mxu0 0.0
        %1645 = vmatprep.subr.mxu0 0.0
        %1646 = vmatpush1.msra.mxu0 0.0
        %1647 = vmatprep.subr.mxu0 0.0
        %1648 = vmatpush1.msra.mxu0 %v599
        %1649 = vmatprep.subr.mxu0 0.0
        %1650 = vmatpush1.msra.mxu0 %v598
        %1651 = vmatprep.subr.mxu0 0.0
        %1652 = vmatpush1.msra.mxu0 %v597
        %1653 = vmatprep.subr.mxu0 0.0
        %1654 = vmatpush1.msra.mxu0 %v596
        %1655 = vmatprep.subr.mxu0 0.0
        %1656 = vmatpush2.msra.mxu0 0.0
        %1657 = vmatprep.subr.mxu0 0.0
        %1658 = vmatpush2.msra.mxu0 0.0
        %1659 = vmatprep.subr.mxu0 0.0
        %1660 = vmatpush2.msra.mxu0 0.0
        %1661 = vmatprep.subr.mxu0 0.0
        %1662 = vmatpush2.msra.mxu0 0.0
        %1663 = vmatprep.subr.mxu0 0.0
        %1664 = vmatpush2.msra.mxu0 0.0
        %1665 = vmatprep.subr.mxu0 0.0
        %1666 = vmatpush2.msra.mxu0 0.0
        %1667 = vmatprep.subr.mxu0 0.0
        %1668 = vmatpush2.msra.mxu0 0.0
        %1669 = vmatprep.subr.mxu0 0.0
        %1670 = vmatpush2.msra.mxu0 0.0
        %1671 = vmatprep.subr.mxu0 0.0
        %1672 = vmatpush2.msra.mxu0 0.0
        %1673 = vmatprep.subr.mxu0 0.0
        %1674 = vmatpush2.msra.mxu0 0.0
        %1675 = vmatprep.subr.mxu0 0.0
        %1676 = vmatpush2.msra.mxu0 0.0
        %1677 = vmatprep.subr.mxu0 0.0
        %1678 = vmatpush2.msra.mxu0 0.0
        %1679 = vmatprep.subr.mxu0 0.0
        %1680 = vmatpush2.msra.mxu0 0.0
        %1681 = vmatprep.subr.mxu0 0.0
        %1682 = vmatpush2.msra.mxu0 0.0
        %1683 = vmatprep.subr.mxu0 0.0
        %1684 = vmatpush2.msra.mxu0 0.0
        %1685 = vmatprep.subr.mxu0 0.0
        %1686 = vmatpush2.msra.mxu0 0.0
        %1687 = vmatprep.mubr.f32.mxu0 0.0
        %1688 = vmatmul.mubr.f32.gmra.mxu0 %v1621
        %v1689 = vpop.f32.mrf.mxu0
        %v1690 = vadd.f32 %v623, %v1689
        %v1691 = vpop.f32.mrf.mxu0
        %1692 = vdwg.mxu0
        %v1693 = vmul.f32 %v1690, 0.35355338
        %v1695 = vsel %vm625, %v1616, 0
        %1697 = vmatprep.subr.mxu0 0.0
        %1698 = vmatpush1.msra.mxu0 0.0
        %1699 = vmatprep.subr.mxu0 0.0
        %1700 = vmatpush1.msra.mxu0 0.0
        %1701 = vmatprep.subr.mxu0 0.0
        %1702 = vmatpush1.msra.mxu0 0.0
        %1703 = vmatprep.subr.mxu0 0.0
        %1704 = vmatpush1.msra.mxu0 0.0
        %1705 = vmatprep.subr.mxu0 0.0
        %1706 = vmatpush1.msra.mxu0 0.0
        %1707 = vmatprep.subr.mxu0 0.0
        %1708 = vmatpush1.msra.mxu0 0.0
        %1709 = vmatprep.subr.mxu0 0.0
        %1710 = vmatpush1.msra.mxu0 0.0
        %1711 = vmatprep.subr.mxu0 0.0
        %1712 = vmatpush1.msra.mxu0 0.0
        %1713 = vmatprep.subr.mxu0 0.0
        %1714 = vmatpush1.msra.mxu0 0.0
        %1715 = vmatprep.subr.mxu0 0.0
        %1716 = vmatpush1.msra.mxu0 0.0
        %1717 = vmatprep.subr.mxu0 0.0
        %1718 = vmatpush1.msra.mxu0 0.0
        %1719 = vmatprep.subr.mxu0 0.0
        %1720 = vmatpush1.msra.mxu0 0.0
        %1721 = vmatprep.subr.mxu0 0.0
        %1722 = vmatpush1.msra.mxu0 %v603
        %1723 = vmatprep.subr.mxu0 0.0
        %1724 = vmatpush1.msra.mxu0 %v602
        %1725 = vmatprep.subr.mxu0 0.0
        %1726 = vmatpush1.msra.mxu0 %v601
        %1727 = vmatprep.subr.mxu0 0.0
        %1728 = vmatpush1.msra.mxu0 %v600
        %1729 = vmatprep.subr.mxu0 0.0
        %1730 = vmatpush2.msra.mxu0 0.0
        %1731 = vmatprep.subr.mxu0 0.0
        %1732 = vmatpush2.msra.mxu0 0.0
        %1733 = vmatprep.subr.mxu0 0.0
        %1734 = vmatpush2.msra.mxu0 0.0
        %1735 = vmatprep.subr.mxu0 0.0
        %1736 = vmatpush2.msra.mxu0 0.0
        %1737 = vmatprep.subr.mxu0 0.0
        %1738 = vmatpush2.msra.mxu0 0.0
        %1739 = vmatprep.subr.mxu0 0.0
        %1740 = vmatpush2.msra.mxu0 0.0
        %1741 = vmatprep.subr.mxu0 0.0
        %1742 = vmatpush2.msra.mxu0 0.0
        %1743 = vmatprep.subr.mxu0 0.0
        %1744 = vmatpush2.msra.mxu0 0.0
        %1745 = vmatprep.subr.mxu0 0.0
        %1746 = vmatpush2.msra.mxu0 0.0
        %1747 = vmatprep.subr.mxu0 0.0
        %1748 = vmatpush2.msra.mxu0 0.0
        %1749 = vmatprep.subr.mxu0 0.0
        %1750 = vmatpush2.msra.mxu0 0.0
        %1751 = vmatprep.subr.mxu0 0.0
        %1752 = vmatpush2.msra.mxu0 0.0
        %1753 = vmatprep.subr.mxu0 0.0
        %1754 = vmatpush2.msra.mxu0 0.0
        %1755 = vmatprep.subr.mxu0 0.0
        %1756 = vmatpush2.msra.mxu0 0.0
        %1757 = vmatprep.subr.mxu0 0.0
        %1758 = vmatpush2.msra.mxu0 0.0
        %1759 = vmatprep.subr.mxu0 0.0
        %1760 = vmatpush2.msra.mxu0 0.0
        %1761 = vmatprep.mubr.f32.mxu0 0.0
        %1762 = vmatmul.mubr.f32.gmra.mxu0 %v1695
        %v1763 = vpop.f32.mrf.mxu0
        %v1764 = vadd.f32 %v704, %v1763
        %v1765 = vpop.f32.mrf.mxu0
        %1766 = vdwg.mxu0
        %v1768 = vsel %vm625, %v1619, 0
        %1770 = vmatprep.subr.mxu0 0.0
        %1771 = vmatpush1.msra.mxu0 0.0
        %1772 = vmatprep.subr.mxu0 0.0
        %1773 = vmatpush1.msra.mxu0 0.0
        %1774 = vmatprep.subr.mxu0 0.0
        %1775 = vmatpush1.msra.mxu0 0.0
        %1776 = vmatprep.subr.mxu0 0.0
        %1777 = vmatpush1.msra.mxu0 0.0
        %1778 = vmatprep.subr.mxu0 0.0
        %1779 = vmatpush1.msra.mxu0 0.0
        %1780 = vmatprep.subr.mxu0 0.0
        %1781 = vmatpush1.msra.mxu0 0.0
        %1782 = vmatprep.subr.mxu0 0.0
        %1783 = vmatpush1.msra.mxu0 0.0
        %1784 = vmatprep.subr.mxu0 0.0
        %1785 = vmatpush1.msra.mxu0 0.0
        %1786 = vmatprep.subr.mxu0 0.0
        %1787 = vmatpush1.msra.mxu0 0.0
        %1788 = vmatprep.subr.mxu0 0.0
        %1789 = vmatpush1.msra.mxu0 0.0
        %1790 = vmatprep.subr.mxu0 0.0
        %1791 = vmatpush1.msra.mxu0 0.0
        %1792 = vmatprep.subr.mxu0 0.0
        %1793 = vmatpush1.msra.mxu0 0.0
        %1794 = vmatprep.subr.mxu0 0.0
        %1795 = vmatpush1.msra.mxu0 %v607
        %1796 = vmatprep.subr.mxu0 0.0
        %1797 = vmatpush1.msra.mxu0 %v606
        %1798 = vmatprep.subr.mxu0 0.0
        %1799 = vmatpush1.msra.mxu0 %v605
        %1800 = vmatprep.subr.mxu0 0.0
        %1801 = vmatpush1.msra.mxu0 %v604
        %1802 = vmatprep.subr.mxu0 0.0
        %1803 = vmatpush2.msra.mxu0 0.0
        %1804 = vmatprep.subr.mxu0 0.0
        %1805 = vmatpush2.msra.mxu0 0.0
        %1806 = vmatprep.subr.mxu0 0.0
        %1807 = vmatpush2.msra.mxu0 0.0
        %1808 = vmatprep.subr.mxu0 0.0
        %1809 = vmatpush2.msra.mxu0 0.0
        %1810 = vmatprep.subr.mxu0 0.0
        %1811 = vmatpush2.msra.mxu0 0.0
        %1812 = vmatprep.subr.mxu0 0.0
        %1813 = vmatpush2.msra.mxu0 0.0
        %1814 = vmatprep.subr.mxu0 0.0
        %1815 = vmatpush2.msra.mxu0 0.0
        %1816 = vmatprep.subr.mxu0 0.0
        %1817 = vmatpush2.msra.mxu0 0.0
        %1818 = vmatprep.subr.mxu0 0.0
        %1819 = vmatpush2.msra.mxu0 0.0
        %1820 = vmatprep.subr.mxu0 0.0
        %1821 = vmatpush2.msra.mxu0 0.0
        %1822 = vmatprep.subr.mxu0 0.0
        %1823 = vmatpush2.msra.mxu0 0.0
        %1824 = vmatprep.subr.mxu0 0.0
        %1825 = vmatpush2.msra.mxu0 0.0
        %1826 = vmatprep.subr.mxu0 0.0
        %1827 = vmatpush2.msra.mxu0 0.0
        %1828 = vmatprep.subr.mxu0 0.0
        %1829 = vmatpush2.msra.mxu0 0.0
        %1830 = vmatprep.subr.mxu0 0.0
        %1831 = vmatpush2.msra.mxu0 0.0
        %1832 = vmatprep.subr.mxu0 0.0
        %1833 = vmatpush2.msra.mxu0 0.0
        %1834 = vmatprep.mubr.f32.mxu0 0.0
        %1835 = vmatmul.mubr.f32.gmra.mxu0 %v1768
        %v1836 = vpop.f32.mrf.mxu0
        %v1837 = vadd.f32 %v783, %v1836
        %v1838 = vpop.f32.mrf.mxu0
        %1839 = vdwg.mxu0
        %1841 = vrot.lane.b32.xlu0 %v1693, 120
        %v1842 = vpop.permute.xlu0 %1841
        %1843 = vrot.lane.b32.xlu0 %v1693, 112
        %v1844 = vpop.permute.xlu0 %1843
        %1845 = vrot.lane.b32.xlu0 %v1693, 104
        %v1846 = vpop.permute.xlu0 %1845
        %1848 = vrot.lane.b32.xlu0 %v1764, 120
        %v1849 = vpop.permute.xlu0 %1848
        %1850 = vrot.lane.b32.xlu0 %v1764, 112
        %v1851 = vpop.permute.xlu0 %1850
        %1852 = vrot.lane.b32.xlu0 %v1764, 104
        %v1853 = vpop.permute.xlu0 %1852
        %1855 = vrot.lane.b32.xlu0 %v1837, 120
        %v1856 = vpop.permute.xlu0 %1855
        %1858 = vrot.lane.b32.xlu0 %v1837, 112
        %v1859 = vpop.permute.xlu0 %1858
        %1861 = vrot.lane.b32.xlu0 %v1837, 104
        %v1862 = vpop.permute.xlu0 %1861
        %v1864 = vsel %vm882, %v1693, 0
        %v1866 = vsel %vm882, %v1764, 0
        %1868 = vmatprep.subr.mxu0 0.0
        %1869 = vmatpush1.xpose.msra.mxu0 0.0
        %1870 = vmatprep.subr.mxu0 0.0
        %1871 = vmatpush1.xpose.msra.mxu0 0.0
        %1872 = vmatprep.subr.mxu0 0.0
        %1873 = vmatpush1.xpose.msra.mxu0 0.0
        %1874 = vmatprep.subr.mxu0 0.0
        %1875 = vmatpush1.xpose.msra.mxu0 0.0
        %1876 = vmatprep.subr.mxu0 0.0
        %1877 = vmatpush1.xpose.msra.mxu0 0.0
        %1878 = vmatprep.subr.mxu0 0.0
        %1879 = vmatpush1.xpose.msra.mxu0 0.0
        %1880 = vmatprep.subr.mxu0 0.0
        %1881 = vmatpush1.xpose.msra.mxu0 0.0
        %1882 = vmatprep.subr.mxu0 0.0
        %1883 = vmatpush1.xpose.msra.mxu0 0.0
        %1884 = vmatprep.subr.mxu0 0.0
        %1885 = vmatpush1.xpose.msra.mxu0 0.0
        %1886 = vmatprep.subr.mxu0 0.0
        %1887 = vmatpush1.xpose.msra.mxu0 0.0
        %1888 = vmatprep.subr.mxu0 0.0
        %1889 = vmatpush1.xpose.msra.mxu0 0.0
        %1890 = vmatprep.subr.mxu0 0.0
        %1891 = vmatpush1.xpose.msra.mxu0 0.0
        %1892 = vmatprep.subr.mxu0 0.0
        %1893 = vmatpush1.xpose.msra.mxu0 0.0
        %1894 = vmatprep.subr.mxu0 0.0
        %1895 = vmatpush1.xpose.msra.mxu0 0.0
        %1896 = vmatprep.subr.mxu0 0.0
        %1897 = vmatpush1.xpose.msra.mxu0 0.0
        %1898 = vmatprep.subr.mxu0 0.0
        %1899 = vmatpush1.xpose.msra.mxu0 %v1866
        %1900 = vmatprep.subr.mxu0 0.0
        %1901 = vmatpush2.xpose.msra.mxu0 0.0
        %1902 = vmatprep.subr.mxu0 0.0
        %1903 = vmatpush2.xpose.msra.mxu0 0.0
        %1904 = vmatprep.subr.mxu0 0.0
        %1905 = vmatpush2.xpose.msra.mxu0 0.0
        %1906 = vmatprep.subr.mxu0 0.0
        %1907 = vmatpush2.xpose.msra.mxu0 0.0
        %1908 = vmatprep.subr.mxu0 0.0
        %1909 = vmatpush2.xpose.msra.mxu0 0.0
        %1910 = vmatprep.subr.mxu0 0.0
        %1911 = vmatpush2.xpose.msra.mxu0 0.0
        %1912 = vmatprep.subr.mxu0 0.0
        %1913 = vmatpush2.xpose.msra.mxu0 0.0
        %1914 = vmatprep.subr.mxu0 0.0
        %1915 = vmatpush2.xpose.msra.mxu0 0.0
        %1916 = vmatprep.subr.mxu0 0.0
        %1917 = vmatpush2.xpose.msra.mxu0 0.0
        %1918 = vmatprep.subr.mxu0 0.0
        %1919 = vmatpush2.xpose.msra.mxu0 0.0
        %1920 = vmatprep.subr.mxu0 0.0
        %1921 = vmatpush2.xpose.msra.mxu0 0.0
        %1922 = vmatprep.subr.mxu0 0.0
        %1923 = vmatpush2.xpose.msra.mxu0 0.0
        %1924 = vmatprep.subr.mxu0 0.0
        %1925 = vmatpush2.xpose.msra.mxu0 0.0
        %1926 = vmatprep.subr.mxu0 0.0
        %1927 = vmatpush2.xpose.msra.mxu0 0.0
        %1928 = vmatprep.subr.mxu0 0.0
        %1929 = vmatpush2.xpose.msra.mxu0 0.0
        %1930 = vmatprep.subr.mxu0 0.0
        %1931 = vmatpush2.xpose.msra.mxu0 0.0
        %1932 = vmatprep.mubr.f32.mxu0 0.0
        %1933 = vmatmul.mubr.f32.gmra.mxu0 %v1864
        %v1934 = vpop.f32.mrf.mxu0
        %v1935 = vadd.f32 0.0, %v1934
        %v1936 = vpop.f32.mrf.mxu0
        %1937 = vdwg.mxu0
        %v1938 = vsel %vm882, %v1842, 0
        %v1940 = vsel %vm882, %v1849, 0
        %1942 = vmatprep.subr.mxu0 0.0
        %1943 = vmatpush1.xpose.msra.mxu0 0.0
        %1944 = vmatprep.subr.mxu0 0.0
        %1945 = vmatpush1.xpose.msra.mxu0 0.0
        %1946 = vmatprep.subr.mxu0 0.0
        %1947 = vmatpush1.xpose.msra.mxu0 0.0
        %1948 = vmatprep.subr.mxu0 0.0
        %1949 = vmatpush1.xpose.msra.mxu0 0.0
        %1950 = vmatprep.subr.mxu0 0.0
        %1951 = vmatpush1.xpose.msra.mxu0 0.0
        %1952 = vmatprep.subr.mxu0 0.0
        %1953 = vmatpush1.xpose.msra.mxu0 0.0
        %1954 = vmatprep.subr.mxu0 0.0
        %1955 = vmatpush1.xpose.msra.mxu0 0.0
        %1956 = vmatprep.subr.mxu0 0.0
        %1957 = vmatpush1.xpose.msra.mxu0 0.0
        %1958 = vmatprep.subr.mxu0 0.0
        %1959 = vmatpush1.xpose.msra.mxu0 0.0
        %1960 = vmatprep.subr.mxu0 0.0
        %1961 = vmatpush1.xpose.msra.mxu0 0.0
        %1962 = vmatprep.subr.mxu0 0.0
        %1963 = vmatpush1.xpose.msra.mxu0 0.0
        %1964 = vmatprep.subr.mxu0 0.0
        %1965 = vmatpush1.xpose.msra.mxu0 0.0
        %1966 = vmatprep.subr.mxu0 0.0
        %1967 = vmatpush1.xpose.msra.mxu0 0.0
        %1968 = vmatprep.subr.mxu0 0.0
        %1969 = vmatpush1.xpose.msra.mxu0 0.0
        %1970 = vmatprep.subr.mxu0 0.0
        %1971 = vmatpush1.xpose.msra.mxu0 0.0
        %1972 = vmatprep.subr.mxu0 0.0
        %1973 = vmatpush1.xpose.msra.mxu0 %v1940
        %1974 = vmatprep.subr.mxu0 0.0
        %1975 = vmatpush2.xpose.msra.mxu0 0.0
        %1976 = vmatprep.subr.mxu0 0.0
        %1977 = vmatpush2.xpose.msra.mxu0 0.0
        %1978 = vmatprep.subr.mxu0 0.0
        %1979 = vmatpush2.xpose.msra.mxu0 0.0
        %1980 = vmatprep.subr.mxu0 0.0
        %1981 = vmatpush2.xpose.msra.mxu0 0.0
        %1982 = vmatprep.subr.mxu0 0.0
        %1983 = vmatpush2.xpose.msra.mxu0 0.0
        %1984 = vmatprep.subr.mxu0 0.0
        %1985 = vmatpush2.xpose.msra.mxu0 0.0
        %1986 = vmatprep.subr.mxu0 0.0
        %1987 = vmatpush2.xpose.msra.mxu0 0.0
        %1988 = vmatprep.subr.mxu0 0.0
        %1989 = vmatpush2.xpose.msra.mxu0 0.0
        %1990 = vmatprep.subr.mxu0 0.0
        %1991 = vmatpush2.xpose.msra.mxu0 0.0
        %1992 = vmatprep.subr.mxu0 0.0
        %1993 = vmatpush2.xpose.msra.mxu0 0.0
        %1994 = vmatprep.subr.mxu0 0.0
        %1995 = vmatpush2.xpose.msra.mxu0 0.0
        %1996 = vmatprep.subr.mxu0 0.0
        %1997 = vmatpush2.xpose.msra.mxu0 0.0
        %1998 = vmatprep.subr.mxu0 0.0
        %1999 = vmatpush2.xpose.msra.mxu0 0.0
        %2000 = vmatprep.subr.mxu0 0.0
        %2001 = vmatpush2.xpose.msra.mxu0 0.0
        %2002 = vmatprep.subr.mxu0 0.0
        %2003 = vmatpush2.xpose.msra.mxu0 0.0
        %2004 = vmatprep.subr.mxu0 0.0
        %2005 = vmatpush2.xpose.msra.mxu0 0.0
        %2006 = vmatprep.mubr.f32.mxu0 0.0
        %2007 = vmatmul.mubr.f32.gmra.mxu0 %v1938
        %v2008 = vpop.f32.mrf.mxu0
        %v2009 = vadd.f32 0.0, %v2008
        %v2010 = vpop.f32.mrf.mxu0
        %2011 = vdwg.mxu0
        %v2012 = vsel %vm882, %v1844, 0
        %v2014 = vsel %vm882, %v1851, 0
        %2016 = vmatprep.subr.mxu0 0.0
        %2017 = vmatpush1.xpose.msra.mxu0 0.0
        %2018 = vmatprep.subr.mxu0 0.0
        %2019 = vmatpush1.xpose.msra.mxu0 0.0
        %2020 = vmatprep.subr.mxu0 0.0
        %2021 = vmatpush1.xpose.msra.mxu0 0.0
        %2022 = vmatprep.subr.mxu0 0.0
        %2023 = vmatpush1.xpose.msra.mxu0 0.0
        %2024 = vmatprep.subr.mxu0 0.0
        %2025 = vmatpush1.xpose.msra.mxu0 0.0
        %2026 = vmatprep.subr.mxu0 0.0
        %2027 = vmatpush1.xpose.msra.mxu0 0.0
        %2028 = vmatprep.subr.mxu0 0.0
        %2029 = vmatpush1.xpose.msra.mxu0 0.0
        %2030 = vmatprep.subr.mxu0 0.0
        %2031 = vmatpush1.xpose.msra.mxu0 0.0
        %2032 = vmatprep.subr.mxu0 0.0
        %2033 = vmatpush1.xpose.msra.mxu0 0.0
        %2034 = vmatprep.subr.mxu0 0.0
        %2035 = vmatpush1.xpose.msra.mxu0 0.0
        %2036 = vmatprep.subr.mxu0 0.0
        %2037 = vmatpush1.xpose.msra.mxu0 0.0
        %2038 = vmatprep.subr.mxu0 0.0
        %2039 = vmatpush1.xpose.msra.mxu0 0.0
        %2040 = vmatprep.subr.mxu0 0.0
        %2041 = vmatpush1.xpose.msra.mxu0 0.0
        %2042 = vmatprep.subr.mxu0 0.0
        %2043 = vmatpush1.xpose.msra.mxu0 0.0
        %2044 = vmatprep.subr.mxu0 0.0
        %2045 = vmatpush1.xpose.msra.mxu0 0.0
        %2046 = vmatprep.subr.mxu0 0.0
        %2047 = vmatpush1.xpose.msra.mxu0 %v2014
        %2048 = vmatprep.subr.mxu0 0.0
        %2049 = vmatpush2.xpose.msra.mxu0 0.0
        %2050 = vmatprep.subr.mxu0 0.0
        %2051 = vmatpush2.xpose.msra.mxu0 0.0
        %2052 = vmatprep.subr.mxu0 0.0
        %2053 = vmatpush2.xpose.msra.mxu0 0.0
        %2054 = vmatprep.subr.mxu0 0.0
        %2055 = vmatpush2.xpose.msra.mxu0 0.0
        %2056 = vmatprep.subr.mxu0 0.0
        %2057 = vmatpush2.xpose.msra.mxu0 0.0
        %2058 = vmatprep.subr.mxu0 0.0
        %2059 = vmatpush2.xpose.msra.mxu0 0.0
        %2060 = vmatprep.subr.mxu0 0.0
        %2061 = vmatpush2.xpose.msra.mxu0 0.0
        %2062 = vmatprep.subr.mxu0 0.0
        %2063 = vmatpush2.xpose.msra.mxu0 0.0
        %2064 = vmatprep.subr.mxu0 0.0
        %2065 = vmatpush2.xpose.msra.mxu0 0.0
        %2066 = vmatprep.subr.mxu0 0.0
        %2067 = vmatpush2.xpose.msra.mxu0 0.0
        %2068 = vmatprep.subr.mxu0 0.0
        %2069 = vmatpush2.xpose.msra.mxu0 0.0
        %2070 = vmatprep.subr.mxu0 0.0
        %2071 = vmatpush2.xpose.msra.mxu0 0.0
        %2072 = vmatprep.subr.mxu0 0.0
        %2073 = vmatpush2.xpose.msra.mxu0 0.0
        %2074 = vmatprep.subr.mxu0 0.0
        %2075 = vmatpush2.xpose.msra.mxu0 0.0
        %2076 = vmatprep.subr.mxu0 0.0
        %2077 = vmatpush2.xpose.msra.mxu0 0.0
        %2078 = vmatprep.subr.mxu0 0.0
        %2079 = vmatpush2.xpose.msra.mxu0 0.0
        %2080 = vmatprep.mubr.f32.mxu0 0.0
        %2081 = vmatmul.mubr.f32.gmra.mxu0 %v2012
        %v2082 = vpop.f32.mrf.mxu0
        %v2083 = vadd.f32 0.0, %v2082
        %v2084 = vpop.f32.mrf.mxu0
        %2085 = vdwg.mxu0
        %v2086 = vsel %vm882, %v1846, 0
        %v2088 = vsel %vm882, %v1853, 0
        %2090 = vmatprep.subr.mxu0 0.0
        %2091 = vmatpush1.xpose.msra.mxu0 0.0
        %2092 = vmatprep.subr.mxu0 0.0
        %2093 = vmatpush1.xpose.msra.mxu0 0.0
        %2094 = vmatprep.subr.mxu0 0.0
        %2095 = vmatpush1.xpose.msra.mxu0 0.0
        %2096 = vmatprep.subr.mxu0 0.0
        %2097 = vmatpush1.xpose.msra.mxu0 0.0
        %2098 = vmatprep.subr.mxu0 0.0
        %2099 = vmatpush1.xpose.msra.mxu0 0.0
        %2100 = vmatprep.subr.mxu0 0.0
        %2101 = vmatpush1.xpose.msra.mxu0 0.0
        %2102 = vmatprep.subr.mxu0 0.0
        %2103 = vmatpush1.xpose.msra.mxu0 0.0
        %2104 = vmatprep.subr.mxu0 0.0
        %2105 = vmatpush1.xpose.msra.mxu0 0.0
        %2106 = vmatprep.subr.mxu0 0.0
        %2107 = vmatpush1.xpose.msra.mxu0 0.0
        %2108 = vmatprep.subr.mxu0 0.0
        %2109 = vmatpush1.xpose.msra.mxu0 0.0
        %2110 = vmatprep.subr.mxu0 0.0
        %2111 = vmatpush1.xpose.msra.mxu0 0.0
        %2112 = vmatprep.subr.mxu0 0.0
        %2113 = vmatpush1.xpose.msra.mxu0 0.0
        %2114 = vmatprep.subr.mxu0 0.0
        %2115 = vmatpush1.xpose.msra.mxu0 0.0
        %2116 = vmatprep.subr.mxu0 0.0
        %2117 = vmatpush1.xpose.msra.mxu0 0.0
        %2118 = vmatprep.subr.mxu0 0.0
        %2119 = vmatpush1.xpose.msra.mxu0 0.0
        %2120 = vmatprep.subr.mxu0 0.0
        %2121 = vmatpush1.xpose.msra.mxu0 %v2088
        %2122 = vmatprep.subr.mxu0 0.0
        %2123 = vmatpush2.xpose.msra.mxu0 0.0
        %2124 = vmatprep.subr.mxu0 0.0
        %2125 = vmatpush2.xpose.msra.mxu0 0.0
        %2126 = vmatprep.subr.mxu0 0.0
        %2127 = vmatpush2.xpose.msra.mxu0 0.0
        %2128 = vmatprep.subr.mxu0 0.0
        %2129 = vmatpush2.xpose.msra.mxu0 0.0
        %2130 = vmatprep.subr.mxu0 0.0
        %2131 = vmatpush2.xpose.msra.mxu0 0.0
        %2132 = vmatprep.subr.mxu0 0.0
        %2133 = vmatpush2.xpose.msra.mxu0 0.0
        %2134 = vmatprep.subr.mxu0 0.0
        %2135 = vmatpush2.xpose.msra.mxu0 0.0
        %2136 = vmatprep.subr.mxu0 0.0
        %2137 = vmatpush2.xpose.msra.mxu0 0.0
        %2138 = vmatprep.subr.mxu0 0.0
        %2139 = vmatpush2.xpose.msra.mxu0 0.0
        %2140 = vmatprep.subr.mxu0 0.0
        %2141 = vmatpush2.xpose.msra.mxu0 0.0
        %2142 = vmatprep.subr.mxu0 0.0
        %2143 = vmatpush2.xpose.msra.mxu0 0.0
        %2144 = vmatprep.subr.mxu0 0.0
        %2145 = vmatpush2.xpose.msra.mxu0 0.0
        %2146 = vmatprep.subr.mxu0 0.0
        %2147 = vmatpush2.xpose.msra.mxu0 0.0
        %2148 = vmatprep.subr.mxu0 0.0
        %2149 = vmatpush2.xpose.msra.mxu0 0.0
        %2150 = vmatprep.subr.mxu0 0.0
        %2151 = vmatpush2.xpose.msra.mxu0 0.0
        %2152 = vmatprep.subr.mxu0 0.0
        %2153 = vmatpush2.xpose.msra.mxu0 0.0
        %2154 = vmatprep.mubr.f32.mxu0 0.0
        %2155 = vmatmul.mubr.f32.gmra.mxu0 %v2086
        %v2156 = vpop.f32.mrf.mxu0
        %v2157 = vadd.f32 0.0, %v2156
        %v2158 = vpop.f32.mrf.mxu0
        %2159 = vdwg.mxu0
        %v2160 = vsel %vm882, %v1935, -inf
        %2161 = vmax.xlane.f32.xlu0 %v2160
        %v2162 = vpop.xlane.xlu0 %2161
        %v2163 = vsel %vm882, %v2009, -inf
        %2164 = vmax.xlane.f32.xlu0 %v2163
        %v2165 = vpop.xlane.xlu0 %2164
        %v2166 = vsel %vm882, %v2083, -inf
        %2167 = vmax.xlane.f32.xlu0 %v2166
        %v2168 = vpop.xlane.xlu0 %2167
        %v2169 = vsel %vm882, %v2157, -inf
        %2170 = vmax.xlane.f32.xlu0 %v2169
        %v2171 = vpop.xlane.xlu0 %2170
        %v2172 = vsub.f32 %v1935, %v2162
        %v2173 = vsub.f32 %v2009, %v2165
        %v2174 = vsub.f32 %v2083, %v2168
        %v2175 = vsub.f32 %v2157, %v2171
        %v2176 = vmul.f32 %v2172, 1.442695
        %v2177 = vpow.pop %v2176
        %v2178 = vmul.f32 %v2173, 1.442695
        %v2179 = vpow.pop %v2178
        %v2180 = vmul.f32 %v2174, 1.442695
        %v2181 = vpow.pop %v2180
        %v2182 = vmul.f32 %v2175, 1.442695
        %v2183 = vpow.pop %v2182
        %v2184 = vsel %vm882, %v2177, 0.0
        %2185 = vadd.xlane.f32.xlu0 %v2184
        %v2186 = vpop.xlane.xlu0 %2185
        %v2187 = vsel %vm882, %v2179, 0.0
        %2188 = vadd.xlane.f32.xlu0 %v2187
        %v2189 = vpop.xlane.xlu0 %2188
        %v2190 = vsel %vm882, %v2181, 0.0
        %2191 = vadd.xlane.f32.xlu0 %v2190
        %v2192 = vpop.xlane.xlu0 %2191
        %v2193 = vsel %vm882, %v2183, 0.0
        %2194 = vadd.xlane.f32.xlu0 %v2193
        %v2195 = vpop.xlane.xlu0 %2194
        %v2196 = vrcp.pop %v2186
        %v2197 = vrcp.pop %v2189
        %v2198 = vrcp.pop %v2192
        %v2199 = vrcp.pop %v2195
        %v2200 = vmul.f32 %v2177, %v2196
        %v2201 = vmul.f32 %v2179, %v2197
        %v2202 = vmul.f32 %v2181, %v2198
        %v2203 = vmul.f32 %v2183, %v2199
        // Predicated region
        $region93: #{tpu_custom_call.1} parent=63 // pred_check
          %p2204 = pneg %p595
        $region94: #{tpu_custom_call.1} parent=63 // pred_check_branch
          %2206 = sbr.rel (%p2204) target = $region96
        $region95: #{tpu_custom_call.1} parent=63 // pred_region
          %2207 = vst.msk [vmem:[%s594] sm:$0xff] %vm882, %v2200
          %s2208 = scalar_lea.vmem %s594, 8 [#allocation15]
          %2209 = vst.msk [vmem:[%s2208] sm:$0xff] %vm882, %v2201
          %s2210 = scalar_lea.vmem %s594, 16 [#allocation15]
          %2211 = vst.msk [vmem:[%s2210] sm:$0xff] %vm882, %v2202
          %s2212 = scalar_lea.vmem %s594, 24 [#allocation15]
          %2213 = vst.msk [vmem:[%s2212] sm:$0xff] %vm882, %v2203
        $region96: #{tpu_custom_call.1} parent=63 // pred_fallthru
          _
        %v2215 = vsel %vm882, %v2200, 0
        %2217 = vmatprep.subr.mxu0 0.0
        %2218 = vmatpush1.msra.mxu0 0.0
        %2219 = vmatprep.subr.mxu0 0.0
        %2220 = vmatpush1.msra.mxu0 0.0
        %2221 = vmatprep.subr.mxu0 0.0
        %2222 = vmatpush1.msra.mxu0 0.0
        %2223 = vmatprep.subr.mxu0 0.0
        %2224 = vmatpush1.msra.mxu0 0.0
        %2225 = vmatprep.subr.mxu0 0.0
        %2226 = vmatpush1.msra.mxu0 0.0
        %2227 = vmatprep.subr.mxu0 0.0
        %2228 = vmatpush1.msra.mxu0 0.0
        %2229 = vmatprep.subr.mxu0 0.0
        %2230 = vmatpush1.msra.mxu0 0.0
        %2231 = vmatprep.subr.mxu0 0.0
        %2232 = vmatpush1.msra.mxu0 0.0
        %2233 = vmatprep.subr.mxu0 0.0
        %2234 = vmatpush1.msra.mxu0 0.0
        %2235 = vmatprep.subr.mxu0 0.0
        %2236 = vmatpush1.msra.mxu0 0.0
        %2237 = vmatprep.subr.mxu0 0.0
        %2238 = vmatpush1.msra.mxu0 0.0
        %2239 = vmatprep.subr.mxu0 0.0
        %2240 = vmatpush1.msra.mxu0 0.0
        %2241 = vmatprep.subr.mxu0 0.0
        %2242 = vmatpush1.msra.mxu0 0.0
        %2243 = vmatprep.subr.mxu0 0.0
        %2244 = vmatpush1.msra.mxu0 0.0
        %2245 = vmatprep.subr.mxu0 0.0
        %2246 = vmatpush1.msra.mxu0 0.0
        %2247 = vmatprep.subr.mxu0 0.0
        %2248 = vmatpush1.msra.mxu0 %v1837
        %2249 = vmatprep.subr.mxu0 0.0
        %2250 = vmatpush2.msra.mxu0 0.0
        %2251 = vmatprep.subr.mxu0 0.0
        %2252 = vmatpush2.msra.mxu0 0.0
        %2253 = vmatprep.subr.mxu0 0.0
        %2254 = vmatpush2.msra.mxu0 0.0
        %2255 = vmatprep.subr.mxu0 0.0
        %2256 = vmatpush2.msra.mxu0 0.0
        %2257 = vmatprep.subr.mxu0 0.0
        %2258 = vmatpush2.msra.mxu0 0.0
        %2259 = vmatprep.subr.mxu0 0.0
        %2260 = vmatpush2.msra.mxu0 0.0
        %2261 = vmatprep.subr.mxu0 0.0
        %2262 = vmatpush2.msra.mxu0 0.0
        %2263 = vmatprep.subr.mxu0 0.0
        %2264 = vmatpush2.msra.mxu0 0.0
        %2265 = vmatprep.subr.mxu0 0.0
        %2266 = vmatpush2.msra.mxu0 0.0
        %2267 = vmatprep.subr.mxu0 0.0
        %2268 = vmatpush2.msra.mxu0 0.0
        %2269 = vmatprep.subr.mxu0 0.0
        %2270 = vmatpush2.msra.mxu0 0.0
        %2271 = vmatprep.subr.mxu0 0.0
        %2272 = vmatpush2.msra.mxu0 0.0
        %2273 = vmatprep.subr.mxu0 0.0
        %2274 = vmatpush2.msra.mxu0 0.0
        %2275 = vmatprep.subr.mxu0 0.0
        %2276 = vmatpush2.msra.mxu0 0.0
        %2277 = vmatprep.subr.mxu0 0.0
        %2278 = vmatpush2.msra.mxu0 0.0
        %2279 = vmatprep.subr.mxu0 0.0
        %2280 = vmatpush2.msra.mxu0 0.0
        %2281 = vmatprep.mubr.f32.mxu0 0.0
        %2282 = vmatmul.mubr.f32.gmra.mxu0 %v2215
        %v2283 = vpop.f32.mrf.mxu0
        %v2284 = vadd.f32 0.0, %v2283
        %v2285 = vpop.f32.mrf.mxu0
        %2286 = vdwg.mxu0
        %v2288 = vsel %vm882, %v2201, 0
        %2290 = vmatprep.subr.mxu0 0.0
        %2291 = vmatpush1.msra.mxu0 0.0
        %2292 = vmatprep.subr.mxu0 0.0
        %2293 = vmatpush1.msra.mxu0 0.0
        %2294 = vmatprep.subr.mxu0 0.0
        %2295 = vmatpush1.msra.mxu0 0.0
        %2296 = vmatprep.subr.mxu0 0.0
        %2297 = vmatpush1.msra.mxu0 0.0
        %2298 = vmatprep.subr.mxu0 0.0
        %2299 = vmatpush1.msra.mxu0 0.0
        %2300 = vmatprep.subr.mxu0 0.0
        %2301 = vmatpush1.msra.mxu0 0.0
        %2302 = vmatprep.subr.mxu0 0.0
        %2303 = vmatpush1.msra.mxu0 0.0
        %2304 = vmatprep.subr.mxu0 0.0
        %2305 = vmatpush1.msra.mxu0 0.0
        %2306 = vmatprep.subr.mxu0 0.0
        %2307 = vmatpush1.msra.mxu0 0.0
        %2308 = vmatprep.subr.mxu0 0.0
        %2309 = vmatpush1.msra.mxu0 0.0
        %2310 = vmatprep.subr.mxu0 0.0
        %2311 = vmatpush1.msra.mxu0 0.0
        %2312 = vmatprep.subr.mxu0 0.0
        %2313 = vmatpush1.msra.mxu0 0.0
        %2314 = vmatprep.subr.mxu0 0.0
        %2315 = vmatpush1.msra.mxu0 0.0
        %2316 = vmatprep.subr.mxu0 0.0
        %2317 = vmatpush1.msra.mxu0 0.0
        %2318 = vmatprep.subr.mxu0 0.0
        %2319 = vmatpush1.msra.mxu0 0.0
        %2320 = vmatprep.subr.mxu0 0.0
        %2321 = vmatpush1.msra.mxu0 %v1856
        %2322 = vmatprep.subr.mxu0 0.0
        %2323 = vmatpush2.msra.mxu0 0.0
        %2324 = vmatprep.subr.mxu0 0.0
        %2325 = vmatpush2.msra.mxu0 0.0
        %2326 = vmatprep.subr.mxu0 0.0
        %2327 = vmatpush2.msra.mxu0 0.0
        %2328 = vmatprep.subr.mxu0 0.0
        %2329 = vmatpush2.msra.mxu0 0.0
        %2330 = vmatprep.subr.mxu0 0.0
        %2331 = vmatpush2.msra.mxu0 0.0
        %2332 = vmatprep.subr.mxu0 0.0
        %2333 = vmatpush2.msra.mxu0 0.0
        %2334 = vmatprep.subr.mxu0 0.0
        %2335 = vmatpush2.msra.mxu0 0.0
        %2336 = vmatprep.subr.mxu0 0.0
        %2337 = vmatpush2.msra.mxu0 0.0
        %2338 = vmatprep.subr.mxu0 0.0
        %2339 = vmatpush2.msra.mxu0 0.0
        %2340 = vmatprep.subr.mxu0 0.0
        %2341 = vmatpush2.msra.mxu0 0.0
        %2342 = vmatprep.subr.mxu0 0.0
        %2343 = vmatpush2.msra.mxu0 0.0
        %2344 = vmatprep.subr.mxu0 0.0
        %2345 = vmatpush2.msra.mxu0 0.0
        %2346 = vmatprep.subr.mxu0 0.0
        %2347 = vmatpush2.msra.mxu0 0.0
        %2348 = vmatprep.subr.mxu0 0.0
        %2349 = vmatpush2.msra.mxu0 0.0
        %2350 = vmatprep.subr.mxu0 0.0
        %2351 = vmatpush2.msra.mxu0 0.0
        %2352 = vmatprep.subr.mxu0 0.0
        %2353 = vmatpush2.msra.mxu0 0.0
        %2354 = vmatprep.mubr.f32.mxu0 0.0
        %2355 = vmatmul.mubr.f32.gmra.mxu0 %v2288
        %v2356 = vpop.f32.mrf.mxu0
        %v2357 = vadd.f32 0.0, %v2356
        %v2358 = vpop.f32.mrf.mxu0
        %2359 = vdwg.mxu0
        %v2361 = vsel %vm882, %v2202, 0
        %2363 = vmatprep.subr.mxu0 0.0
        %2364 = vmatpush1.msra.mxu0 0.0
        %2365 = vmatprep.subr.mxu0 0.0
        %2366 = vmatpush1.msra.mxu0 0.0
        %2367 = vmatprep.subr.mxu0 0.0
        %2368 = vmatpush1.msra.mxu0 0.0
        %2369 = vmatprep.subr.mxu0 0.0
        %2370 = vmatpush1.msra.mxu0 0.0
        %2371 = vmatprep.subr.mxu0 0.0
        %2372 = vmatpush1.msra.mxu0 0.0
        %2373 = vmatprep.subr.mxu0 0.0
        %2374 = vmatpush1.msra.mxu0 0.0
        %2375 = vmatprep.subr.mxu0 0.0
        %2376 = vmatpush1.msra.mxu0 0.0
        %2377 = vmatprep.subr.mxu0 0.0
        %2378 = vmatpush1.msra.mxu0 0.0
        %2379 = vmatprep.subr.mxu0 0.0
        %2380 = vmatpush1.msra.mxu0 0.0
        %2381 = vmatprep.subr.mxu0 0.0
        %2382 = vmatpush1.msra.mxu0 0.0
        %2383 = vmatprep.subr.mxu0 0.0
        %2384 = vmatpush1.msra.mxu0 0.0
        %2385 = vmatprep.subr.mxu0 0.0
        %2386 = vmatpush1.msra.mxu0 0.0
        %2387 = vmatprep.subr.mxu0 0.0
        %2388 = vmatpush1.msra.mxu0 0.0
        %2389 = vmatprep.subr.mxu0 0.0
        %2390 = vmatpush1.msra.mxu0 0.0
        %2391 = vmatprep.subr.mxu0 0.0
        %2392 = vmatpush1.msra.mxu0 0.0
        %2393 = vmatprep.subr.mxu0 0.0
        %2394 = vmatpush1.msra.mxu0 %v1859
        %2395 = vmatprep.subr.mxu0 0.0
        %2396 = vmatpush2.msra.mxu0 0.0
        %2397 = vmatprep.subr.mxu0 0.0
        %2398 = vmatpush2.msra.mxu0 0.0
        %2399 = vmatprep.subr.mxu0 0.0
        %2400 = vmatpush2.msra.mxu0 0.0
        %2401 = vmatprep.subr.mxu0 0.0
        %2402 = vmatpush2.msra.mxu0 0.0
        %2403 = vmatprep.subr.mxu0 0.0
        %2404 = vmatpush2.msra.mxu0 0.0
        %2405 = vmatprep.subr.mxu0 0.0
        %2406 = vmatpush2.msra.mxu0 0.0
        %2407 = vmatprep.subr.mxu0 0.0
        %2408 = vmatpush2.msra.mxu0 0.0
        %2409 = vmatprep.subr.mxu0 0.0
        %2410 = vmatpush2.msra.mxu0 0.0
        %2411 = vmatprep.subr.mxu0 0.0
        %2412 = vmatpush2.msra.mxu0 0.0
        %2413 = vmatprep.subr.mxu0 0.0
        %2414 = vmatpush2.msra.mxu0 0.0
        %2415 = vmatprep.subr.mxu0 0.0
        %2416 = vmatpush2.msra.mxu0 0.0
        %2417 = vmatprep.subr.mxu0 0.0
        %2418 = vmatpush2.msra.mxu0 0.0
        %2419 = vmatprep.subr.mxu0 0.0
        %2420 = vmatpush2.msra.mxu0 0.0
        %2421 = vmatprep.subr.mxu0 0.0
        %2422 = vmatpush2.msra.mxu0 0.0
        %2423 = vmatprep.subr.mxu0 0.0
        %2424 = vmatpush2.msra.mxu0 0.0
        %2425 = vmatprep.subr.mxu0 0.0
        %2426 = vmatpush2.msra.mxu0 0.0
        %2427 = vmatprep.mubr.f32.mxu0 0.0
        %2428 = vmatmul.mubr.f32.gmra.mxu0 %v2361
        %v2429 = vpop.f32.mrf.mxu0
        %v2430 = vadd.f32 0.0, %v2429
        %v2431 = vpop.f32.mrf.mxu0
        %2432 = vdwg.mxu0
        %v2434 = vsel %vm882, %v2203, 0
        %2436 = vmatprep.subr.mxu0 0.0
        %2437 = vmatpush1.msra.mxu0 0.0
        %2438 = vmatprep.subr.mxu0 0.0
        %2439 = vmatpush1.msra.mxu0 0.0
        %2440 = vmatprep.subr.mxu0 0.0
        %2441 = vmatpush1.msra.mxu0 0.0
        %2442 = vmatprep.subr.mxu0 0.0
        %2443 = vmatpush1.msra.mxu0 0.0
        %2444 = vmatprep.subr.mxu0 0.0
        %2445 = vmatpush1.msra.mxu0 0.0
        %2446 = vmatprep.subr.mxu0 0.0
        %2447 = vmatpush1.msra.mxu0 0.0
        %2448 = vmatprep.subr.mxu0 0.0
        %2449 = vmatpush1.msra.mxu0 0.0
        %2450 = vmatprep.subr.mxu0 0.0
        %2451 = vmatpush1.msra.mxu0 0.0
        %2452 = vmatprep.subr.mxu0 0.0
        %2453 = vmatpush1.msra.mxu0 0.0
        %2454 = vmatprep.subr.mxu0 0.0
        %2455 = vmatpush1.msra.mxu0 0.0
        %2456 = vmatprep.subr.mxu0 0.0
        %2457 = vmatpush1.msra.mxu0 0.0
        %2458 = vmatprep.subr.mxu0 0.0
        %2459 = vmatpush1.msra.mxu0 0.0
        %2460 = vmatprep.subr.mxu0 0.0
        %2461 = vmatpush1.msra.mxu0 0.0
        %2462 = vmatprep.subr.mxu0 0.0
        %2463 = vmatpush1.msra.mxu0 0.0
        %2464 = vmatprep.subr.mxu0 0.0
        %2465 = vmatpush1.msra.mxu0 0.0
        %2466 = vmatprep.subr.mxu0 0.0
        %2467 = vmatpush1.msra.mxu0 %v1862
        %2468 = vmatprep.subr.mxu0 0.0
        %2469 = vmatpush2.msra.mxu0 0.0
        %2470 = vmatprep.subr.mxu0 0.0
        %2471 = vmatpush2.msra.mxu0 0.0
        %2472 = vmatprep.subr.mxu0 0.0
        %2473 = vmatpush2.msra.mxu0 0.0
        %2474 = vmatprep.subr.mxu0 0.0
        %2475 = vmatpush2.msra.mxu0 0.0
        %2476 = vmatprep.subr.mxu0 0.0
        %2477 = vmatpush2.msra.mxu0 0.0
        %2478 = vmatprep.subr.mxu0 0.0
        %2479 = vmatpush2.msra.mxu0 0.0
        %2480 = vmatprep.subr.mxu0 0.0
        %2481 = vmatpush2.msra.mxu0 0.0
        %2482 = vmatprep.subr.mxu0 0.0
        %2483 = vmatpush2.msra.mxu0 0.0
        %2484 = vmatprep.subr.mxu0 0.0
        %2485 = vmatpush2.msra.mxu0 0.0
        %2486 = vmatprep.subr.mxu0 0.0
        %2487 = vmatpush2.msra.mxu0 0.0
        %2488 = vmatprep.subr.mxu0 0.0
        %2489 = vmatpush2.msra.mxu0 0.0
        %2490 = vmatprep.subr.mxu0 0.0
        %2491 = vmatpush2.msra.mxu0 0.0
        %2492 = vmatprep.subr.mxu0 0.0
        %2493 = vmatpush2.msra.mxu0 0.0
        %2494 = vmatprep.subr.mxu0 0.0
        %2495 = vmatpush2.msra.mxu0 0.0
        %2496 = vmatprep.subr.mxu0 0.0
        %2497 = vmatpush2.msra.mxu0 0.0
        %2498 = vmatprep.subr.mxu0 0.0
        %2499 = vmatpush2.msra.mxu0 0.0
        %2500 = vmatprep.mubr.f32.mxu0 0.0
        %2501 = vmatmul.mubr.f32.gmra.mxu0 %v2434
        %v2502 = vpop.f32.mrf.mxu0
        %v2503 = vadd.f32 0.0, %v2502
        %v2504 = vpop.f32.mrf.mxu0
        %2505 = vdwg.mxu0
        %2507 = vrot.lane.b32.xlu0 %v2357, 8
        %v2508 = vpop.permute.xlu0 %2507
        %2511 = vrot.lane.b32.xlu0 %v2430, 16
        %v2512 = vpop.permute.xlu0 %2511
        %2515 = vrot.lane.b32.xlu0 %v2503, 24
        %v2516 = vpop.permute.xlu0 %2515
        %v2518 = vsel %vm882, %v2284, %v2508
        %v2519 = vsel %vm1528, %v2518, %v2512
        %v2520 = vsel %vm1530, %v2519, %v2516
        %v2522 = vsel %vm625, %v2520, 0
        %2524 = vmatprep.subr.mxu0 0.0
        %2525 = vmatpush1.msra.mxu0 0.0
        %2526 = vmatprep.subr.mxu0 0.0
        %2527 = vmatpush1.msra.mxu0 0.0
        %2528 = vmatprep.subr.mxu0 0.0
        %2529 = vmatpush1.msra.mxu0 0.0
        %2530 = vmatprep.subr.mxu0 0.0
        %2531 = vmatpush1.msra.mxu0 0.0
        %2532 = vmatprep.subr.mxu0 0.0
        %2533 = vmatpush1.msra.mxu0 0.0
        %2534 = vmatprep.subr.mxu0 0.0
        %2535 = vmatpush1.msra.mxu0 0.0
        %2536 = vmatprep.subr.mxu0 0.0
        %2537 = vmatpush1.msra.mxu0 0.0
        %2538 = vmatprep.subr.mxu0 0.0
        %2539 = vmatpush1.msra.mxu0 0.0
        %2540 = vmatprep.subr.mxu0 0.0
        %2541 = vmatpush1.msra.mxu0 0.0
        %2542 = vmatprep.subr.mxu0 0.0
        %2543 = vmatpush1.msra.mxu0 0.0
        %2544 = vmatprep.subr.mxu0 0.0
        %2545 = vmatpush1.msra.mxu0 0.0
        %2546 = vmatprep.subr.mxu0 0.0
        %2547 = vmatpush1.msra.mxu0 0.0
        %2548 = vmatprep.subr.mxu0 0.0
        %2549 = vmatpush1.msra.mxu0 %v611
        %2550 = vmatprep.subr.mxu0 0.0
        %2551 = vmatpush1.msra.mxu0 %v610
        %2552 = vmatprep.subr.mxu0 0.0
        %2553 = vmatpush1.msra.mxu0 %v609
        %2554 = vmatprep.subr.mxu0 0.0
        %2555 = vmatpush1.msra.mxu0 %v608
        %2556 = vmatprep.subr.mxu0 0.0
        %2557 = vmatpush2.msra.mxu0 0.0
        %2558 = vmatprep.subr.mxu0 0.0
        %2559 = vmatpush2.msra.mxu0 0.0
        %2560 = vmatprep.subr.mxu0 0.0
        %2561 = vmatpush2.msra.mxu0 0.0
        %2562 = vmatprep.subr.mxu0 0.0
        %2563 = vmatpush2.msra.mxu0 0.0
        %2564 = vmatprep.subr.mxu0 0.0
        %2565 = vmatpush2.msra.mxu0 0.0
        %2566 = vmatprep.subr.mxu0 0.0
        %2567 = vmatpush2.msra.mxu0 0.0
        %2568 = vmatprep.subr.mxu0 0.0
        %2569 = vmatpush2.msra.mxu0 0.0
        %2570 = vmatprep.subr.mxu0 0.0
        %2571 = vmatpush2.msra.mxu0 0.0
        %2572 = vmatprep.subr.mxu0 0.0
        %2573 = vmatpush2.msra.mxu0 0.0
        %2574 = vmatprep.subr.mxu0 0.0
        %2575 = vmatpush2.msra.mxu0 0.0
        %2576 = vmatprep.subr.mxu0 0.0
        %2577 = vmatpush2.msra.mxu0 0.0
        %2578 = vmatprep.subr.mxu0 0.0
        %2579 = vmatpush2.msra.mxu0 0.0
        %2580 = vmatprep.subr.mxu0 0.0
        %2581 = vmatpush2.msra.mxu0 0.0
        %2582 = vmatprep.subr.mxu0 0.0
        %2583 = vmatpush2.msra.mxu0 0.0
        %2584 = vmatprep.subr.mxu0 0.0
        %2585 = vmatpush2.msra.mxu0 0.0
        %2586 = vmatprep.subr.mxu0 0.0
        %2587 = vmatpush2.msra.mxu0 0.0
        %2588 = vmatprep.mubr.f32.mxu0 0.0
        %2589 = vmatmul.mubr.f32.gmra.mxu0 %v2522
        %v2590 = vpop.f32.mrf.mxu0
        %v2591 = vadd.f32 %v1536, %v2590
        %v2592 = vpop.f32.mrf.mxu0
        %2593 = vdwg.mxu0
        %2594 = vst.msk [vmem:[%s587] sm:$0xff] %vm625, %v2591
        %s2595 = sand.u32 %s312, 1
        %s2596 = scalar_lea.sflag [#allocation4], %s2595
        %s2597 = sand.u32 %s312, 1
        %s2598 = smul.addr %s2597, 8
        %s2599 = scalar_lea.vmem [#allocation14], %s2598
        %s2600 = sand.u32 %s338, 1
        %s2601 = scalar_lea.sflag [#allocation16], %s2600
        %s2602 = sand.u32 %s338, 1
        %s2603 = smul.addr %s2602, 32
        %s2604 = scalar_lea.vmem [#allocation15], %s2603
        // Predicated region
        $region97: #{tpu_custom_call.1} parent=63 // pred_check
          %p2605 = pneg %p322
        $region98: #{tpu_custom_call.1} parent=63 // pred_check_branch
          %2607 = sbr.rel (%p2605) target = $region100
        $region99: #{tpu_custom_call.1} parent=63 // pred_region
          %s2609 = ssub.s32 128, 128
          %2610 = vsyncadd %s2596, %s2609
          %s2611 = smul.addr %s42, 2
          %s2612 = sadd.s32 %s43, %s2611
          %s2613 = smul.addr %s2612, 128
          %s2614 = scalar_lea.hbm %s11, %s2613
          %s2616 = sshll.u32 %s2599, 4
          %s2617 = int_to_ptr.vmem [resolvable:$true] %s2616
          %2619 = dma.vmem_to_hbm [thread:$0]  %s2617, 128, %s2614, %s2596
        $region100: #{tpu_custom_call.1} parent=63 // pred_fallthru
          _
        // Predicated region
        $region101: #{tpu_custom_call.1} parent=63 // pred_check
          %p2620 = pneg %p348
        $region102: #{tpu_custom_call.1} parent=63 // pred_check_branch
          %2622 = sbr.rel (%p2620) target = $region104
        $region103: #{tpu_custom_call.1} parent=63 // pred_region
          %s2624 = ssub.s32 512, 512
          %2625 = vsyncadd %s2601, %s2624
          %s2626 = smul.addr %s42, 4
          %s2627 = smul.addr %s2626, 128
          %s2628 = scalar_lea.hbm %s12, %s2627
          %s2629 = sshll.u32 %s2604, 4
          %s2630 = int_to_ptr.vmem [resolvable:$true] %s2629
          %2635 = dma.vmem_to_hbm [thread:$0]  %s2630, 512, %s2628, %s2601, 128, 128, 8
        $region104: #{tpu_custom_call.1} parent=63 // pred_fallthru
          _
      $region64: #{tpu_custom_call.1} parent=5 // pred_fallthru
        _
      %p2636 = scmp.le.s32.totalorder 2, %s33
      // Predicated region
      $region105: #{tpu_custom_call.1} parent=5 // pred_check
        %p2637 = pneg %p2636
      $region106: #{tpu_custom_call.1} parent=5 // pred_check_branch
        %2639 = sbr.rel (%p2637) target = $region108
      $region107: #{tpu_custom_call.1} parent=5 // pred_region
        %s2640 = ssub.s32 %s33, 2
        // Predicated region
        $region109: #{tpu_custom_call.1} parent=107 // pred_check
          %p2641 = pneg %p328
        $region110: #{tpu_custom_call.1} parent=107 // pred_check_branch
          %2643 = sbr.rel (%p2641) target = $region112
        $region111: #{tpu_custom_call.1} parent=107 // pred_region
          %s2644 = sand.u32 %s313, 1
          %s2645 = scalar_lea.sflag [#allocation4], %s2644
          %s2646 = sand.u32 %s313, 1
          %s2647 = smul.addr %s2646, 8
          %s2648 = scalar_lea.vmem [#allocation14], %s2647
          %2649 = dma.done %s2645, 128
        $region112: #{tpu_custom_call.1} parent=107 // pred_fallthru
          _
        // Predicated region
        $region113: #{tpu_custom_call.1} parent=107 // pred_check
          %p2650 = pneg %p354
        $region114: #{tpu_custom_call.1} parent=107 // pred_check_branch
          %2652 = sbr.rel (%p2650) target = $region116
        $region115: #{tpu_custom_call.1} parent=107 // pred_region
          %s2653 = sand.u32 %s339, 1
          %s2654 = scalar_lea.sflag [#allocation16], %s2653
          %s2655 = sand.u32 %s339, 1
          %s2656 = smul.addr %s2655, 32
          %s2657 = scalar_lea.vmem [#allocation15], %s2656
          %2658 = dma.done %s2654, 512
        $region116: #{tpu_custom_call.1} parent=107 // pred_fallthru
          _
      $region108: #{tpu_custom_call.1} parent=5 // pred_fallthru
        _
    $region6: #{tpu_custom_call.1} parent=1 // loop_footer
      %s37 = sadd.s32 1, %s33
    $region7: #{tpu_custom_call.1} parent=1 // loop_footer_branch
      %32 = sbr.rel target = $region3
    $region8: #{tpu_custom_call.1} parent=1 // loop_exit
      _
    %2659 = vsyncpa [#allocation3], 1
    %s2660 = scalar_lea.sflag [#allocation3], 1
    %2661 = vsyncpa %s2660, 1
    %2662 = vsyncpa [#allocation6], 1
    %s2663 = scalar_lea.sflag [#allocation6], 1
    %2664 = vsyncpa %s2663, 1
    %2665 = vsyncpa [#allocation9], 1
    %2666 = vsyncpa [#allocation12], 1
    %2667 = vsyncpa [#allocation4], 1
    %s2668 = scalar_lea.sflag [#allocation4], 1
    %2669 = vsyncpa %s2668, 1
    %2670 = vsyncpa [#allocation16], 1
    %s2671 = scalar_lea.sflag [#allocation16], 1
    %2672 = vsyncpa %s2671, 1

</llo_original>
